<compile_context>
chip_gen: v6e
topology: v6e:2x2x1
jax: 0.10.0
libtpu: 0.0.40
codegen_flags: <defaults>
</compile_context>

<pallas_src>
import functools
import math

import jax
import jax.numpy as jnp
from jax import lax
from jax.experimental import pallas as pl
from jax.experimental.pallas import tpu as pltpu

SQRT_HALF = math.sqrt(0.5)
LN_EPS = 1e-5  # nn.LayerNorm default


def lstm_block_kernel(x_ref, w_ih_ref, w_hh_ref, b_ref,
                      w_proj_ref, b_proj_ref, gamma_ref, beta_ref,
                      o_ref,
                      xg_scr, hs_scr, *, unroll):
    """One grid step processes `tile_n` full sequences, time-major.

    x_ref      : (T, tile_n, D)              f32   time-major input sequences
    w_ih_ref   : (D, 4D)                     bf16  weight_ih_l0^T, gate order (i,f,o,g)
    w_hh_ref   : (D, 4D)                     bf16  weight_hh_l0^T, gate order (i,f,o,g)
    b_ref      : (1, 4D)                     f32   bias_ih + bias_hh, gate order (i,f,o,g)
    w_proj_ref : (D, D)                      bf16  proj.weight^T
    b_proj_ref : (1, D)                      f32
    gamma/beta : (1, D)                      f32   LayerNorm affine
    o_ref      : (T, tile_n, D) or (T, tile_n*D)   f32 (flat form = lane-dense store)
    xg_scr     : (T, tile_n, 4D)             bf16  precomputed input-gate contributions
    hs_scr     : (T, tile_n, D)              bf16  per-step hidden states (proj matmul LHS)
    """
    T, tile_n, D = x_ref.shape

    # ---- Input->hidden projection for all timesteps in one bf16 MXU matmul. ----
    # (T, tile_n, D) -> (T*tile_n, D) collapses leading dims only: no relayout.
    x_bf = x_ref[...].astype(jnp.bfloat16).reshape(T * tile_n, D)
    xg = jnp.dot(x_bf, w_ih_ref[...], preferred_element_type=jnp.float32) + b_ref[...]
    xg_scr[...] = xg.reshape(T, tile_n, 4 * D).astype(jnp.bfloat16)

    w_hh = w_hh_ref[...]                                    # (D, 4D) bf16, held in vregs

    # ---- Sequential LSTM recurrence: h carried in bf16 (only ever consumed as bf16),
    # ---- c carried in f32; fully unrolled for small T, partially for large T. ----
    def step(t, carry):
        h, c = carry                                        # h: bf16, c: f32
        # TODO(synk): v5e/v6e follow-up: hold w_hh stationary across steps via
        # pltpu.matmul_push_rhs / matmul_acc_lhs / matmul_pop (verify bundle dump first).
        gates = xg_scr[t].astype(jnp.float32) + jnp.dot(
            h, w_hh, preferred_element_type=jnp.float32)    # (tile_n, 4D)
        ifo = jax.nn.sigmoid(gates[:, :3 * D])              # i|f|o: one contiguous EUP slab
        g_g = jnp.tanh(gates[:, 3 * D:])
        c = ifo[:, D:2 * D] * c + ifo[:, :D] * g_g
        h = (ifo[:, 2 * D:] * jnp.tanh(c)).astype(jnp.bfloat16)
        hs_scr[t] = h
        return h, c

    h0 = jnp.zeros((tile_n, D), jnp.bfloat16)
    c0 = jnp.zeros((tile_n, D), jnp.float32)
    lax.fori_loop(0, T, step, (h0, c0), unroll=unroll)

    # ---- proj -> LayerNorm -> residual -> * sqrt(0.5), on the time-major slab. ----
    hs = hs_scr[...].reshape(T * tile_n, D)                 # bf16, leading-dim collapse
    p = jnp.dot(hs, w_proj_ref[...], preferred_element_type=jnp.float32) + b_proj_ref[...]
    # Single-pass moments: one read of p, two back-to-back XLU reductions.
    mu = jnp.mean(p, axis=-1, keepdims=True)
    msq = jnp.mean(p * p, axis=-1, keepdims=True)
    var = msq - mu * mu
    ln = (p - mu) * lax.rsqrt(var + LN_EPS) * gamma_ref[...] + beta_ref[...]
    out = (x_ref[...].reshape(T * tile_n, D) + ln) * SQRT_HALF
    # o_ref is (T, tile_n*D) (lane-dense unmasked vst when D % 128 != 0) or (T, tile_n, D).
    o_ref[...] = out.reshape(o_ref.shape).astype(o_ref.dtype)


def _reorder_gates(w):
    """Permute PyTorch LSTM gate blocks (i, f, g, o) -> (i, f, o, g) along axis 0."""
    i, f, g, o = jnp.split(w, 4, axis=0)
    return jnp.concatenate([i, f, o, g], axis=0)


def _tpu_generation():
    """Return (vmem_capacity_bytes, num_tensorcores) with conservative fallbacks."""
    vmem = None
    try:
        vmem = int(pltpu.get_tpu_info().vmem_capacity_bytes)
    except Exception:
        vmem = None
    kind = ""
    try:
        kind = jax.devices()[0].device_kind.lower()
    except Exception:
        kind = ""
    if vmem is None:
        if "v7" in kind:
            vmem = 64 << 20
        elif "v2" in kind or "v3" in kind:
            vmem = 16 << 20
        elif kind:
            vmem = 128 << 20          # v4 / v5e / v5p / v6e class
        else:
            vmem = 64 << 20           # unknown: be v7x-safe
    if kind:
        num_tc = 2 if ("v7" in kind or "v4" in kind or "v5p" in kind) else 1
    else:
        num_tc = 2 if vmem <= (64 << 20) else 1
    return vmem, num_tc


def _default_tile_n(N, T, D, vmem_bytes, num_tc):
    """Tile over sequences, budgeted against BOTH the vreg file and (generation-aware) VMEM."""
    # Per-sequence VMEM bytes: x f32 x2 bufs (8TD) + out f32 x2 (8TD) + xg bf16 scratch (8TD)
    # + hs bf16 scratch (2TD) + transient f32 matmul / epilogue values (~22TD).
    bytes_per_row = 48 * T * D
    cap_vmem = max(8, int(vmem_bytes * 0.75) // bytes_per_row)
    # Keep the h/c recurrence carries (plus gate temporaries) inside the 256 KiB vreg file
    # (2 * tile_n * D * 4B <= 128 KiB) so spills never land on the serial recurrence path.
    cap_vreg = max(8, (128 << 10) // (8 * D))
    target = min(N, cap_vmem, cap_vreg)
    if num_tc > 1:
        # Dual-TC chips: aim for >= 2 grid steps per TensorCore so each core's next input
        # DMA hides under the current tile's recurrence.
        for steps in (2 * num_tc, num_tc):
            if N // steps >= 8:
                target = min(target, N // steps)
                break
    # Single-TC chips: take the whole batch if it fits the caps (no forced split).
    t = max(8, (min(target, N) // 8) * 8)
    while t >= 8:
        if N % t == 0:
            return t
        t -= 8
    return N


def lstm_block_forward(x, params, *, tile_n=None):
    """x: (Batch, Path1, Path2, Dim) -> (Batch, Path2, Path1, Dim).

    Default LSTMBlock path only (num_condition=0, C=None, L=None, Dropout = identity).
    """
    B, P1, P2, D = x.shape
    N, T = B * P2, P1

    # Time-major relayout fuses with the module's transpose(1,2)+flatten: one XLA transpose.
    # TODO(synk): v7x option: feed x / emit out in bf16 to halve HBM traffic and tile VMEM.
    x_tm = jnp.transpose(x, (1, 0, 2, 3)).reshape(T, N, D).astype(jnp.float32)

    vmem_cap, num_tc = _tpu_generation()
    if tile_n is None:
        tile_n = _default_tile_n(N, T, D, vmem_cap, num_tc)
    assert N % tile_n == 0 and (tile_n % 8 == 0 or tile_n == N), (N, tile_n)
    grid = (N // tile_n,)

    # Host-side weight prep (once): gate permutation, pre-transposition, bf16 MXU operands.
    w_ih = _reorder_gates(params["w_ih"]).T.astype(jnp.bfloat16)            # (D, 4D)
    w_hh = _reorder_gates(params["w_hh"]).T.astype(jnp.bfloat16)            # (D, 4D)
    b = _reorder_gates(params["b_ih"] + params["b_hh"]).reshape(1, 4 * D).astype(jnp.float32)
    w_proj = params["w_proj"].T.astype(jnp.bfloat16)                        # (D, D)
    b_proj = params["b_proj"].reshape(1, D).astype(jnp.float32)
    gamma = params["gamma"].reshape(1, D).astype(jnp.float32)
    beta = params["beta"].reshape(1, D).astype(jnp.float32)

    weight_bytes = 2 * (2 * (D * 4 * D) * 2 + (D * D) * 2 + 4 * 7 * D)
    vmem_est = 48 * tile_n * T * D + weight_bytes
    vmem_limit = int(min(int(vmem_cap * 0.92), max(2 * vmem_est, 16 << 20)))

    unroll = True if T <= 32 else 4          # partial unroll for long production sequences
    kernel = functools.partial(lstm_block_kernel, unroll=unroll)

    def rep(shape):
        return pl.BlockSpec(shape, lambda n: (0,) * len(shape))

    def run(flat_out):
        if flat_out:
            out_shape = jax.ShapeDtypeStruct((T, N * D), jnp.float32)
            out_spec = pl.BlockSpec((T, tile_n * D), lambda n: (0, n))
        else:
            out_shape = jax.ShapeDtypeStruct((T, N, D), jnp.float32)
            out_spec = pl.BlockSpec((T, tile_n, D), lambda n: (0, n, 0))
        return pl.pallas_call(
            kernel,
            out_shape=out_shape,
            grid=grid,
            in_specs=[
                pl.BlockSpec((T, tile_n, D), lambda n: (0, n, 0)),   # x, time-major, tiled N
                rep((D, 4 * D)),                                     # w_ih^T  (bf16)
                rep((D, 4 * D)),                                     # w_hh^T  (bf16)
                rep((1, 4 * D)),                                     # combined LSTM bias
                rep((D, D)),                                         # w_proj^T (bf16)
                rep((1, D)),                                         # b_proj
                rep((1, D)),                                         # LayerNorm gamma
                rep((1, D)),                                         # LayerNorm beta
            ],
            out_specs=out_spec,
            scratch_shapes=[
                pltpu.VMEM((T, tile_n, 4 * D), jnp.bfloat16),        # input-gate contributions
                pltpu.VMEM((T, tile_n, D), jnp.bfloat16),            # per-step hidden states
            ],
            compiler_params=pltpu.CompilerParams(
                dimension_semantics=("parallel",),
                vmem_limit_bytes=vmem_limit),
        )(x_tm, w_ih, w_hh, b, w_proj, b_proj, gamma, beta)

    # Lane-dense output store (unmasked vst) when D is not a multiple of 128; for
    # D % 128 == 0 the (T, tile_n, D) store is already lane-dense.
    use_flat = (D % 128 != 0) and ((tile_n * D) % 128 == 0)
    if use_flat:
        try:
            out_tm = jax.block_until_ready(run(True)).reshape(T, N, D)
        except Exception:
            # TODO(synk): fallback for Mosaic builds without general value-reshape support.
            out_tm = run(False)
    else:
        out_tm = run(False)

    # (T, N, D) -> (B, P2, P1, D); pure layout, fused by XLA outside the kernel.
    return jnp.transpose(out_tm.reshape(T, B, P2, D), (1, 2, 0, 3))


def lstm_block_ref(x, params):
    """Pure-JAX f32 reference with identical semantics (for correctness check)."""
    B, P1, P2, D = x.shape
    xt = jnp.transpose(x, (0, 2, 1, 3)).reshape(B * P2, P1, D)
    w_ih, w_hh = params["w_ih"], params["w_hh"]
    b = params["b_ih"] + params["b_hh"]
    N = B * P2

    def step(carry, x_t):
        h, c = carry
        gates = x_t @ w_ih.T + h @ w_hh.T + b
        i, f, g, o = jnp.split(gates, 4, axis=-1)
        i, f, o = jax.nn.sigmoid(i), jax.nn.sigmoid(f), jax.nn.sigmoid(o)
        g = jnp.tanh(g)
        c = f * c + i * g
        h = o * jnp.tanh(c)
        return (h, c), h

    h0 = jnp.zeros((N, D), jnp.float32)
    c0 = jnp.zeros((N, D), jnp.float32)
    _, hs = lax.scan(step, (h0, c0), jnp.transpose(xt, (1, 0, 2)))
    hs = jnp.transpose(hs, (1, 0, 2))                          # (N, T, D)
    p = hs @ params["w_proj"].T + params["b_proj"]
    mu = jnp.mean(p, axis=-1, keepdims=True)
    var = jnp.mean((p - mu) ** 2, axis=-1, keepdims=True)
    ln = (p - mu) / jnp.sqrt(var + LN_EPS) * params["gamma"] + params["beta"]
    out = (xt + ln) * SQRT_HALF
    return out.reshape(B, P2, P1, D)


if __name__ == "__main__":
    # TODO(synk): packed-sequence path (L != None) and conditioning (C, AdaIN/PReLU) are
    # not exercised; this implements the default num_condition=0, C=None, L=None path
    # with Dropout in eval mode (identity).
    B, P1, P2, D = 2, 8, 16, 32     # Batch, Path1 (LSTM time axis), Path2, hidden dim
    key = jax.random.PRNGKey(0)
    keys = jax.random.split(key, 8)
    s = 1.0 / math.sqrt(D)

    x = jax.random.normal(keys[0], (B, P1, P2, D), jnp.float32)
    params = {
        "w_ih":   jax.random.uniform(keys[1], (4 * D, D), jnp.float32, -s, s),
        "w_hh":   jax.random.uniform(keys[2], (4 * D, D), jnp.float32, -s, s),
        "b_ih":   jax.random.uniform(keys[3], (4 * D,),   jnp.float32, -s, s),
        "b_hh":   jax.random.uniform(keys[4], (4 * D,),   jnp.float32, -s, s),
        "w_proj": jax.random.uniform(keys[5], (D, D),     jnp.float32, -s, s),
        "b_proj": jax.random.uniform(keys[6], (D,),       jnp.float32, -s, s),
        "gamma":  jnp.ones((D,), jnp.float32),
        "beta":   jnp.zeros((D,), jnp.float32),
    }

    out = jax.block_until_ready(lstm_block_forward(x, params))
    ref = jax.block_until_ready(lstm_block_ref(x, params))

    assert out.shape == (B, P2, P1, D), out.shape
    # bf16 MXU operands + bf16 cached input-gate pre-activations (f32 accumulation and
    # f32 cell state) vs f32 reference -> slightly looser tolerance.
    max_err = float(jnp.max(jnp.abs(out - ref)))
    assert max_err < 5e-2, max_err
    print("KERNEL_OK")
</pallas_src>

<mosaic_0001>
module attributes {stable_mosaic.version = 11 : i64} {
  func.func @lstm_block_kernel(%arg0: i32, %arg1: memref<8x32x32xf32, #tpu.memory_space<vmem>>, %arg2: memref<32x128xbf16, #tpu.memory_space<vmem>>, %arg3: memref<32x128xbf16, #tpu.memory_space<vmem>>, %arg4: memref<1x128xf32, #tpu.memory_space<vmem>>, %arg5: memref<32x32xbf16, #tpu.memory_space<vmem>>, %arg6: memref<1x32xf32, #tpu.memory_space<vmem>>, %arg7: memref<1x32xf32, #tpu.memory_space<vmem>>, %arg8: memref<1x32xf32, #tpu.memory_space<vmem>>, %arg9: memref<8x1024xf32, #tpu.memory_space<vmem>>, %arg10: memref<8x32x128xbf16, #tpu.memory_space<vmem>>, %arg11: memref<8x32x32xbf16, #tpu.memory_space<vmem>>) attributes {dimension_semantics = [#tpu.dimension_semantics<parallel>], iteration_bounds = array<i64: 1>, scalar_prefetch = 0 : i64, scratch_operands = 2 : i64, tpu.core_type = #tpu.core_type<tc>, window_params = [{transform_indices = @transform_0, window_bounds = array<i64: 8, 32, 32>}, {pipeline_mode = #tpu.pipeline_mode<synchronous>, transform_indices = @transform_1, window_bounds = array<i64: 32, 128>}, {pipeline_mode = #tpu.pipeline_mode<synchronous>, transform_indices = @transform_2, window_bounds = array<i64: 32, 128>}, {pipeline_mode = #tpu.pipeline_mode<synchronous>, transform_indices = @transform_3, window_bounds = array<i64: 1, 128>}, {pipeline_mode = #tpu.pipeline_mode<synchronous>, transform_indices = @transform_4, window_bounds = array<i64: 32, 32>}, {pipeline_mode = #tpu.pipeline_mode<synchronous>, transform_indices = @transform_5, window_bounds = array<i64: 1, 32>}, {pipeline_mode = #tpu.pipeline_mode<synchronous>, transform_indices = @transform_6, window_bounds = array<i64: 1, 32>}, {pipeline_mode = #tpu.pipeline_mode<synchronous>, transform_indices = @transform_7, window_bounds = array<i64: 1, 32>}, {transform_indices = @transform_8, window_bounds = array<i64: 8, 1024>}]} {
    %c0 = arith.constant 0 : index
    %c0_0 = arith.constant 0 : index
    %c0_1 = arith.constant 0 : index
    %0 = vector.load %arg1[%c0, %c0_0, %c0_1] : memref<8x32x32xf32, #tpu.memory_space<vmem>>, vector<8x32x32xf32>
    %1 = arith.truncf %0 : vector<8x32x32xf32> to vector<8x32x32xbf16>
    %2 = vector.shape_cast %1 : vector<8x32x32xbf16> to vector<256x32xbf16>
    %c0_2 = arith.constant 0 : index
    %c0_3 = arith.constant 0 : index
    %3 = vector.load %arg2[%c0_2, %c0_3] : memref<32x128xbf16, #tpu.memory_space<vmem>>, vector<32x128xbf16>
    %cst = arith.constant dense<0.000000e+00> : vector<256x128xf32>
    %4 = tpu.matmul %2, %3, %cst {dimension_numbers = #tpu.dot_dimension_numbers<[1], [0], [0], [1], [0, 0, 1, 1], [], []>} : vector<256x32xbf16>, vector<32x128xbf16>, vector<256x128xf32> -> vector<256x128xf32>
    %c0_4 = arith.constant 0 : index
    %c0_5 = arith.constant 0 : index
    %5 = vector.load %arg4[%c0_4, %c0_5] : memref<1x128xf32, #tpu.memory_space<vmem>>, vector<1x128xf32>
    %6 = vector.broadcast %5 : vector<1x128xf32> to vector<256x128xf32>
    %7 = arith.addf %4, %6 : vector<256x128xf32>
    %8 = vector.shape_cast %7 : vector<256x128xf32> to vector<8x32x128xf32>
    %9 = arith.truncf %8 : vector<8x32x128xf32> to vector<8x32x128xbf16>
    %c0_6 = arith.constant 0 : index
    %c0_7 = arith.constant 0 : index
    %c0_8 = arith.constant 0 : index
    %10 = vector.load %arg10[%c0_6, %c0_7, %c0_8] : memref<8x32x128xbf16, #tpu.memory_space<vmem>>, vector<8x32x128xbf16>
    tpu.vector_store %arg10[%c0_6, %c0_7, %c0_8], %9 {strides = array<i32>} : memref<8x32x128xbf16, #tpu.memory_space<vmem>>, vector<8x32x128xbf16>,
    %c0_9 = arith.constant 0 : index
    %c0_10 = arith.constant 0 : index
    %11 = vector.load %arg3[%c0_9, %c0_10] : memref<32x128xbf16, #tpu.memory_space<vmem>>, vector<32x128xbf16>
    %cst_11 = arith.constant 0.000000e+00 : bf16
    %12 = vector.broadcast %cst_11 : bf16 to vector<32x32xbf16>
    %cst_12 = arith.constant 0.000000e+00 : f32
    %13 = vector.broadcast %cst_12 : f32 to vector<32x32xf32>
    %c0_i32 = arith.constant 0 : i32
    %14 = arith.index_cast %c0_i32 : i32 to index
    %c0_13 = arith.constant 0 : index
    %c0_14 = arith.constant 0 : index
    %15 = vector.load %arg10[%14, %c0_13, %c0_14] : memref<8x32x128xbf16, #tpu.memory_space<vmem>>, vector<1x32x128xbf16>
    %16 = vector.shape_cast %15 : vector<1x32x128xbf16> to vector<32x128xbf16>
    %17 = arith.extf %16 : vector<32x128xbf16> to vector<32x128xf32>
    %cst_15 = arith.constant dense<0.000000e+00> : vector<32x128xf32>
    %18 = tpu.matmul %12, %11, %cst_15 {dimension_numbers = #tpu.dot_dimension_numbers<[1], [0], [0], [1], [0, 0, 1, 1], [], []>} : vector<32x32xbf16>, vector<32x128xbf16>, vector<32x128xf32> -> vector<32x128xf32>
    %19 = arith.addf %17, %18 : vector<32x128xf32>
    %20 = vector.extract_strided_slice %19 {offsets = [0, 0], sizes = [32, 96], strides = [1, 1]} : vector<32x128xf32> to vector<32x96xf32>
    %21 = arith.negf %20 : vector<32x96xf32>
    %22 = math.exp %21 : vector<32x96xf32>
    %cst_16 = arith.constant 1.000000e+00 : f32
    %23 = vector.broadcast %cst_16 : f32 to vector<32x96xf32>
    %24 = arith.addf %23, %22 : vector<32x96xf32>
    %25 = arith.divf %23, %24 : vector<32x96xf32>
    %26 = vector.extract_strided_slice %19 {offsets = [0, 96], sizes = [32, 32], strides = [1, 1]} : vector<32x128xf32> to vector<32x32xf32>
    %27 = math.tanh %26 : vector<32x32xf32>
    %28 = vector.extract_strided_slice %25 {offsets = [0, 32], sizes = [32, 32], strides = [1, 1]} : vector<32x96xf32> to vector<32x32xf32>
    %29 = arith.mulf %28, %13 : vector<32x32xf32>
    %30 = vector.extract_strided_slice %25 {offsets = [0, 0], sizes = [32, 32], strides = [1, 1]} : vector<32x96xf32> to vector<32x32xf32>
    %31 = arith.mulf %30, %27 : vector<32x32xf32>
    %32 = arith.addf %29, %31 : vector<32x32xf32>
    %33 = vector.extract_strided_slice %25 {offsets = [0, 64], sizes = [32, 32], strides = [1, 1]} : vector<32x96xf32> to vector<32x32xf32>
    %34 = math.tanh %32 : vector<32x32xf32>
    %35 = arith.mulf %33, %34 : vector<32x32xf32>
    %36 = arith.truncf %35 : vector<32x32xf32> to vector<32x32xbf16>
    %37 = arith.index_cast %c0_i32 : i32 to index
    %c0_17 = arith.constant 0 : index
    %c0_18 = arith.constant 0 : index
    %38 = vector.load %arg11[%37, %c0_17, %c0_18] : memref<8x32x32xbf16, #tpu.memory_space<vmem>>, vector<1x32x32xbf16>
    %39 = vector.shape_cast %38 : vector<1x32x32xbf16> to vector<32x32xbf16>
    %40 = vector.shape_cast %36 : vector<32x32xbf16> to vector<1x32x32xbf16>
    tpu.vector_store %arg11[%37, %c0_17, %c0_18], %40 {strides = array<i32>} : memref<8x32x32xbf16, #tpu.memory_space<vmem>>, vector<1x32x32xbf16>,
    %c1_i32 = arith.constant 1 : i32
    %41 = arith.index_cast %c1_i32 : i32 to index
    %c0_19 = arith.constant 0 : index
    %c0_20 = arith.constant 0 : index
    %42 = vector.load %arg10[%41, %c0_19, %c0_20] : memref<8x32x128xbf16, #tpu.memory_space<vmem>>, vector<1x32x128xbf16>
    %43 = vector.shape_cast %42 : vector<1x32x128xbf16> to vector<32x128xbf16>
    %44 = arith.extf %43 : vector<32x128xbf16> to vector<32x128xf32>
    %cst_21 = arith.constant dense<0.000000e+00> : vector<32x128xf32>
    %45 = tpu.matmul %36, %11, %cst_21 {dimension_numbers = #tpu.dot_dimension_numbers<[1], [0], [0], [1], [0, 0, 1, 1], [], []>} : vector<32x32xbf16>, vector<32x128xbf16>, vector<32x128xf32> -> vector<32x128xf32>
    %46 = arith.addf %44, %45 : vector<32x128xf32>
    %47 = vector.extract_strided_slice %46 {offsets = [0, 0], sizes = [32, 96], strides = [1, 1]} : vector<32x128xf32> to vector<32x96xf32>
    %48 = arith.negf %47 : vector<32x96xf32>
    %49 = math.exp %48 : vector<32x96xf32>
    %cst_22 = arith.constant 1.000000e+00 : f32
    %50 = vector.broadcast %cst_22 : f32 to vector<32x96xf32>
    %51 = arith.addf %50, %49 : vector<32x96xf32>
    %52 = arith.divf %50, %51 : vector<32x96xf32>
    %53 = vector.extract_strided_slice %46 {offsets = [0, 96], sizes = [32, 32], strides = [1, 1]} : vector<32x128xf32> to vector<32x32xf32>
    %54 = math.tanh %53 : vector<32x32xf32>
    %55 = vector.extract_strided_slice %52 {offsets = [0, 32], sizes = [32, 32], strides = [1, 1]} : vector<32x96xf32> to vector<32x32xf32>
    %56 = arith.mulf %55, %32 : vector<32x32xf32>
    %57 = vector.extract_strided_slice %52 {offsets = [0, 0], sizes = [32, 32], strides = [1, 1]} : vector<32x96xf32> to vector<32x32xf32>
    %58 = arith.mulf %57, %54 : vector<32x32xf32>
    %59 = arith.addf %56, %58 : vector<32x32xf32>
    %60 = vector.extract_strided_slice %52 {offsets = [0, 64], sizes = [32, 32], strides = [1, 1]} : vector<32x96xf32> to vector<32x32xf32>
    %61 = math.tanh %59 : vector<32x32xf32>
    %62 = arith.mulf %60, %61 : vector<32x32xf32>
    %63 = arith.truncf %62 : vector<32x32xf32> to vector<32x32xbf16>
    %64 = arith.index_cast %c1_i32 : i32 to index
    %c0_23 = arith.constant 0 : index
    %c0_24 = arith.constant 0 : index
    %65 = vector.load %arg11[%64, %c0_23, %c0_24] : memref<8x32x32xbf16, #tpu.memory_space<vmem>>, vector<1x32x32xbf16>
    %66 = vector.shape_cast %65 : vector<1x32x32xbf16> to vector<32x32xbf16>
    %67 = vector.shape_cast %63 : vector<32x32xbf16> to vector<1x32x32xbf16>
    tpu.vector_store %arg11[%64, %c0_23, %c0_24], %67 {strides = array<i32>} : memref<8x32x32xbf16, #tpu.memory_space<vmem>>, vector<1x32x32xbf16>,
    %c2_i32 = arith.constant 2 : i32
    %68 = arith.index_cast %c2_i32 : i32 to index
    %c0_25 = arith.constant 0 : index
    %c0_26 = arith.constant 0 : index
    %69 = vector.load %arg10[%68, %c0_25, %c0_26] : memref<8x32x128xbf16, #tpu.memory_space<vmem>>, vector<1x32x128xbf16>
    %70 = vector.shape_cast %69 : vector<1x32x128xbf16> to vector<32x128xbf16>
    %71 = arith.extf %70 : vector<32x128xbf16> to vector<32x128xf32>
    %cst_27 = arith.constant dense<0.000000e+00> : vector<32x128xf32>
    %72 = tpu.matmul %63, %11, %cst_27 {dimension_numbers = #tpu.dot_dimension_numbers<[1], [0], [0], [1], [0, 0, 1, 1], [], []>} : vector<32x32xbf16>, vector<32x128xbf16>, vector<32x128xf32> -> vector<32x128xf32>
    %73 = arith.addf %71, %72 : vector<32x128xf32>
    %74 = vector.extract_strided_slice %73 {offsets = [0, 0], sizes = [32, 96], strides = [1, 1]} : vector<32x128xf32> to vector<32x96xf32>
    %75 = arith.negf %74 : vector<32x96xf32>
    %76 = math.exp %75 : vector<32x96xf32>
    %cst_28 = arith.constant 1.000000e+00 : f32
    %77 = vector.broadcast %cst_28 : f32 to vector<32x96xf32>
    %78 = arith.addf %77, %76 : vector<32x96xf32>
    %79 = arith.divf %77, %78 : vector<32x96xf32>
    %80 = vector.extract_strided_slice %73 {offsets = [0, 96], sizes = [32, 32], strides = [1, 1]} : vector<32x128xf32> to vector<32x32xf32>
    %81 = math.tanh %80 : vector<32x32xf32>
    %82 = vector.extract_strided_slice %79 {offsets = [0, 32], sizes = [32, 32], strides = [1, 1]} : vector<32x96xf32> to vector<32x32xf32>
    %83 = arith.mulf %82, %59 : vector<32x32xf32>
    %84 = vector.extract_strided_slice %79 {offsets = [0, 0], sizes = [32, 32], strides = [1, 1]} : vector<32x96xf32> to vector<32x32xf32>
    %85 = arith.mulf %84, %81 : vector<32x32xf32>
    %86 = arith.addf %83, %85 : vector<32x32xf32>
    %87 = vector.extract_strided_slice %79 {offsets = [0, 64], sizes = [32, 32], strides = [1, 1]} : vector<32x96xf32> to vector<32x32xf32>
    %88 = math.tanh %86 : vector<32x32xf32>
    %89 = arith.mulf %87, %88 : vector<32x32xf32>
    %90 = arith.truncf %89 : vector<32x32xf32> to vector<32x32xbf16>
    %91 = arith.index_cast %c2_i32 : i32 to index
    %c0_29 = arith.constant 0 : index
    %c0_30 = arith.constant 0 : index
    %92 = vector.load %arg11[%91, %c0_29, %c0_30] : memref<8x32x32xbf16, #tpu.memory_space<vmem>>, vector<1x32x32xbf16>
    %93 = vector.shape_cast %92 : vector<1x32x32xbf16> to vector<32x32xbf16>
    %94 = vector.shape_cast %90 : vector<32x32xbf16> to vector<1x32x32xbf16>
    tpu.vector_store %arg11[%91, %c0_29, %c0_30], %94 {strides = array<i32>} : memref<8x32x32xbf16, #tpu.memory_space<vmem>>, vector<1x32x32xbf16>,
    %c3_i32 = arith.constant 3 : i32
    %95 = arith.index_cast %c3_i32 : i32 to index
    %c0_31 = arith.constant 0 : index
    %c0_32 = arith.constant 0 : index
    %96 = vector.load %arg10[%95, %c0_31, %c0_32] : memref<8x32x128xbf16, #tpu.memory_space<vmem>>, vector<1x32x128xbf16>
    %97 = vector.shape_cast %96 : vector<1x32x128xbf16> to vector<32x128xbf16>
    %98 = arith.extf %97 : vector<32x128xbf16> to vector<32x128xf32>
    %cst_33 = arith.constant dense<0.000000e+00> : vector<32x128xf32>
    %99 = tpu.matmul %90, %11, %cst_33 {dimension_numbers = #tpu.dot_dimension_numbers<[1], [0], [0], [1], [0, 0, 1, 1], [], []>} : vector<32x32xbf16>, vector<32x128xbf16>, vector<32x128xf32> -> vector<32x128xf32>
    %100 = arith.addf %98, %99 : vector<32x128xf32>
    %101 = vector.extract_strided_slice %100 {offsets = [0, 0], sizes = [32, 96], strides = [1, 1]} : vector<32x128xf32> to vector<32x96xf32>
    %102 = arith.negf %101 : vector<32x96xf32>
    %103 = math.exp %102 : vector<32x96xf32>
    %cst_34 = arith.constant 1.000000e+00 : f32
    %104 = vector.broadcast %cst_34 : f32 to vector<32x96xf32>
    %105 = arith.addf %104, %103 : vector<32x96xf32>
    %106 = arith.divf %104, %105 : vector<32x96xf32>
    %107 = vector.extract_strided_slice %100 {offsets = [0, 96], sizes = [32, 32], strides = [1, 1]} : vector<32x128xf32> to vector<32x32xf32>
    %108 = math.tanh %107 : vector<32x32xf32>
    %109 = vector.extract_strided_slice %106 {offsets = [0, 32], sizes = [32, 32], strides = [1, 1]} : vector<32x96xf32> to vector<32x32xf32>
    %110 = arith.mulf %109, %86 : vector<32x32xf32>
    %111 = vector.extract_strided_slice %106 {offsets = [0, 0], sizes = [32, 32], strides = [1, 1]} : vector<32x96xf32> to vector<32x32xf32>
    %112 = arith.mulf %111, %108 : vector<32x32xf32>
    %113 = arith.addf %110, %112 : vector<32x32xf32>
    %114 = vector.extract_strided_slice %106 {offsets = [0, 64], sizes = [32, 32], strides = [1, 1]} : vector<32x96xf32> to vector<32x32xf32>
    %115 = math.tanh %113 : vector<32x32xf32>
    %116 = arith.mulf %114, %115 : vector<32x32xf32>
    %117 = arith.truncf %116 : vector<32x32xf32> to vector<32x32xbf16>
    %118 = arith.index_cast %c3_i32 : i32 to index
    %c0_35 = arith.constant 0 : index
    %c0_36 = arith.constant 0 : index
    %119 = vector.load %arg11[%118, %c0_35, %c0_36] : memref<8x32x32xbf16, #tpu.memory_space<vmem>>, vector<1x32x32xbf16>
    %120 = vector.shape_cast %119 : vector<1x32x32xbf16> to vector<32x32xbf16>
    %121 = vector.shape_cast %117 : vector<32x32xbf16> to vector<1x32x32xbf16>
    tpu.vector_store %arg11[%118, %c0_35, %c0_36], %121 {strides = array<i32>} : memref<8x32x32xbf16, #tpu.memory_space<vmem>>, vector<1x32x32xbf16>,
    %c4_i32 = arith.constant 4 : i32
    %122 = arith.index_cast %c4_i32 : i32 to index
    %c0_37 = arith.constant 0 : index
    %c0_38 = arith.constant 0 : index
    %123 = vector.load %arg10[%122, %c0_37, %c0_38] : memref<8x32x128xbf16, #tpu.memory_space<vmem>>, vector<1x32x128xbf16>
    %124 = vector.shape_cast %123 : vector<1x32x128xbf16> to vector<32x128xbf16>
    %125 = arith.extf %124 : vector<32x128xbf16> to vector<32x128xf32>
    %cst_39 = arith.constant dense<0.000000e+00> : vector<32x128xf32>
    %126 = tpu.matmul %117, %11, %cst_39 {dimension_numbers = #tpu.dot_dimension_numbers<[1], [0], [0], [1], [0, 0, 1, 1], [], []>} : vector<32x32xbf16>, vector<32x128xbf16>, vector<32x128xf32> -> vector<32x128xf32>
    %127 = arith.addf %125, %126 : vector<32x128xf32>
    %128 = vector.extract_strided_slice %127 {offsets = [0, 0], sizes = [32, 96], strides = [1, 1]} : vector<32x128xf32> to vector<32x96xf32>
    %129 = arith.negf %128 : vector<32x96xf32>
    %130 = math.exp %129 : vector<32x96xf32>
    %cst_40 = arith.constant 1.000000e+00 : f32
    %131 = vector.broadcast %cst_40 : f32 to vector<32x96xf32>
    %132 = arith.addf %131, %130 : vector<32x96xf32>
    %133 = arith.divf %131, %132 : vector<32x96xf32>
    %134 = vector.extract_strided_slice %127 {offsets = [0, 96], sizes = [32, 32], strides = [1, 1]} : vector<32x128xf32> to vector<32x32xf32>
    %135 = math.tanh %134 : vector<32x32xf32>
    %136 = vector.extract_strided_slice %133 {offsets = [0, 32], sizes = [32, 32], strides = [1, 1]} : vector<32x96xf32> to vector<32x32xf32>
    %137 = arith.mulf %136, %113 : vector<32x32xf32>
    %138 = vector.extract_strided_slice %133 {offsets = [0, 0], sizes = [32, 32], strides = [1, 1]} : vector<32x96xf32> to vector<32x32xf32>
    %139 = arith.mulf %138, %135 : vector<32x32xf32>
    %140 = arith.addf %137, %139 : vector<32x32xf32>
    %141 = vector.extract_strided_slice %133 {offsets = [0, 64], sizes = [32, 32], strides = [1, 1]} : vector<32x96xf32> to vector<32x32xf32>
    %142 = math.tanh %140 : vector<32x32xf32>
    %143 = arith.mulf %141, %142 : vector<32x32xf32>
    %144 = arith.truncf %143 : vector<32x32xf32> to vector<32x32xbf16>
    %145 = arith.index_cast %c4_i32 : i32 to index
    %c0_41 = arith.constant 0 : index
    %c0_42 = arith.constant 0 : index
    %146 = vector.load %arg11[%145, %c0_41, %c0_42] : memref<8x32x32xbf16, #tpu.memory_space<vmem>>, vector<1x32x32xbf16>
    %147 = vector.shape_cast %146 : vector<1x32x32xbf16> to vector<32x32xbf16>
    %148 = vector.shape_cast %144 : vector<32x32xbf16> to vector<1x32x32xbf16>
    tpu.vector_store %arg11[%145, %c0_41, %c0_42], %148 {strides = array<i32>} : memref<8x32x32xbf16, #tpu.memory_space<vmem>>, vector<1x32x32xbf16>,
    %c5_i32 = arith.constant 5 : i32
    %149 = arith.index_cast %c5_i32 : i32 to index
    %c0_43 = arith.constant 0 : index
    %c0_44 = arith.constant 0 : index
    %150 = vector.load %arg10[%149, %c0_43, %c0_44] : memref<8x32x128xbf16, #tpu.memory_space<vmem>>, vector<1x32x128xbf16>
    %151 = vector.shape_cast %150 : vector<1x32x128xbf16> to vector<32x128xbf16>
    %152 = arith.extf %151 : vector<32x128xbf16> to vector<32x128xf32>
    %cst_45 = arith.constant dense<0.000000e+00> : vector<32x128xf32>
    %153 = tpu.matmul %144, %11, %cst_45 {dimension_numbers = #tpu.dot_dimension_numbers<[1], [0], [0], [1], [0, 0, 1, 1], [], []>} : vector<32x32xbf16>, vector<32x128xbf16>, vector<32x128xf32> -> vector<32x128xf32>
    %154 = arith.addf %152, %153 : vector<32x128xf32>
    %155 = vector.extract_strided_slice %154 {offsets = [0, 0], sizes = [32, 96], strides = [1, 1]} : vector<32x128xf32> to vector<32x96xf32>
    %156 = arith.negf %155 : vector<32x96xf32>
    %157 = math.exp %156 : vector<32x96xf32>
    %cst_46 = arith.constant 1.000000e+00 : f32
    %158 = vector.broadcast %cst_46 : f32 to vector<32x96xf32>
    %159 = arith.addf %158, %157 : vector<32x96xf32>
    %160 = arith.divf %158, %159 : vector<32x96xf32>
    %161 = vector.extract_strided_slice %154 {offsets = [0, 96], sizes = [32, 32], strides = [1, 1]} : vector<32x128xf32> to vector<32x32xf32>
    %162 = math.tanh %161 : vector<32x32xf32>
    %163 = vector.extract_strided_slice %160 {offsets = [0, 32], sizes = [32, 32], strides = [1, 1]} : vector<32x96xf32> to vector<32x32xf32>
    %164 = arith.mulf %163, %140 : vector<32x32xf32>
    %165 = vector.extract_strided_slice %160 {offsets = [0, 0], sizes = [32, 32], strides = [1, 1]} : vector<32x96xf32> to vector<32x32xf32>
    %166 = arith.mulf %165, %162 : vector<32x32xf32>
    %167 = arith.addf %164, %166 : vector<32x32xf32>
    %168 = vector.extract_strided_slice %160 {offsets = [0, 64], sizes = [32, 32], strides = [1, 1]} : vector<32x96xf32> to vector<32x32xf32>
    %169 = math.tanh %167 : vector<32x32xf32>
    %170 = arith.mulf %168, %169 : vector<32x32xf32>
    %171 = arith.truncf %170 : vector<32x32xf32> to vector<32x32xbf16>
    %172 = arith.index_cast %c5_i32 : i32 to index
    %c0_47 = arith.constant 0 : index
    %c0_48 = arith.constant 0 : index
    %173 = vector.load %arg11[%172, %c0_47, %c0_48] : memref<8x32x32xbf16, #tpu.memory_space<vmem>>, vector<1x32x32xbf16>
    %174 = vector.shape_cast %173 : vector<1x32x32xbf16> to vector<32x32xbf16>
    %175 = vector.shape_cast %171 : vector<32x32xbf16> to vector<1x32x32xbf16>
    tpu.vector_store %arg11[%172, %c0_47, %c0_48], %175 {strides = array<i32>} : memref<8x32x32xbf16, #tpu.memory_space<vmem>>, vector<1x32x32xbf16>,
    %c6_i32 = arith.constant 6 : i32
    %176 = arith.index_cast %c6_i32 : i32 to index
    %c0_49 = arith.constant 0 : index
    %c0_50 = arith.constant 0 : index
    %177 = vector.load %arg10[%176, %c0_49, %c0_50] : memref<8x32x128xbf16, #tpu.memory_space<vmem>>, vector<1x32x128xbf16>
    %178 = vector.shape_cast %177 : vector<1x32x128xbf16> to vector<32x128xbf16>
    %179 = arith.extf %178 : vector<32x128xbf16> to vector<32x128xf32>
    %cst_51 = arith.constant dense<0.000000e+00> : vector<32x128xf32>
    %180 = tpu.matmul %171, %11, %cst_51 {dimension_numbers = #tpu.dot_dimension_numbers<[1], [0], [0], [1], [0, 0, 1, 1], [], []>} : vector<32x32xbf16>, vector<32x128xbf16>, vector<32x128xf32> -> vector<32x128xf32>
    %181 = arith.addf %179, %180 : vector<32x128xf32>
    %182 = vector.extract_strided_slice %181 {offsets = [0, 0], sizes = [32, 96], strides = [1, 1]} : vector<32x128xf32> to vector<32x96xf32>
    %183 = arith.negf %182 : vector<32x96xf32>
    %184 = math.exp %183 : vector<32x96xf32>
    %cst_52 = arith.constant 1.000000e+00 : f32
    %185 = vector.broadcast %cst_52 : f32 to vector<32x96xf32>
    %186 = arith.addf %185, %184 : vector<32x96xf32>
    %187 = arith.divf %185, %186 : vector<32x96xf32>
    %188 = vector.extract_strided_slice %181 {offsets = [0, 96], sizes = [32, 32], strides = [1, 1]} : vector<32x128xf32> to vector<32x32xf32>
    %189 = math.tanh %188 : vector<32x32xf32>
    %190 = vector.extract_strided_slice %187 {offsets = [0, 32], sizes = [32, 32], strides = [1, 1]} : vector<32x96xf32> to vector<32x32xf32>
    %191 = arith.mulf %190, %167 : vector<32x32xf32>
    %192 = vector.extract_strided_slice %187 {offsets = [0, 0], sizes = [32, 32], strides = [1, 1]} : vector<32x96xf32> to vector<32x32xf32>
    %193 = arith.mulf %192, %189 : vector<32x32xf32>
    %194 = arith.addf %191, %193 : vector<32x32xf32>
    %195 = vector.extract_strided_slice %187 {offsets = [0, 64], sizes = [32, 32], strides = [1, 1]} : vector<32x96xf32> to vector<32x32xf32>
    %196 = math.tanh %194 : vector<32x32xf32>
    %197 = arith.mulf %195, %196 : vector<32x32xf32>
    %198 = arith.truncf %197 : vector<32x32xf32> to vector<32x32xbf16>
    %199 = arith.index_cast %c6_i32 : i32 to index
    %c0_53 = arith.constant 0 : index
    %c0_54 = arith.constant 0 : index
    %200 = vector.load %arg11[%199, %c0_53, %c0_54] : memref<8x32x32xbf16, #tpu.memory_space<vmem>>, vector<1x32x32xbf16>
    %201 = vector.shape_cast %200 : vector<1x32x32xbf16> to vector<32x32xbf16>
    %202 = vector.shape_cast %198 : vector<32x32xbf16> to vector<1x32x32xbf16>
    tpu.vector_store %arg11[%199, %c0_53, %c0_54], %202 {strides = array<i32>} : memref<8x32x32xbf16, #tpu.memory_space<vmem>>, vector<1x32x32xbf16>,
    %c7_i32 = arith.constant 7 : i32
    %203 = arith.index_cast %c7_i32 : i32 to index
    %c0_55 = arith.constant 0 : index
    %c0_56 = arith.constant 0 : index
    %204 = vector.load %arg10[%203, %c0_55, %c0_56] : memref<8x32x128xbf16, #tpu.memory_space<vmem>>, vector<1x32x128xbf16>
    %205 = vector.shape_cast %204 : vector<1x32x128xbf16> to vector<32x128xbf16>
    %206 = arith.extf %205 : vector<32x128xbf16> to vector<32x128xf32>
    %cst_57 = arith.constant dense<0.000000e+00> : vector<32x128xf32>
    %207 = tpu.matmul %198, %11, %cst_57 {dimension_numbers = #tpu.dot_dimension_numbers<[1], [0], [0], [1], [0, 0, 1, 1], [], []>} : vector<32x32xbf16>, vector<32x128xbf16>, vector<32x128xf32> -> vector<32x128xf32>
    %208 = arith.addf %206, %207 : vector<32x128xf32>
    %209 = vector.extract_strided_slice %208 {offsets = [0, 0], sizes = [32, 96], strides = [1, 1]} : vector<32x128xf32> to vector<32x96xf32>
    %210 = arith.negf %209 : vector<32x96xf32>
    %211 = math.exp %210 : vector<32x96xf32>
    %cst_58 = arith.constant 1.000000e+00 : f32
    %212 = vector.broadcast %cst_58 : f32 to vector<32x96xf32>
    %213 = arith.addf %212, %211 : vector<32x96xf32>
    %214 = arith.divf %212, %213 : vector<32x96xf32>
    %215 = vector.extract_strided_slice %208 {offsets = [0, 96], sizes = [32, 32], strides = [1, 1]} : vector<32x128xf32> to vector<32x32xf32>
    %216 = math.tanh %215 : vector<32x32xf32>
    %217 = vector.extract_strided_slice %214 {offsets = [0, 32], sizes = [32, 32], strides = [1, 1]} : vector<32x96xf32> to vector<32x32xf32>
    %218 = arith.mulf %217, %194 : vector<32x32xf32>
    %219 = vector.extract_strided_slice %214 {offsets = [0, 0], sizes = [32, 32], strides = [1, 1]} : vector<32x96xf32> to vector<32x32xf32>
    %220 = arith.mulf %219, %216 : vector<32x32xf32>
    %221 = arith.addf %218, %220 : vector<32x32xf32>
    %222 = vector.extract_strided_slice %214 {offsets = [0, 64], sizes = [32, 32], strides = [1, 1]} : vector<32x96xf32> to vector<32x32xf32>
    %223 = math.tanh %221 : vector<32x32xf32>
    %224 = arith.mulf %222, %223 : vector<32x32xf32>
    %225 = arith.truncf %224 : vector<32x32xf32> to vector<32x32xbf16>
    %226 = arith.index_cast %c7_i32 : i32 to index
    %c0_59 = arith.constant 0 : index
    %c0_60 = arith.constant 0 : index
    %227 = vector.load %arg11[%226, %c0_59, %c0_60] : memref<8x32x32xbf16, #tpu.memory_space<vmem>>, vector<1x32x32xbf16>
    %228 = vector.shape_cast %227 : vector<1x32x32xbf16> to vector<32x32xbf16>
    %229 = vector.shape_cast %225 : vector<32x32xbf16> to vector<1x32x32xbf16>
    tpu.vector_store %arg11[%226, %c0_59, %c0_60], %229 {strides = array<i32>} : memref<8x32x32xbf16, #tpu.memory_space<vmem>>, vector<1x32x32xbf16>,
    %c8_i32 = arith.constant 8 : i32
    %c0_61 = arith.constant 0 : index
    %c0_62 = arith.constant 0 : index
    %c0_63 = arith.constant 0 : index
    %230 = vector.load %arg11[%c0_61, %c0_62, %c0_63] : memref<8x32x32xbf16, #tpu.memory_space<vmem>>, vector<8x32x32xbf16>
    %231 = vector.shape_cast %230 : vector<8x32x32xbf16> to vector<256x32xbf16>
    %c0_64 = arith.constant 0 : index
    %c0_65 = arith.constant 0 : index
    %232 = vector.load %arg5[%c0_64, %c0_65] : memref<32x32xbf16, #tpu.memory_space<vmem>>, vector<32x32xbf16>
    %cst_66 = arith.constant dense<0.000000e+00> : vector<256x32xf32>
    %233 = tpu.matmul %231, %232, %cst_66 {dimension_numbers = #tpu.dot_dimension_numbers<[1], [0], [0], [1], [0, 0, 1, 1], [], []>} : vector<256x32xbf16>, vector<32x32xbf16>, vector<256x32xf32> -> vector<256x32xf32>
    %c0_67 = arith.constant 0 : index
    %c0_68 = arith.constant 0 : index
    %234 = vector.load %arg6[%c0_67, %c0_68] : memref<1x32xf32, #tpu.memory_space<vmem>>, vector<1x32xf32>
    %235 = vector.broadcast %234 : vector<1x32xf32> to vector<256x32xf32>
    %236 = arith.addf %233, %235 : vector<256x32xf32>
    %cst_69 = arith.constant dense<0.000000e+00> : vector<256xf32>
    %237 = vector.multi_reduction <add>, %236, %cst_69 [1] : vector<256x32xf32> to vector<256xf32>
    %238 = vector.shape_cast %237 : vector<256xf32> to vector<256x1xf32>
    %cst_70 = arith.constant 3.200000e+01 : f32
    %239 = vector.broadcast %cst_70 : f32 to vector<256x1xf32>
    %240 = arith.divf %238, %239 : vector<256x1xf32>
    %241 = arith.mulf %236, %236 : vector<256x32xf32>
    %cst_71 = arith.constant dense<0.000000e+00> : vector<256xf32>
    %242 = vector.multi_reduction <add>, %241, %cst_71 [1] : vector<256x32xf32> to vector<256xf32>
    %243 = vector.shape_cast %242 : vector<256xf32> to vector<256x1xf32>
    %cst_72 = arith.constant 3.200000e+01 : f32
    %244 = vector.broadcast %cst_72 : f32 to vector<256x1xf32>
    %245 = arith.divf %243, %244 : vector<256x1xf32>
    %246 = arith.mulf %240, %240 : vector<256x1xf32>
    %247 = arith.subf %245, %246 : vector<256x1xf32>
    %248 = vector.broadcast %240 : vector<256x1xf32> to vector<256x32xf32>
    %249 = arith.subf %236, %248 : vector<256x32xf32>
    %cst_73 = arith.constant 9.99999974E-6 : f32
    %250 = vector.broadcast %cst_73 : f32 to vector<256x1xf32>
    %251 = arith.addf %247, %250 : vector<256x1xf32>
    %252 = math.rsqrt %251 : vector<256x1xf32>
    %253 = vector.broadcast %252 : vector<256x1xf32> to vector<256x32xf32>
    %254 = arith.mulf %249, %253 : vector<256x32xf32>
    %c0_74 = arith.constant 0 : index
    %c0_75 = arith.constant 0 : index
    %255 = vector.load %arg7[%c0_74, %c0_75] : memref<1x32xf32, #tpu.memory_space<vmem>>, vector<1x32xf32>
    %256 = vector.broadcast %255 : vector<1x32xf32> to vector<256x32xf32>
    %257 = arith.mulf %254, %256 : vector<256x32xf32>
    %c0_76 = arith.constant 0 : index
    %c0_77 = arith.constant 0 : index
    %258 = vector.load %arg8[%c0_76, %c0_77] : memref<1x32xf32, #tpu.memory_space<vmem>>, vector<1x32xf32>
    %259 = vector.broadcast %258 : vector<1x32xf32> to vector<256x32xf32>
    %260 = arith.addf %257, %259 : vector<256x32xf32>
    %c0_78 = arith.constant 0 : index
    %c0_79 = arith.constant 0 : index
    %c0_80 = arith.constant 0 : index
    %261 = vector.load %arg1[%c0_78, %c0_79, %c0_80] : memref<8x32x32xf32, #tpu.memory_space<vmem>>, vector<8x32x32xf32>
    %262 = vector.shape_cast %261 : vector<8x32x32xf32> to vector<256x32xf32>
    %263 = arith.addf %262, %260 : vector<256x32xf32>
    %cst_81 = arith.constant 0.707106769 : f32
    %264 = vector.broadcast %cst_81 : f32 to vector<256x32xf32>
    %265 = arith.mulf %263, %264 : vector<256x32xf32>
    %266 = vector.shape_cast %265 : vector<256x32xf32> to vector<8x1024xf32>
    %c0_82 = arith.constant 0 : index
    %c0_83 = arith.constant 0 : index
    %267 = vector.load %arg9[%c0_82, %c0_83] : memref<8x1024xf32, #tpu.memory_space<vmem>>, vector<8x1024xf32>
    tpu.vector_store %arg9[%c0_82, %c0_83], %266 {strides = array<i32>} : memref<8x1024xf32, #tpu.memory_space<vmem>>, vector<8x1024xf32>,
    return
  }
  func.func @transform_0(%arg0: i32) -> (i32, i32, i32) {
    %c0_i32 = arith.constant 0 : i32
    %c0_i32_0 = arith.constant 0 : i32
    %c0_i32_1 = arith.constant 0 : i32
    return %c0_i32, %arg0, %c0_i32_0 : i32, i32, i32
  }
  func.func @transform_1(%arg0: i32) -> (i32, i32) {
    %c0_i32 = arith.constant 0 : i32
    %c0_i32_0 = arith.constant 0 : i32
    %c0_i32_1 = arith.constant 0 : i32
    return %c0_i32, %c0_i32_0 : i32, i32
  }
  func.func @transform_2(%arg0: i32) -> (i32, i32) {
    %c0_i32 = arith.constant 0 : i32
    %c0_i32_0 = arith.constant 0 : i32
    %c0_i32_1 = arith.constant 0 : i32
    return %c0_i32, %c0_i32_0 : i32, i32
  }
  func.func @transform_3(%arg0: i32) -> (i32, i32) {
    %c0_i32 = arith.constant 0 : i32
    %c0_i32_0 = arith.constant 0 : i32
    %c0_i32_1 = arith.constant 0 : i32
    return %c0_i32, %c0_i32_0 : i32, i32
  }
  func.func @transform_4(%arg0: i32) -> (i32, i32) {
    %c0_i32 = arith.constant 0 : i32
    %c0_i32_0 = arith.constant 0 : i32
    %c0_i32_1 = arith.constant 0 : i32
    return %c0_i32, %c0_i32_0 : i32, i32
  }
  func.func @transform_5(%arg0: i32) -> (i32, i32) {
    %c0_i32 = arith.constant 0 : i32
    %c0_i32_0 = arith.constant 0 : i32
    %c0_i32_1 = arith.constant 0 : i32
    return %c0_i32, %c0_i32_0 : i32, i32
  }
  func.func @transform_6(%arg0: i32) -> (i32, i32) {
    %c0_i32 = arith.constant 0 : i32
    %c0_i32_0 = arith.constant 0 : i32
    %c0_i32_1 = arith.constant 0 : i32
    return %c0_i32, %c0_i32_0 : i32, i32
  }
  func.func @transform_7(%arg0: i32) -> (i32, i32) {
    %c0_i32 = arith.constant 0 : i32
    %c0_i32_0 = arith.constant 0 : i32
    %c0_i32_1 = arith.constant 0 : i32
    return %c0_i32, %c0_i32_0 : i32, i32
  }
  func.func @transform_8(%arg0: i32) -> (i32, i32) {
    %c0_i32 = arith.constant 0 : i32
    %c0_i32_0 = arith.constant 0 : i32
    return %c0_i32, %arg0 : i32, i32
  }
}

module attributes {stable_mosaic.version = 11 : i64} {
  func.func @lstm_block_kernel(%arg0: i32, %arg1: memref<8x32x32xf32, #tpu.memory_space<vmem>>, %arg2: memref<32x128xbf16, #tpu.memory_space<vmem>>, %arg3: memref<32x128xbf16, #tpu.memory_space<vmem>>, %arg4: memref<1x128xf32, #tpu.memory_space<vmem>>, %arg5: memref<32x32xbf16, #tpu.memory_space<vmem>>, %arg6: memref<1x32xf32, #tpu.memory_space<vmem>>, %arg7: memref<1x32xf32, #tpu.memory_space<vmem>>, %arg8: memref<1x32xf32, #tpu.memory_space<vmem>>, %arg9: memref<8x32x32xf32, #tpu.memory_space<vmem>>, %arg10: memref<8x32x128xbf16, #tpu.memory_space<vmem>>, %arg11: memref<8x32x32xbf16, #tpu.memory_space<vmem>>) attributes {dimension_semantics = [#tpu.dimension_semantics<parallel>], iteration_bounds = array<i64: 1>, scalar_prefetch = 0 : i64, scratch_operands = 2 : i64, tpu.core_type = #tpu.core_type<tc>, window_params = [{transform_indices = @transform_0, window_bounds = array<i64: 8, 32, 32>}, {pipeline_mode = #tpu.pipeline_mode<synchronous>, transform_indices = @transform_1, window_bounds = array<i64: 32, 128>}, {pipeline_mode = #tpu.pipeline_mode<synchronous>, transform_indices = @transform_2, window_bounds = array<i64: 32, 128>}, {pipeline_mode = #tpu.pipeline_mode<synchronous>, transform_indices = @transform_3, window_bounds = array<i64: 1, 128>}, {pipeline_mode = #tpu.pipeline_mode<synchronous>, transform_indices = @transform_4, window_bounds = array<i64: 32, 32>}, {pipeline_mode = #tpu.pipeline_mode<synchronous>, transform_indices = @transform_5, window_bounds = array<i64: 1, 32>}, {pipeline_mode = #tpu.pipeline_mode<synchronous>, transform_indices = @transform_6, window_bounds = array<i64: 1, 32>}, {pipeline_mode = #tpu.pipeline_mode<synchronous>, transform_indices = @transform_7, window_bounds = array<i64: 1, 32>}, {transform_indices = @transform_8, window_bounds = array<i64: 8, 32, 32>}]} {
    %c0 = arith.constant 0 : index
    %c0_0 = arith.constant 0 : index
    %c0_1 = arith.constant 0 : index
    %0 = vector.load %arg1[%c0, %c0_0, %c0_1] : memref<8x32x32xf32, #tpu.memory_space<vmem>>, vector<8x32x32xf32>
    %1 = arith.truncf %0 : vector<8x32x32xf32> to vector<8x32x32xbf16>
    %2 = vector.shape_cast %1 : vector<8x32x32xbf16> to vector<256x32xbf16>
    %c0_2 = arith.constant 0 : index
    %c0_3 = arith.constant 0 : index
    %3 = vector.load %arg2[%c0_2, %c0_3] : memref<32x128xbf16, #tpu.memory_space<vmem>>, vector<32x128xbf16>
    %cst = arith.constant dense<0.000000e+00> : vector<256x128xf32>
    %4 = tpu.matmul %2, %3, %cst {dimension_numbers = #tpu.dot_dimension_numbers<[1], [0], [0], [1], [0, 0, 1, 1], [], []>} : vector<256x32xbf16>, vector<32x128xbf16>, vector<256x128xf32> -> vector<256x128xf32>
    %c0_4 = arith.constant 0 : index
    %c0_5 = arith.constant 0 : index
    %5 = vector.load %arg4[%c0_4, %c0_5] : memref<1x128xf32, #tpu.memory_space<vmem>>, vector<1x128xf32>
    %6 = vector.broadcast %5 : vector<1x128xf32> to vector<256x128xf32>
    %7 = arith.addf %4, %6 : vector<256x128xf32>
    %8 = vector.shape_cast %7 : vector<256x128xf32> to vector<8x32x128xf32>
    %9 = arith.truncf %8 : vector<8x32x128xf32> to vector<8x32x128xbf16>
    %c0_6 = arith.constant 0 : index
    %c0_7 = arith.constant 0 : index
    %c0_8 = arith.constant 0 : index
    %10 = vector.load %arg10[%c0_6, %c0_7, %c0_8] : memref<8x32x128xbf16, #tpu.memory_space<vmem>>, vector<8x32x128xbf16>
    tpu.vector_store %arg10[%c0_6, %c0_7, %c0_8], %9 {strides = array<i32>} : memref<8x32x128xbf16, #tpu.memory_space<vmem>>, vector<8x32x128xbf16>,
    %c0_9 = arith.constant 0 : index
    %c0_10 = arith.constant 0 : index
    %11 = vector.load %arg3[%c0_9, %c0_10] : memref<32x128xbf16, #tpu.memory_space<vmem>>, vector<32x128xbf16>
    %cst_11 = arith.constant 0.000000e+00 : bf16
    %12 = vector.broadcast %cst_11 : bf16 to vector<32x32xbf16>
    %cst_12 = arith.constant 0.000000e+00 : f32
    %13 = vector.broadcast %cst_12 : f32 to vector<32x32xf32>
    %c0_i32 = arith.constant 0 : i32
    %14 = arith.index_cast %c0_i32 : i32 to index
    %c0_13 = arith.constant 0 : index
    %c0_14 = arith.constant 0 : index
    %15 = vector.load %arg10[%14, %c0_13, %c0_14] : memref<8x32x128xbf16, #tpu.memory_space<vmem>>, vector<1x32x128xbf16>
    %16 = vector.shape_cast %15 : vector<1x32x128xbf16> to vector<32x128xbf16>
    %17 = arith.extf %16 : vector<32x128xbf16> to vector<32x128xf32>
    %cst_15 = arith.constant dense<0.000000e+00> : vector<32x128xf32>
    %18 = tpu.matmul %12, %11, %cst_15 {dimension_numbers = #tpu.dot_dimension_numbers<[1], [0], [0], [1], [0, 0, 1, 1], [], []>} : vector<32x32xbf16>, vector<32x128xbf16>, vector<32x128xf32> -> vector<32x128xf32>
    %19 = arith.addf %17, %18 : vector<32x128xf32>
    %20 = vector.extract_strided_slice %19 {offsets = [0, 0], sizes = [32, 96], strides = [1, 1]} : vector<32x128xf32> to vector<32x96xf32>
    %21 = arith.negf %20 : vector<32x96xf32>
    %22 = math.exp %21 : vector<32x96xf32>
    %cst_16 = arith.constant 1.000000e+00 : f32
    %23 = vector.broadcast %cst_16 : f32 to vector<32x96xf32>
    %24 = arith.addf %23, %22 : vector<32x96xf32>
    %25 = arith.divf %23, %24 : vector<32x96xf32>
    %26 = vector.extract_strided_slice %19 {offsets = [0, 96], sizes = [32, 32], strides = [1, 1]} : vector<32x128xf32> to vector<32x32xf32>
    %27 = math.tanh %26 : vector<32x32xf32>
    %28 = vector.extract_strided_slice %25 {offsets = [0, 32], sizes = [32, 32], strides = [1, 1]} : vector<32x96xf32> to vector<32x32xf32>
    %29 = arith.mulf %28, %13 : vector<32x32xf32>
    %30 = vector.extract_strided_slice %25 {offsets = [0, 0], sizes = [32, 32], strides = [1, 1]} : vector<32x96xf32> to vector<32x32xf32>
    %31 = arith.mulf %30, %27 : vector<32x32xf32>
    %32 = arith.addf %29, %31 : vector<32x32xf32>
    %33 = vector.extract_strided_slice %25 {offsets = [0, 64], sizes = [32, 32], strides = [1, 1]} : vector<32x96xf32> to vector<32x32xf32>
    %34 = math.tanh %32 : vector<32x32xf32>
    %35 = arith.mulf %33, %34 : vector<32x32xf32>
    %36 = arith.truncf %35 : vector<32x32xf32> to vector<32x32xbf16>
    %37 = arith.index_cast %c0_i32 : i32 to index
    %c0_17 = arith.constant 0 : index
    %c0_18 = arith.constant 0 : index
    %38 = vector.load %arg11[%37, %c0_17, %c0_18] : memref<8x32x32xbf16, #tpu.memory_space<vmem>>, vector<1x32x32xbf16>
    %39 = vector.shape_cast %38 : vector<1x32x32xbf16> to vector<32x32xbf16>
    %40 = vector.shape_cast %36 : vector<32x32xbf16> to vector<1x32x32xbf16>
    tpu.vector_store %arg11[%37, %c0_17, %c0_18], %40 {strides = array<i32>} : memref<8x32x32xbf16, #tpu.memory_space<vmem>>, vector<1x32x32xbf16>,
    %c1_i32 = arith.constant 1 : i32
    %41 = arith.index_cast %c1_i32 : i32 to index
    %c0_19 = arith.constant 0 : index
    %c0_20 = arith.constant 0 : index
    %42 = vector.load %arg10[%41, %c0_19, %c0_20] : memref<8x32x128xbf16, #tpu.memory_space<vmem>>, vector<1x32x128xbf16>
    %43 = vector.shape_cast %42 : vector<1x32x128xbf16> to vector<32x128xbf16>
    %44 = arith.extf %43 : vector<32x128xbf16> to vector<32x128xf32>
    %cst_21 = arith.constant dense<0.000000e+00> : vector<32x128xf32>
    %45 = tpu.matmul %36, %11, %cst_21 {dimension_numbers = #tpu.dot_dimension_numbers<[1], [0], [0], [1], [0, 0, 1, 1], [], []>} : vector<32x32xbf16>, vector<32x128xbf16>, vector<32x128xf32> -> vector<32x128xf32>
    %46 = arith.addf %44, %45 : vector<32x128xf32>
    %47 = vector.extract_strided_slice %46 {offsets = [0, 0], sizes = [32, 96], strides = [1, 1]} : vector<32x128xf32> to vector<32x96xf32>
    %48 = arith.negf %47 : vector<32x96xf32>
    %49 = math.exp %48 : vector<32x96xf32>
    %cst_22 = arith.constant 1.000000e+00 : f32
    %50 = vector.broadcast %cst_22 : f32 to vector<32x96xf32>
    %51 = arith.addf %50, %49 : vector<32x96xf32>
    %52 = arith.divf %50, %51 : vector<32x96xf32>
    %53 = vector.extract_strided_slice %46 {offsets = [0, 96], sizes = [32, 32], strides = [1, 1]} : vector<32x128xf32> to vector<32x32xf32>
    %54 = math.tanh %53 : vector<32x32xf32>
    %55 = vector.extract_strided_slice %52 {offsets = [0, 32], sizes = [32, 32], strides = [1, 1]} : vector<32x96xf32> to vector<32x32xf32>
    %56 = arith.mulf %55, %32 : vector<32x32xf32>
    %57 = vector.extract_strided_slice %52 {offsets = [0, 0], sizes = [32, 32], strides = [1, 1]} : vector<32x96xf32> to vector<32x32xf32>
    %58 = arith.mulf %57, %54 : vector<32x32xf32>
    %59 = arith.addf %56, %58 : vector<32x32xf32>
    %60 = vector.extract_strided_slice %52 {offsets = [0, 64], sizes = [32, 32], strides = [1, 1]} : vector<32x96xf32> to vector<32x32xf32>
    %61 = math.tanh %59 : vector<32x32xf32>
    %62 = arith.mulf %60, %61 : vector<32x32xf32>
    %63 = arith.truncf %62 : vector<32x32xf32> to vector<32x32xbf16>
    %64 = arith.index_cast %c1_i32 : i32 to index
    %c0_23 = arith.constant 0 : index
    %c0_24 = arith.constant 0 : index
    %65 = vector.load %arg11[%64, %c0_23, %c0_24] : memref<8x32x32xbf16, #tpu.memory_space<vmem>>, vector<1x32x32xbf16>
    %66 = vector.shape_cast %65 : vector<1x32x32xbf16> to vector<32x32xbf16>
    %67 = vector.shape_cast %63 : vector<32x32xbf16> to vector<1x32x32xbf16>
    tpu.vector_store %arg11[%64, %c0_23, %c0_24], %67 {strides = array<i32>} : memref<8x32x32xbf16, #tpu.memory_space<vmem>>, vector<1x32x32xbf16>,
    %c2_i32 = arith.constant 2 : i32
    %68 = arith.index_cast %c2_i32 : i32 to index
    %c0_25 = arith.constant 0 : index
    %c0_26 = arith.constant 0 : index
    %69 = vector.load %arg10[%68, %c0_25, %c0_26] : memref<8x32x128xbf16, #tpu.memory_space<vmem>>, vector<1x32x128xbf16>
    %70 = vector.shape_cast %69 : vector<1x32x128xbf16> to vector<32x128xbf16>
    %71 = arith.extf %70 : vector<32x128xbf16> to vector<32x128xf32>
    %cst_27 = arith.constant dense<0.000000e+00> : vector<32x128xf32>
    %72 = tpu.matmul %63, %11, %cst_27 {dimension_numbers = #tpu.dot_dimension_numbers<[1], [0], [0], [1], [0, 0, 1, 1], [], []>} : vector<32x32xbf16>, vector<32x128xbf16>, vector<32x128xf32> -> vector<32x128xf32>
    %73 = arith.addf %71, %72 : vector<32x128xf32>
    %74 = vector.extract_strided_slice %73 {offsets = [0, 0], sizes = [32, 96], strides = [1, 1]} : vector<32x128xf32> to vector<32x96xf32>
    %75 = arith.negf %74 : vector<32x96xf32>
    %76 = math.exp %75 : vector<32x96xf32>
    %cst_28 = arith.constant 1.000000e+00 : f32
    %77 = vector.broadcast %cst_28 : f32 to vector<32x96xf32>
    %78 = arith.addf %77, %76 : vector<32x96xf32>
    %79 = arith.divf %77, %78 : vector<32x96xf32>
    %80 = vector.extract_strided_slice %73 {offsets = [0, 96], sizes = [32, 32], strides = [1, 1]} : vector<32x128xf32> to vector<32x32xf32>
    %81 = math.tanh %80 : vector<32x32xf32>
    %82 = vector.extract_strided_slice %79 {offsets = [0, 32], sizes = [32, 32], strides = [1, 1]} : vector<32x96xf32> to vector<32x32xf32>
    %83 = arith.mulf %82, %59 : vector<32x32xf32>
    %84 = vector.extract_strided_slice %79 {offsets = [0, 0], sizes = [32, 32], strides = [1, 1]} : vector<32x96xf32> to vector<32x32xf32>
    %85 = arith.mulf %84, %81 : vector<32x32xf32>
    %86 = arith.addf %83, %85 : vector<32x32xf32>
    %87 = vector.extract_strided_slice %79 {offsets = [0, 64], sizes = [32, 32], strides = [1, 1]} : vector<32x96xf32> to vector<32x32xf32>
    %88 = math.tanh %86 : vector<32x32xf32>
    %89 = arith.mulf %87, %88 : vector<32x32xf32>
    %90 = arith.truncf %89 : vector<32x32xf32> to vector<32x32xbf16>
    %91 = arith.index_cast %c2_i32 : i32 to index
    %c0_29 = arith.constant 0 : index
    %c0_30 = arith.constant 0 : index
    %92 = vector.load %arg11[%91, %c0_29, %c0_30] : memref<8x32x32xbf16, #tpu.memory_space<vmem>>, vector<1x32x32xbf16>
    %93 = vector.shape_cast %92 : vector<1x32x32xbf16> to vector<32x32xbf16>
    %94 = vector.shape_cast %90 : vector<32x32xbf16> to vector<1x32x32xbf16>
    tpu.vector_store %arg11[%91, %c0_29, %c0_30], %94 {strides = array<i32>} : memref<8x32x32xbf16, #tpu.memory_space<vmem>>, vector<1x32x32xbf16>,
    %c3_i32 = arith.constant 3 : i32
    %95 = arith.index_cast %c3_i32 : i32 to index
    %c0_31 = arith.constant 0 : index
    %c0_32 = arith.constant 0 : index
    %96 = vector.load %arg10[%95, %c0_31, %c0_32] : memref<8x32x128xbf16, #tpu.memory_space<vmem>>, vector<1x32x128xbf16>
    %97 = vector.shape_cast %96 : vector<1x32x128xbf16> to vector<32x128xbf16>
    %98 = arith.extf %97 : vector<32x128xbf16> to vector<32x128xf32>
    %cst_33 = arith.constant dense<0.000000e+00> : vector<32x128xf32>
    %99 = tpu.matmul %90, %11, %cst_33 {dimension_numbers = #tpu.dot_dimension_numbers<[1], [0], [0], [1], [0, 0, 1, 1], [], []>} : vector<32x32xbf16>, vector<32x128xbf16>, vector<32x128xf32> -> vector<32x128xf32>
    %100 = arith.addf %98, %99 : vector<32x128xf32>
    %101 = vector.extract_strided_slice %100 {offsets = [0, 0], sizes = [32, 96], strides = [1, 1]} : vector<32x128xf32> to vector<32x96xf32>
    %102 = arith.negf %101 : vector<32x96xf32>
    %103 = math.exp %102 : vector<32x96xf32>
    %cst_34 = arith.constant 1.000000e+00 : f32
    %104 = vector.broadcast %cst_34 : f32 to vector<32x96xf32>
    %105 = arith.addf %104, %103 : vector<32x96xf32>
    %106 = arith.divf %104, %105 : vector<32x96xf32>
    %107 = vector.extract_strided_slice %100 {offsets = [0, 96], sizes = [32, 32], strides = [1, 1]} : vector<32x128xf32> to vector<32x32xf32>
    %108 = math.tanh %107 : vector<32x32xf32>
    %109 = vector.extract_strided_slice %106 {offsets = [0, 32], sizes = [32, 32], strides = [1, 1]} : vector<32x96xf32> to vector<32x32xf32>
    %110 = arith.mulf %109, %86 : vector<32x32xf32>
    %111 = vector.extract_strided_slice %106 {offsets = [0, 0], sizes = [32, 32], strides = [1, 1]} : vector<32x96xf32> to vector<32x32xf32>
    %112 = arith.mulf %111, %108 : vector<32x32xf32>
    %113 = arith.addf %110, %112 : vector<32x32xf32>
    %114 = vector.extract_strided_slice %106 {offsets = [0, 64], sizes = [32, 32], strides = [1, 1]} : vector<32x96xf32> to vector<32x32xf32>
    %115 = math.tanh %113 : vector<32x32xf32>
    %116 = arith.mulf %114, %115 : vector<32x32xf32>
    %117 = arith.truncf %116 : vector<32x32xf32> to vector<32x32xbf16>
    %118 = arith.index_cast %c3_i32 : i32 to index
    %c0_35 = arith.constant 0 : index
    %c0_36 = arith.constant 0 : index
    %119 = vector.load %arg11[%118, %c0_35, %c0_36] : memref<8x32x32xbf16, #tpu.memory_space<vmem>>, vector<1x32x32xbf16>
    %120 = vector.shape_cast %119 : vector<1x32x32xbf16> to vector<32x32xbf16>
    %121 = vector.shape_cast %117 : vector<32x32xbf16> to vector<1x32x32xbf16>
    tpu.vector_store %arg11[%118, %c0_35, %c0_36], %121 {strides = array<i32>} : memref<8x32x32xbf16, #tpu.memory_space<vmem>>, vector<1x32x32xbf16>,
    %c4_i32 = arith.constant 4 : i32
    %122 = arith.index_cast %c4_i32 : i32 to index
    %c0_37 = arith.constant 0 : index
    %c0_38 = arith.constant 0 : index
    %123 = vector.load %arg10[%122, %c0_37, %c0_38] : memref<8x32x128xbf16, #tpu.memory_space<vmem>>, vector<1x32x128xbf16>
    %124 = vector.shape_cast %123 : vector<1x32x128xbf16> to vector<32x128xbf16>
    %125 = arith.extf %124 : vector<32x128xbf16> to vector<32x128xf32>
    %cst_39 = arith.constant dense<0.000000e+00> : vector<32x128xf32>
    %126 = tpu.matmul %117, %11, %cst_39 {dimension_numbers = #tpu.dot_dimension_numbers<[1], [0], [0], [1], [0, 0, 1, 1], [], []>} : vector<32x32xbf16>, vector<32x128xbf16>, vector<32x128xf32> -> vector<32x128xf32>
    %127 = arith.addf %125, %126 : vector<32x128xf32>
    %128 = vector.extract_strided_slice %127 {offsets = [0, 0], sizes = [32, 96], strides = [1, 1]} : vector<32x128xf32> to vector<32x96xf32>
    %129 = arith.negf %128 : vector<32x96xf32>
    %130 = math.exp %129 : vector<32x96xf32>
    %cst_40 = arith.constant 1.000000e+00 : f32
    %131 = vector.broadcast %cst_40 : f32 to vector<32x96xf32>
    %132 = arith.addf %131, %130 : vector<32x96xf32>
    %133 = arith.divf %131, %132 : vector<32x96xf32>
    %134 = vector.extract_strided_slice %127 {offsets = [0, 96], sizes = [32, 32], strides = [1, 1]} : vector<32x128xf32> to vector<32x32xf32>
    %135 = math.tanh %134 : vector<32x32xf32>
    %136 = vector.extract_strided_slice %133 {offsets = [0, 32], sizes = [32, 32], strides = [1, 1]} : vector<32x96xf32> to vector<32x32xf32>
    %137 = arith.mulf %136, %113 : vector<32x32xf32>
    %138 = vector.extract_strided_slice %133 {offsets = [0, 0], sizes = [32, 32], strides = [1, 1]} : vector<32x96xf32> to vector<32x32xf32>
    %139 = arith.mulf %138, %135 : vector<32x32xf32>
    %140 = arith.addf %137, %139 : vector<32x32xf32>
    %141 = vector.extract_strided_slice %133 {offsets = [0, 64], sizes = [32, 32], strides = [1, 1]} : vector<32x96xf32> to vector<32x32xf32>
    %142 = math.tanh %140 : vector<32x32xf32>
    %143 = arith.mulf %141, %142 : vector<32x32xf32>
    %144 = arith.truncf %143 : vector<32x32xf32> to vector<32x32xbf16>
    %145 = arith.index_cast %c4_i32 : i32 to index
    %c0_41 = arith.constant 0 : index
    %c0_42 = arith.constant 0 : index
    %146 = vector.load %arg11[%145, %c0_41, %c0_42] : memref<8x32x32xbf16, #tpu.memory_space<vmem>>, vector<1x32x32xbf16>
    %147 = vector.shape_cast %146 : vector<1x32x32xbf16> to vector<32x32xbf16>
    %148 = vector.shape_cast %144 : vector<32x32xbf16> to vector<1x32x32xbf16>
    tpu.vector_store %arg11[%145, %c0_41, %c0_42], %148 {strides = array<i32>} : memref<8x32x32xbf16, #tpu.memory_space<vmem>>, vector<1x32x32xbf16>,
    %c5_i32 = arith.constant 5 : i32
    %149 = arith.index_cast %c5_i32 : i32 to index
    %c0_43 = arith.constant 0 : index
    %c0_44 = arith.constant 0 : index
    %150 = vector.load %arg10[%149, %c0_43, %c0_44] : memref<8x32x128xbf16, #tpu.memory_space<vmem>>, vector<1x32x128xbf16>
    %151 = vector.shape_cast %150 : vector<1x32x128xbf16> to vector<32x128xbf16>
    %152 = arith.extf %151 : vector<32x128xbf16> to vector<32x128xf32>
    %cst_45 = arith.constant dense<0.000000e+00> : vector<32x128xf32>
    %153 = tpu.matmul %144, %11, %cst_45 {dimension_numbers = #tpu.dot_dimension_numbers<[1], [0], [0], [1], [0, 0, 1, 1], [], []>} : vector<32x32xbf16>, vector<32x128xbf16>, vector<32x128xf32> -> vector<32x128xf32>
    %154 = arith.addf %152, %153 : vector<32x128xf32>
    %155 = vector.extract_strided_slice %154 {offsets = [0, 0], sizes = [32, 96], strides = [1, 1]} : vector<32x128xf32> to vector<32x96xf32>
    %156 = arith.negf %155 : vector<32x96xf32>
    %157 = math.exp %156 : vector<32x96xf32>
    %cst_46 = arith.constant 1.000000e+00 : f32
    %158 = vector.broadcast %cst_46 : f32 to vector<32x96xf32>
    %159 = arith.addf %158, %157 : vector<32x96xf32>
    %160 = arith.divf %158, %159 : vector<32x96xf32>
    %161 = vector.extract_strided_slice %154 {offsets = [0, 96], sizes = [32, 32], strides = [1, 1]} : vector<32x128xf32> to vector<32x32xf32>
    %162 = math.tanh %161 : vector<32x32xf32>
    %163 = vector.extract_strided_slice %160 {offsets = [0, 32], sizes = [32, 32], strides = [1, 1]} : vector<32x96xf32> to vector<32x32xf32>
    %164 = arith.mulf %163, %140 : vector<32x32xf32>
    %165 = vector.extract_strided_slice %160 {offsets = [0, 0], sizes = [32, 32], strides = [1, 1]} : vector<32x96xf32> to vector<32x32xf32>
    %166 = arith.mulf %165, %162 : vector<32x32xf32>
    %167 = arith.addf %164, %166 : vector<32x32xf32>
    %168 = vector.extract_strided_slice %160 {offsets = [0, 64], sizes = [32, 32], strides = [1, 1]} : vector<32x96xf32> to vector<32x32xf32>
    %169 = math.tanh %167 : vector<32x32xf32>
    %170 = arith.mulf %168, %169 : vector<32x32xf32>
    %171 = arith.truncf %170 : vector<32x32xf32> to vector<32x32xbf16>
    %172 = arith.index_cast %c5_i32 : i32 to index
    %c0_47 = arith.constant 0 : index
    %c0_48 = arith.constant 0 : index
    %173 = vector.load %arg11[%172, %c0_47, %c0_48] : memref<8x32x32xbf16, #tpu.memory_space<vmem>>, vector<1x32x32xbf16>
    %174 = vector.shape_cast %173 : vector<1x32x32xbf16> to vector<32x32xbf16>
    %175 = vector.shape_cast %171 : vector<32x32xbf16> to vector<1x32x32xbf16>
    tpu.vector_store %arg11[%172, %c0_47, %c0_48], %175 {strides = array<i32>} : memref<8x32x32xbf16, #tpu.memory_space<vmem>>, vector<1x32x32xbf16>,
    %c6_i32 = arith.constant 6 : i32
    %176 = arith.index_cast %c6_i32 : i32 to index
    %c0_49 = arith.constant 0 : index
    %c0_50 = arith.constant 0 : index
    %177 = vector.load %arg10[%176, %c0_49, %c0_50] : memref<8x32x128xbf16, #tpu.memory_space<vmem>>, vector<1x32x128xbf16>
    %178 = vector.shape_cast %177 : vector<1x32x128xbf16> to vector<32x128xbf16>
    %179 = arith.extf %178 : vector<32x128xbf16> to vector<32x128xf32>
    %cst_51 = arith.constant dense<0.000000e+00> : vector<32x128xf32>
    %180 = tpu.matmul %171, %11, %cst_51 {dimension_numbers = #tpu.dot_dimension_numbers<[1], [0], [0], [1], [0, 0, 1, 1], [], []>} : vector<32x32xbf16>, vector<32x128xbf16>, vector<32x128xf32> -> vector<32x128xf32>
    %181 = arith.addf %179, %180 : vector<32x128xf32>
    %182 = vector.extract_strided_slice %181 {offsets = [0, 0], sizes = [32, 96], strides = [1, 1]} : vector<32x128xf32> to vector<32x96xf32>
    %183 = arith.negf %182 : vector<32x96xf32>
    %184 = math.exp %183 : vector<32x96xf32>
    %cst_52 = arith.constant 1.000000e+00 : f32
    %185 = vector.broadcast %cst_52 : f32 to vector<32x96xf32>
    %186 = arith.addf %185, %184 : vector<32x96xf32>
    %187 = arith.divf %185, %186 : vector<32x96xf32>
    %188 = vector.extract_strided_slice %181 {offsets = [0, 96], sizes = [32, 32], strides = [1, 1]} : vector<32x128xf32> to vector<32x32xf32>
    %189 = math.tanh %188 : vector<32x32xf32>
    %190 = vector.extract_strided_slice %187 {offsets = [0, 32], sizes = [32, 32], strides = [1, 1]} : vector<32x96xf32> to vector<32x32xf32>
    %191 = arith.mulf %190, %167 : vector<32x32xf32>
    %192 = vector.extract_strided_slice %187 {offsets = [0, 0], sizes = [32, 32], strides = [1, 1]} : vector<32x96xf32> to vector<32x32xf32>
    %193 = arith.mulf %192, %189 : vector<32x32xf32>
    %194 = arith.addf %191, %193 : vector<32x32xf32>
    %195 = vector.extract_strided_slice %187 {offsets = [0, 64], sizes = [32, 32], strides = [1, 1]} : vector<32x96xf32> to vector<32x32xf32>
    %196 = math.tanh %194 : vector<32x32xf32>
    %197 = arith.mulf %195, %196 : vector<32x32xf32>
    %198 = arith.truncf %197 : vector<32x32xf32> to vector<32x32xbf16>
    %199 = arith.index_cast %c6_i32 : i32 to index
    %c0_53 = arith.constant 0 : index
    %c0_54 = arith.constant 0 : index
    %200 = vector.load %arg11[%199, %c0_53, %c0_54] : memref<8x32x32xbf16, #tpu.memory_space<vmem>>, vector<1x32x32xbf16>
    %201 = vector.shape_cast %200 : vector<1x32x32xbf16> to vector<32x32xbf16>
    %202 = vector.shape_cast %198 : vector<32x32xbf16> to vector<1x32x32xbf16>
    tpu.vector_store %arg11[%199, %c0_53, %c0_54], %202 {strides = array<i32>} : memref<8x32x32xbf16, #tpu.memory_space<vmem>>, vector<1x32x32xbf16>,
    %c7_i32 = arith.constant 7 : i32
    %203 = arith.index_cast %c7_i32 : i32 to index
    %c0_55 = arith.constant 0 : index
    %c0_56 = arith.constant 0 : index
    %204 = vector.load %arg10[%203, %c0_55, %c0_56] : memref<8x32x128xbf16, #tpu.memory_space<vmem>>, vector<1x32x128xbf16>
    %205 = vector.shape_cast %204 : vector<1x32x128xbf16> to vector<32x128xbf16>
    %206 = arith.extf %205 : vector<32x128xbf16> to vector<32x128xf32>
    %cst_57 = arith.constant dense<0.000000e+00> : vector<32x128xf32>
    %207 = tpu.matmul %198, %11, %cst_57 {dimension_numbers = #tpu.dot_dimension_numbers<[1], [0], [0], [1], [0, 0, 1, 1], [], []>} : vector<32x32xbf16>, vector<32x128xbf16>, vector<32x128xf32> -> vector<32x128xf32>
    %208 = arith.addf %206, %207 : vector<32x128xf32>
    %209 = vector.extract_strided_slice %208 {offsets = [0, 0], sizes = [32, 96], strides = [1, 1]} : vector<32x128xf32> to vector<32x96xf32>
    %210 = arith.negf %209 : vector<32x96xf32>
    %211 = math.exp %210 : vector<32x96xf32>
    %cst_58 = arith.constant 1.000000e+00 : f32
    %212 = vector.broadcast %cst_58 : f32 to vector<32x96xf32>
    %213 = arith.addf %212, %211 : vector<32x96xf32>
    %214 = arith.divf %212, %213 : vector<32x96xf32>
    %215 = vector.extract_strided_slice %208 {offsets = [0, 96], sizes = [32, 32], strides = [1, 1]} : vector<32x128xf32> to vector<32x32xf32>
    %216 = math.tanh %215 : vector<32x32xf32>
    %217 = vector.extract_strided_slice %214 {offsets = [0, 32], sizes = [32, 32], strides = [1, 1]} : vector<32x96xf32> to vector<32x32xf32>
    %218 = arith.mulf %217, %194 : vector<32x32xf32>
    %219 = vector.extract_strided_slice %214 {offsets = [0, 0], sizes = [32, 32], strides = [1, 1]} : vector<32x96xf32> to vector<32x32xf32>
    %220 = arith.mulf %219, %216 : vector<32x32xf32>
    %221 = arith.addf %218, %220 : vector<32x32xf32>
    %222 = vector.extract_strided_slice %214 {offsets = [0, 64], sizes = [32, 32], strides = [1, 1]} : vector<32x96xf32> to vector<32x32xf32>
    %223 = math.tanh %221 : vector<32x32xf32>
    %224 = arith.mulf %222, %223 : vector<32x32xf32>
    %225 = arith.truncf %224 : vector<32x32xf32> to vector<32x32xbf16>
    %226 = arith.index_cast %c7_i32 : i32 to index
    %c0_59 = arith.constant 0 : index
    %c0_60 = arith.constant 0 : index
    %227 = vector.load %arg11[%226, %c0_59, %c0_60] : memref<8x32x32xbf16, #tpu.memory_space<vmem>>, vector<1x32x32xbf16>
    %228 = vector.shape_cast %227 : vector<1x32x32xbf16> to vector<32x32xbf16>
    %229 = vector.shape_cast %225 : vector<32x32xbf16> to vector<1x32x32xbf16>
    tpu.vector_store %arg11[%226, %c0_59, %c0_60], %229 {strides = array<i32>} : memref<8x32x32xbf16, #tpu.memory_space<vmem>>, vector<1x32x32xbf16>,
    %c8_i32 = arith.constant 8 : i32
    %c0_61 = arith.constant 0 : index
    %c0_62 = arith.constant 0 : index
    %c0_63 = arith.constant 0 : index
    %230 = vector.load %arg11[%c0_61, %c0_62, %c0_63] : memref<8x32x32xbf16, #tpu.memory_space<vmem>>, vector<8x32x32xbf16>
    %231 = vector.shape_cast %230 : vector<8x32x32xbf16> to vector<256x32xbf16>
    %c0_64 = arith.constant 0 : index
    %c0_65 = arith.constant 0 : index
    %232 = vector.load %arg5[%c0_64, %c0_65] : memref<32x32xbf16, #tpu.memory_space<vmem>>, vector<32x32xbf16>
    %cst_66 = arith.constant dense<0.000000e+00> : vector<256x32xf32>
    %233 = tpu.matmul %231, %232, %cst_66 {dimension_numbers = #tpu.dot_dimension_numbers<[1], [0], [0], [1], [0, 0, 1, 1], [], []>} : vector<256x32xbf16>, vector<32x32xbf16>, vector<256x32xf32> -> vector<256x32xf32>
    %c0_67 = arith.constant 0 : index
    %c0_68 = arith.constant 0 : index
    %234 = vector.load %arg6[%c0_67, %c0_68] : memref<1x32xf32, #tpu.memory_space<vmem>>, vector<1x32xf32>
    %235 = vector.broadcast %234 : vector<1x32xf32> to vector<256x32xf32>
    %236 = arith.addf %233, %235 : vector<256x32xf32>
    %cst_69 = arith.constant dense<0.000000e+00> : vector<256xf32>
    %237 = vector.multi_reduction <add>, %236, %cst_69 [1] : vector<256x32xf32> to vector<256xf32>
    %238 = vector.shape_cast %237 : vector<256xf32> to vector<256x1xf32>
    %cst_70 = arith.constant 3.200000e+01 : f32
    %239 = vector.broadcast %cst_70 : f32 to vector<256x1xf32>
    %240 = arith.divf %238, %239 : vector<256x1xf32>
    %241 = arith.mulf %236, %236 : vector<256x32xf32>
    %cst_71 = arith.constant dense<0.000000e+00> : vector<256xf32>
    %242 = vector.multi_reduction <add>, %241, %cst_71 [1] : vector<256x32xf32> to vector<256xf32>
    %243 = vector.shape_cast %242 : vector<256xf32> to vector<256x1xf32>
    %cst_72 = arith.constant 3.200000e+01 : f32
    %244 = vector.broadcast %cst_72 : f32 to vector<256x1xf32>
    %245 = arith.divf %243, %244 : vector<256x1xf32>
    %246 = arith.mulf %240, %240 : vector<256x1xf32>
    %247 = arith.subf %245, %246 : vector<256x1xf32>
    %248 = vector.broadcast %240 : vector<256x1xf32> to vector<256x32xf32>
    %249 = arith.subf %236, %248 : vector<256x32xf32>
    %cst_73 = arith.constant 9.99999974E-6 : f32
    %250 = vector.broadcast %cst_73 : f32 to vector<256x1xf32>
    %251 = arith.addf %247, %250 : vector<256x1xf32>
    %252 = math.rsqrt %251 : vector<256x1xf32>
    %253 = vector.broadcast %252 : vector<256x1xf32> to vector<256x32xf32>
    %254 = arith.mulf %249, %253 : vector<256x32xf32>
    %c0_74 = arith.constant 0 : index
    %c0_75 = arith.constant 0 : index
    %255 = vector.load %arg7[%c0_74, %c0_75] : memref<1x32xf32, #tpu.memory_space<vmem>>, vector<1x32xf32>
    %256 = vector.broadcast %255 : vector<1x32xf32> to vector<256x32xf32>
    %257 = arith.mulf %254, %256 : vector<256x32xf32>
    %c0_76 = arith.constant 0 : index
    %c0_77 = arith.constant 0 : index
    %258 = vector.load %arg8[%c0_76, %c0_77] : memref<1x32xf32, #tpu.memory_space<vmem>>, vector<1x32xf32>
    %259 = vector.broadcast %258 : vector<1x32xf32> to vector<256x32xf32>
    %260 = arith.addf %257, %259 : vector<256x32xf32>
    %c0_78 = arith.constant 0 : index
    %c0_79 = arith.constant 0 : index
    %c0_80 = arith.constant 0 : index
    %261 = vector.load %arg1[%c0_78, %c0_79, %c0_80] : memref<8x32x32xf32, #tpu.memory_space<vmem>>, vector<8x32x32xf32>
    %262 = vector.shape_cast %261 : vector<8x32x32xf32> to vector<256x32xf32>
    %263 = arith.addf %262, %260 : vector<256x32xf32>
    %cst_81 = arith.constant 0.707106769 : f32
    %264 = vector.broadcast %cst_81 : f32 to vector<256x32xf32>
    %265 = arith.mulf %263, %264 : vector<256x32xf32>
    %266 = vector.shape_cast %265 : vector<256x32xf32> to vector<8x32x32xf32>
    %c0_82 = arith.constant 0 : index
    %c0_83 = arith.constant 0 : index
    %c0_84 = arith.constant 0 : index
    %267 = vector.load %arg9[%c0_82, %c0_83, %c0_84] : memref<8x32x32xf32, #tpu.memory_space<vmem>>, vector<8x32x32xf32>
    tpu.vector_store %arg9[%c0_82, %c0_83, %c0_84], %266 {strides = array<i32>} : memref<8x32x32xf32, #tpu.memory_space<vmem>>, vector<8x32x32xf32>,
    return
  }
  func.func @transform_0(%arg0: i32) -> (i32, i32, i32) {
    %c0_i32 = arith.constant 0 : i32
    %c0_i32_0 = arith.constant 0 : i32
    %c0_i32_1 = arith.constant 0 : i32
    return %c0_i32, %arg0, %c0_i32_0 : i32, i32, i32
  }
  func.func @transform_1(%arg0: i32) -> (i32, i32) {
    %c0_i32 = arith.constant 0 : i32
    %c0_i32_0 = arith.constant 0 : i32
    %c0_i32_1 = arith.constant 0 : i32
    return %c0_i32, %c0_i32_0 : i32, i32
  }
  func.func @transform_2(%arg0: i32) -> (i32, i32) {
    %c0_i32 = arith.constant 0 : i32
    %c0_i32_0 = arith.constant 0 : i32
    %c0_i32_1 = arith.constant 0 : i32
    return %c0_i32, %c0_i32_0 : i32, i32
  }
  func.func @transform_3(%arg0: i32) -> (i32, i32) {
    %c0_i32 = arith.constant 0 : i32
    %c0_i32_0 = arith.constant 0 : i32
    %c0_i32_1 = arith.constant 0 : i32
    return %c0_i32, %c0_i32_0 : i32, i32
  }
  func.func @transform_4(%arg0: i32) -> (i32, i32) {
    %c0_i32 = arith.constant 0 : i32
    %c0_i32_0 = arith.constant 0 : i32
    %c0_i32_1 = arith.constant 0 : i32
    return %c0_i32, %c0_i32_0 : i32, i32
  }
  func.func @transform_5(%arg0: i32) -> (i32, i32) {
    %c0_i32 = arith.constant 0 : i32
    %c0_i32_0 = arith.constant 0 : i32
    %c0_i32_1 = arith.constant 0 : i32
    return %c0_i32, %c0_i32_0 : i32, i32
  }
  func.func @transform_6(%arg0: i32) -> (i32, i32) {
    %c0_i32 = arith.constant 0 : i32
    %c0_i32_0 = arith.constant 0 : i32
    %c0_i32_1 = arith.constant 0 : i32
    return %c0_i32, %c0_i32_0 : i32, i32
  }
  func.func @transform_7(%arg0: i32) -> (i32, i32) {
    %c0_i32 = arith.constant 0 : i32
    %c0_i32_0 = arith.constant 0 : i32
    %c0_i32_1 = arith.constant 0 : i32
    return %c0_i32, %c0_i32_0 : i32, i32
  }
  func.func @transform_8(%arg0: i32) -> (i32, i32, i32) {
    %c0_i32 = arith.constant 0 : i32
    %c0_i32_0 = arith.constant 0 : i32
    %c0_i32_1 = arith.constant 0 : i32
    return %c0_i32, %arg0, %c0_i32_0 : i32, i32, i32
  }
}

</mosaic_0001>

<llo_original>
// kernel: tpu_custom_call.1
$region0: #{tpu_custom_call.1}
  #allocation0 [shape = 'u32[]', space=smem, size = 0x4, offset = 0x4, fixed_abs, tag = 'smem constant byte address 0x4 - core index']
  #allocation1 [shape = 'u32[144,128]{1,0:T(1,128)}', space=vmem, size = 0x12000, scoped, tag = 'internal scratch']
  #allocation2 [shape = 'bf16[8,32,128]{2,1,0:T(8,128)(2,1)}', space=vmem, size = 0x10000, scoped, tag = 'scratch operand']
  #allocation3 [shape = 'bf16[8,32,32]{2,1,0:T(8,128)(2,1)}', space=vmem, size = 0x10000, scoped, tag = 'scratch operand']
  %s0 = inlined_call_operand.hbm [shape: f32[8,32,32], index: 0, kind: input, shape index: {}]
  %s1 = inlined_call_operand.hbm [shape: bf16[32,128], index: 1, kind: input, shape index: {}]
  %s2 = inlined_call_operand.hbm [shape: bf16[32,128], index: 2, kind: input, shape index: {}]
  %s3 = inlined_call_operand.vmem [shape: f32[1,128], index: 3, kind: input, shape index: {}]
  %s4 = inlined_call_operand.hbm [shape: bf16[32,32], index: 4, kind: input, shape index: {}]
  %s5 = inlined_call_operand.vmem [shape: f32[1,32], index: 5, kind: input, shape index: {}]
  %s6 = inlined_call_operand.vmem [shape: f32[1,32], index: 6, kind: input, shape index: {}]
  %s7 = inlined_call_operand.vmem [shape: f32[1,32], index: 7, kind: input, shape index: {}]
  %s8 = inlined_call_operand.hbm [shape: f32[8,32,32], index: 8, kind: output, shape index: {}]
  %s9 = sld [smem:[#allocation0]]
  $region58: #{tpu_custom_call.1} parent=0
    _
  %s11 = ssub.s32 1, %s9
  %s12 = scalar_select 0, %s11, %s9
  $region1: #{tpu_custom_call.1} parent=0
    #allocation4 [shape = 'u8[131072]{0}', space=vmem, size = 0x20000, scoped, tag = 'input window, operand 0, single buffered']
    #allocation5 [shape = 's32[1]{0}', space=sflag, size = 0x4, scoped, tag = 'scoped memory for tpu_custom_call.1']
    #allocation6 [shape = 's32[1]{0}', space=sflag, size = 0x4, scoped, tag = 'scoped memory for tpu_custom_call.1']
    #allocation7 [shape = 'u8[8192]{0}', space=vmem, size = 0x2000, scoped, tag = 'input window, operand 1, single buffered']
    #allocation8 [shape = 's32[1]{0}', space=sflag, size = 0x4, scoped, tag = 'scoped memory for tpu_custom_call.1']
    #allocation9 [shape = 'u8[8192]{0}', space=vmem, size = 0x2000, scoped, tag = 'input window, operand 2, single buffered']
    #allocation10 [shape = 'u8[8192]{0}', space=vmem, size = 0x2000, scoped, tag = 'input window, operand 4, single buffered']
    #allocation11 [shape = 's32[1]{0}', space=sflag, size = 0x4, scoped, tag = 'scoped memory for tpu_custom_call.1']
    #allocation12 [shape = 'u8[131072]{0}', space=vmem, size = 0x20000, scoped, tag = 'output window, operand 0, single buffered']
    %13 = vsyncpa [#allocation5], 0
    %14 = vsyncpa [#allocation8], 0
    %15 = vsyncpa [#allocation11], 0
    %16 = vsyncpa [#allocation6], 0
    // Predicated region
    $region2: #{tpu_custom_call.1} parent=1 // pred_check
      _
    $region3: #{tpu_custom_call.1} parent=1 // pred_check_branch
      %18 = sbr.rel (0) target = $region5
    $region4: #{tpu_custom_call.1} parent=1 // pred_region
      %s20 = ssub.s32 4096, 4096
      %21 = vsyncadd [#allocation5], %s20
      %s22 = sshll.u32 [#allocation4], 4
      %s23 = int_to_ptr.vmem [resolvable:$true] %s22
      %28 = dma.hbm_to_vmem [thread:$0]  %s0, 4096, %s23, [#allocation5], 128, 128, 8
    $region5: #{tpu_custom_call.1} parent=1 // pred_fallthru
      _
    // Predicated region
    $region6: #{tpu_custom_call.1} parent=1 // pred_check
      _
    $region7: #{tpu_custom_call.1} parent=1 // pred_check_branch
      %30 = sbr.rel (0) target = $region9
    $region8: #{tpu_custom_call.1} parent=1 // pred_region
      %s32 = ssub.s32 256, 256
      %33 = vsyncadd [#allocation8], %s32
      %s34 = sshll.u32 [#allocation7], 4
      %s35 = int_to_ptr.vmem [resolvable:$true] %s34
      %40 = dma.hbm_to_vmem [thread:$0]  %s1, 256, %s35, [#allocation8], 64, 64, 4
    $region9: #{tpu_custom_call.1} parent=1 // pred_fallthru
      _
    // Predicated region
    $region10: #{tpu_custom_call.1} parent=1 // pred_check
      _
    $region11: #{tpu_custom_call.1} parent=1 // pred_check_branch
      %42 = sbr.rel (0) target = $region13
    $region12: #{tpu_custom_call.1} parent=1 // pred_region
      %s44 = ssub.s32 256, 256
      %45 = vsyncadd [#allocation8], %s44
      %s46 = sshll.u32 [#allocation9], 4
      %s47 = int_to_ptr.vmem [resolvable:$true] %s46
      %52 = dma.hbm_to_vmem [thread:$0]  %s2, 256, %s47, [#allocation8], 64, 64, 4
    $region13: #{tpu_custom_call.1} parent=1 // pred_fallthru
      _
    // Predicated region
    $region14: #{tpu_custom_call.1} parent=1 // pred_check
      _
    $region15: #{tpu_custom_call.1} parent=1 // pred_check_branch
      %54 = sbr.rel (0) target = $region17
    $region16: #{tpu_custom_call.1} parent=1 // pred_region
      _
    $region17: #{tpu_custom_call.1} parent=1 // pred_fallthru
      _
    // Predicated region
    $region18: #{tpu_custom_call.1} parent=1 // pred_check
      _
    $region19: #{tpu_custom_call.1} parent=1 // pred_check_branch
      %56 = sbr.rel (0) target = $region21
    $region20: #{tpu_custom_call.1} parent=1 // pred_region
      %s58 = ssub.s32 256, 256
      %59 = vsyncadd [#allocation11], %s58
      %s60 = sshll.u32 [#allocation10], 4
      %s61 = int_to_ptr.vmem [resolvable:$true] %s60
      %66 = dma.hbm_to_vmem [thread:$0]  %s4, 256, %s61, [#allocation11], 64, 64, 4
    $region21: #{tpu_custom_call.1} parent=1 // pred_fallthru
      _
    // Predicated region
    $region22: #{tpu_custom_call.1} parent=1 // pred_check
      _
    $region23: #{tpu_custom_call.1} parent=1 // pred_check_branch
      %68 = sbr.rel (0) target = $region25
    $region24: #{tpu_custom_call.1} parent=1 // pred_region
      _
    $region25: #{tpu_custom_call.1} parent=1 // pred_fallthru
      _
    // Predicated region
    $region26: #{tpu_custom_call.1} parent=1 // pred_check
      _
    $region27: #{tpu_custom_call.1} parent=1 // pred_check_branch
      %70 = sbr.rel (0) target = $region29
    $region28: #{tpu_custom_call.1} parent=1 // pred_region
      _
    $region29: #{tpu_custom_call.1} parent=1 // pred_fallthru
      _
    // Predicated region
    $region30: #{tpu_custom_call.1} parent=1 // pred_check
      _
    $region31: #{tpu_custom_call.1} parent=1 // pred_check_branch
      %72 = sbr.rel (0) target = $region33
    $region32: #{tpu_custom_call.1} parent=1 // pred_region
      _
    $region33: #{tpu_custom_call.1} parent=1 // pred_fallthru
      _
    // Predicated region
    $region34: #{tpu_custom_call.1} parent=1 // pred_check
      _
    $region35: #{tpu_custom_call.1} parent=1 // pred_check_branch
      %74 = sbr.rel (0) target = $region37
    $region36: #{tpu_custom_call.1} parent=1 // pred_region
      %75 = dma.done [#allocation5], 4096
    $region37: #{tpu_custom_call.1} parent=1 // pred_fallthru
      _
    // Predicated region
    $region38: #{tpu_custom_call.1} parent=1 // pred_check
      _
    $region39: #{tpu_custom_call.1} parent=1 // pred_check_branch
      %77 = sbr.rel (0) target = $region41
    $region40: #{tpu_custom_call.1} parent=1 // pred_region
      %78 = dma.done [#allocation8], 256
    $region41: #{tpu_custom_call.1} parent=1 // pred_fallthru
      _
    // Predicated region
    $region42: #{tpu_custom_call.1} parent=1 // pred_check
      _
    $region43: #{tpu_custom_call.1} parent=1 // pred_check_branch
      %80 = sbr.rel (0) target = $region45
    $region44: #{tpu_custom_call.1} parent=1 // pred_region
      %81 = dma.done [#allocation8], 256
    $region45: #{tpu_custom_call.1} parent=1 // pred_fallthru
      _
    // Predicated region
    $region46: #{tpu_custom_call.1} parent=1 // pred_check
      _
    $region47: #{tpu_custom_call.1} parent=1 // pred_check_branch
      %83 = sbr.rel (0) target = $region49
    $region48: #{tpu_custom_call.1} parent=1 // pred_region
      %84 = dma.done [#allocation11], 256
    $region49: #{tpu_custom_call.1} parent=1 // pred_fallthru
      _
    %v86 = vld [vmem:[#allocation4] sm:$0xff]
    %v87 = vld [vmem:[#allocation4 + $0x8] sm:$0xff]
    %v88 = vld [vmem:[#allocation4 + $0x10] sm:$0xff]
    %v89 = vld [vmem:[#allocation4 + $0x18] sm:$0xff]
    %v90 = vld [vmem:[#allocation4 + $0x20] sm:$0xff]
    %v91 = vld [vmem:[#allocation4 + $0x28] sm:$0xff]
    %v92 = vld [vmem:[#allocation4 + $0x30] sm:$0xff]
    %v93 = vld [vmem:[#allocation4 + $0x38] sm:$0xff]
    %v94 = vld [vmem:[#allocation4 + $0x40] sm:$0xff]
    %v95 = vld [vmem:[#allocation4 + $0x48] sm:$0xff]
    %v96 = vld [vmem:[#allocation4 + $0x50] sm:$0xff]
    %v97 = vld [vmem:[#allocation4 + $0x58] sm:$0xff]
    %v98 = vld [vmem:[#allocation4 + $0x60] sm:$0xff]
    %v99 = vld [vmem:[#allocation4 + $0x68] sm:$0xff]
    %v100 = vld [vmem:[#allocation4 + $0x70] sm:$0xff]
    %v101 = vld [vmem:[#allocation4 + $0x78] sm:$0xff]
    %v102 = vld [vmem:[#allocation4 + $0x80] sm:$0xff]
    %v103 = vld [vmem:[#allocation4 + $0x88] sm:$0xff]
    %v104 = vld [vmem:[#allocation4 + $0x90] sm:$0xff]
    %v105 = vld [vmem:[#allocation4 + $0x98] sm:$0xff]
    %v106 = vld [vmem:[#allocation4 + $0xa0] sm:$0xff]
    %v107 = vld [vmem:[#allocation4 + $0xa8] sm:$0xff]
    %v108 = vld [vmem:[#allocation4 + $0xb0] sm:$0xff]
    %v109 = vld [vmem:[#allocation4 + $0xb8] sm:$0xff]
    %v110 = vld [vmem:[#allocation4 + $0xc0] sm:$0xff]
    %v111 = vld [vmem:[#allocation4 + $0xc8] sm:$0xff]
    %v112 = vld [vmem:[#allocation4 + $0xd0] sm:$0xff]
    %v113 = vld [vmem:[#allocation4 + $0xd8] sm:$0xff]
    %v114 = vld [vmem:[#allocation4 + $0xe0] sm:$0xff]
    %v115 = vld [vmem:[#allocation4 + $0xe8] sm:$0xff]
    %v116 = vld [vmem:[#allocation4 + $0xf0] sm:$0xff]
    %v117 = vld [vmem:[#allocation4 + $0xf8] sm:$0xff]
    %v118 = vpack.c.bf16 %v87, %v86
    %v119 = vpack.c.bf16 %v89, %v88
    %v120 = vpack.c.bf16 %v91, %v90
    %v121 = vpack.c.bf16 %v93, %v92
    %v122 = vpack.c.bf16 %v95, %v94
    %v123 = vpack.c.bf16 %v97, %v96
    %v124 = vpack.c.bf16 %v99, %v98
    %v125 = vpack.c.bf16 %v101, %v100
    %v126 = vpack.c.bf16 %v103, %v102
    %v127 = vpack.c.bf16 %v105, %v104
    %v128 = vpack.c.bf16 %v107, %v106
    %v129 = vpack.c.bf16 %v109, %v108
    %v130 = vpack.c.bf16 %v111, %v110
    %v131 = vpack.c.bf16 %v113, %v112
    %v132 = vpack.c.bf16 %v115, %v114
    %v133 = vpack.c.bf16 %v117, %v116
    %v134 = vld [vmem:[#allocation7] sm:$0xf]
    %v135 = vld [vmem:[#allocation7 + $0x4] sm:$0xf]
    %v136 = vld [vmem:[#allocation7 + $0x8] sm:$0xf]
    %v137 = vld [vmem:[#allocation7 + $0xc] sm:$0xf]
    %v138 = vld [vmem:[%s3] sm:$0x1]
    %v140 = vlaneseq
    %v141 = vshrl.u32 %v140, 7
    %v142 = vsub.s32 0, %v141
    %v143 = vrot.slane %v138, %v142
    %v149 = vunpack.c.l.b16 %v134
    %v150 = vunpack.c.l.b16 %v135
    %v151 = vunpack.c.l.b16 %v136
    %v152 = vunpack.c.l.b16 %v137
    %v153 = vpack.c.b16 %v150, %v149
    %v154 = vpack.c.b16 %v152, %v151
    %vm157 = vcmask 261120
    %v159 = vsel %vm157, %v118, 0
    %v162 = vsel %vm157, %v119, 0
    %v165 = vsel %vm157, %v120, 0
    %v168 = vsel %vm157, %v121, 0
    %v171 = vsel %vm157, %v122, 0
    %v174 = vsel %vm157, %v123, 0
    %v177 = vsel %vm157, %v124, 0
    %v180 = vsel %vm157, %v125, 0
    %v183 = vsel %vm157, %v126, 0
    %v186 = vsel %vm157, %v127, 0
    %v189 = vsel %vm157, %v128, 0
    %v192 = vsel %vm157, %v129, 0
    %v195 = vsel %vm157, %v130, 0
    %v198 = vsel %vm157, %v131, 0
    %v201 = vsel %vm157, %v132, 0
    %v204 = vsel %vm157, %v133, 0
    %206 = vmatprep.subr.bf16.mxu0 0
    %207 = vmatpush1.bf16.msra.mxu0 0
    %208 = vmatprep.subr.bf16.mxu0 0
    %209 = vmatpush1.bf16.msra.mxu0 0
    %210 = vmatprep.subr.bf16.mxu0 0
    %211 = vmatpush1.bf16.msra.mxu0 0
    %212 = vmatprep.subr.bf16.mxu0 0
    %213 = vmatpush1.bf16.msra.mxu0 0
    %214 = vmatprep.subr.bf16.mxu0 0
    %215 = vmatpush1.bf16.msra.mxu0 0
    %216 = vmatprep.subr.bf16.mxu0 0
    %217 = vmatpush1.bf16.msra.mxu0 0
    %218 = vmatprep.subr.bf16.mxu0 0
    %219 = vmatpush1.bf16.msra.mxu0 %v154
    %220 = vmatprep.subr.bf16.mxu0 0
    %221 = vmatpush1.bf16.msra.mxu0 %v153
    %222 = vmatprep.subr.bf16.mxu0 0
    %223 = vmatpush2.bf16.msra.mxu0 0
    %224 = vmatprep.subr.bf16.mxu0 0
    %225 = vmatpush2.bf16.msra.mxu0 0
    %226 = vmatprep.subr.bf16.mxu0 0
    %227 = vmatpush2.bf16.msra.mxu0 0
    %228 = vmatprep.subr.bf16.mxu0 0
    %229 = vmatpush2.bf16.msra.mxu0 0
    %230 = vmatprep.subr.bf16.mxu0 0
    %231 = vmatpush2.bf16.msra.mxu0 0
    %232 = vmatprep.subr.bf16.mxu0 0
    %233 = vmatpush2.bf16.msra.mxu0 0
    %234 = vmatprep.subr.bf16.mxu0 0
    %235 = vmatpush2.bf16.msra.mxu0 0
    %236 = vmatprep.subr.bf16.mxu0 0
    %237 = vmatpush2.bf16.msra.mxu0 0
    %238 = vmatprep.mubr.bf16.mxu0 0
    %239 = vmatmul.mubr.bf16.gmra.mxu0 %v159
    %v240 = vpop.f32.mrf.mxu0
    %v241 = vadd.f32 %v143, %v240
    %v242 = vpop.f32.mrf.mxu0
    %v243 = vpop.f32.mrf.mxu0
    %v244 = vadd.f32 %v143, %v243
    %v245 = vpop.f32.mrf.mxu0
    %246 = vmatprep.mubr.bf16.mxu0 0
    %247 = vmatmul.mubr.bf16.gmra.mxu0 %v162
    %v248 = vpop.f32.mrf.mxu0
    %v249 = vadd.f32 %v143, %v248
    %v250 = vpop.f32.mrf.mxu0
    %v251 = vpop.f32.mrf.mxu0
    %v252 = vadd.f32 %v143, %v251
    %v253 = vpop.f32.mrf.mxu0
    %254 = vmatprep.mubr.bf16.mxu0 0
    %255 = vmatmul.mubr.bf16.gmra.mxu0 %v165
    %v256 = vpop.f32.mrf.mxu0
    %v257 = vadd.f32 %v143, %v256
    %v258 = vpop.f32.mrf.mxu0
    %v259 = vpop.f32.mrf.mxu0
    %v260 = vadd.f32 %v143, %v259
    %v261 = vpop.f32.mrf.mxu0
    %262 = vmatprep.mubr.bf16.mxu0 0
    %263 = vmatmul.mubr.bf16.gmra.mxu0 %v168
    %v264 = vpop.f32.mrf.mxu0
    %v265 = vadd.f32 %v143, %v264
    %v266 = vpop.f32.mrf.mxu0
    %v267 = vpop.f32.mrf.mxu0
    %v268 = vadd.f32 %v143, %v267
    %v269 = vpop.f32.mrf.mxu0
    %270 = vmatprep.mubr.bf16.mxu0 0
    %271 = vmatmul.mubr.bf16.gmra.mxu0 %v171
    %v272 = vpop.f32.mrf.mxu0
    %v273 = vadd.f32 %v143, %v272
    %v274 = vpop.f32.mrf.mxu0
    %v275 = vpop.f32.mrf.mxu0
    %v276 = vadd.f32 %v143, %v275
    %v277 = vpop.f32.mrf.mxu0
    %278 = vmatprep.mubr.bf16.mxu0 0
    %279 = vmatmul.mubr.bf16.gmra.mxu0 %v174
    %v280 = vpop.f32.mrf.mxu0
    %v281 = vadd.f32 %v143, %v280
    %v282 = vpop.f32.mrf.mxu0
    %v283 = vpop.f32.mrf.mxu0
    %v284 = vadd.f32 %v143, %v283
    %v285 = vpop.f32.mrf.mxu0
    %286 = vmatprep.mubr.bf16.mxu0 0
    %287 = vmatmul.mubr.bf16.gmra.mxu0 %v177
    %v288 = vpop.f32.mrf.mxu0
    %v289 = vadd.f32 %v143, %v288
    %v290 = vpop.f32.mrf.mxu0
    %v291 = vpop.f32.mrf.mxu0
    %v292 = vadd.f32 %v143, %v291
    %v293 = vpop.f32.mrf.mxu0
    %294 = vmatprep.mubr.bf16.mxu0 0
    %295 = vmatmul.mubr.bf16.gmra.mxu0 %v180
    %v296 = vpop.f32.mrf.mxu0
    %v297 = vadd.f32 %v143, %v296
    %v298 = vpop.f32.mrf.mxu0
    %v299 = vpop.f32.mrf.mxu0
    %v300 = vadd.f32 %v143, %v299
    %v301 = vpop.f32.mrf.mxu0
    %302 = vmatprep.mubr.bf16.mxu0 0
    %303 = vmatmul.mubr.bf16.gmra.mxu0 %v183
    %v304 = vpop.f32.mrf.mxu0
    %v305 = vadd.f32 %v143, %v304
    %v306 = vpop.f32.mrf.mxu0
    %v307 = vpop.f32.mrf.mxu0
    %v308 = vadd.f32 %v143, %v307
    %v309 = vpop.f32.mrf.mxu0
    %310 = vmatprep.mubr.bf16.mxu0 0
    %311 = vmatmul.mubr.bf16.gmra.mxu0 %v186
    %v312 = vpop.f32.mrf.mxu0
    %v313 = vadd.f32 %v143, %v312
    %v314 = vpop.f32.mrf.mxu0
    %v315 = vpop.f32.mrf.mxu0
    %v316 = vadd.f32 %v143, %v315
    %v317 = vpop.f32.mrf.mxu0
    %318 = vmatprep.mubr.bf16.mxu0 0
    %319 = vmatmul.mubr.bf16.gmra.mxu0 %v189
    %v320 = vpop.f32.mrf.mxu0
    %v321 = vadd.f32 %v143, %v320
    %v322 = vpop.f32.mrf.mxu0
    %v323 = vpop.f32.mrf.mxu0
    %v324 = vadd.f32 %v143, %v323
    %v325 = vpop.f32.mrf.mxu0
    %326 = vmatprep.mubr.bf16.mxu0 0
    %327 = vmatmul.mubr.bf16.gmra.mxu0 %v192
    %v328 = vpop.f32.mrf.mxu0
    %v329 = vadd.f32 %v143, %v328
    %v330 = vpop.f32.mrf.mxu0
    %v331 = vpop.f32.mrf.mxu0
    %v332 = vadd.f32 %v143, %v331
    %v333 = vpop.f32.mrf.mxu0
    %334 = vmatprep.mubr.bf16.mxu0 0
    %335 = vmatmul.mubr.bf16.gmra.mxu0 %v195
    %v336 = vpop.f32.mrf.mxu0
    %v337 = vadd.f32 %v143, %v336
    %v338 = vpop.f32.mrf.mxu0
    %v339 = vpop.f32.mrf.mxu0
    %v340 = vadd.f32 %v143, %v339
    %v341 = vpop.f32.mrf.mxu0
    %342 = vmatprep.mubr.bf16.mxu0 0
    %343 = vmatmul.mubr.bf16.gmra.mxu0 %v198
    %v344 = vpop.f32.mrf.mxu0
    %v345 = vadd.f32 %v143, %v344
    %v346 = vpop.f32.mrf.mxu0
    %v347 = vpop.f32.mrf.mxu0
    %v348 = vadd.f32 %v143, %v347
    %v349 = vpop.f32.mrf.mxu0
    %350 = vmatprep.mubr.bf16.mxu0 0
    %351 = vmatmul.mubr.bf16.gmra.mxu0 %v201
    %v352 = vpop.f32.mrf.mxu0
    %v353 = vadd.f32 %v143, %v352
    %v354 = vpop.f32.mrf.mxu0
    %v355 = vpop.f32.mrf.mxu0
    %v356 = vadd.f32 %v143, %v355
    %v357 = vpop.f32.mrf.mxu0
    %358 = vmatprep.mubr.bf16.mxu0 0
    %359 = vmatmul.mubr.bf16.gmra.mxu0 %v204
    %v360 = vpop.f32.mrf.mxu0
    %v361 = vadd.f32 %v143, %v360
    %v362 = vpop.f32.mrf.mxu0
    %v363 = vpop.f32.mrf.mxu0
    %v364 = vadd.f32 %v143, %v363
    %v365 = vpop.f32.mrf.mxu0
    %366 = vdwg.mxu0
    %v367 = vpack.c.bf16 %v244, %v241
    %v368 = vpack.c.bf16 %v252, %v249
    %v369 = vpack.c.bf16 %v260, %v257
    %v370 = vpack.c.bf16 %v268, %v265
    %v371 = vpack.c.bf16 %v276, %v273
    %v372 = vpack.c.bf16 %v284, %v281
    %v373 = vpack.c.bf16 %v292, %v289
    %v374 = vpack.c.bf16 %v300, %v297
    %v375 = vpack.c.bf16 %v308, %v305
    %v376 = vpack.c.bf16 %v316, %v313
    %v377 = vpack.c.bf16 %v324, %v321
    %v378 = vpack.c.bf16 %v332, %v329
    %v379 = vpack.c.bf16 %v340, %v337
    %v380 = vpack.c.bf16 %v348, %v345
    %v381 = vpack.c.bf16 %v356, %v353
    %v382 = vpack.c.bf16 %v364, %v361
    %v399 = vunpack.c.l.b16 %v367
    %v400 = vunpack.c.h.b16 %v367
    %v401 = vunpack.c.l.b16 %v368
    %v402 = vunpack.c.h.b16 %v368
    %v403 = vunpack.c.l.b16 %v369
    %v404 = vunpack.c.h.b16 %v369
    %v405 = vunpack.c.l.b16 %v370
    %v406 = vunpack.c.h.b16 %v370
    %v407 = vunpack.c.l.b16 %v371
    %v408 = vunpack.c.h.b16 %v371
    %v409 = vunpack.c.l.b16 %v372
    %v410 = vunpack.c.h.b16 %v372
    %v411 = vunpack.c.l.b16 %v373
    %v412 = vunpack.c.h.b16 %v373
    %v413 = vunpack.c.l.b16 %v374
    %v414 = vunpack.c.h.b16 %v374
    %v415 = vunpack.c.l.b16 %v375
    %v416 = vunpack.c.h.b16 %v375
    %v417 = vunpack.c.l.b16 %v376
    %v418 = vunpack.c.h.b16 %v376
    %v419 = vunpack.c.l.b16 %v377
    %v420 = vunpack.c.h.b16 %v377
    %v421 = vunpack.c.l.b16 %v378
    %v422 = vunpack.c.h.b16 %v378
    %v423 = vunpack.c.l.b16 %v379
    %v424 = vunpack.c.h.b16 %v379
    %v425 = vunpack.c.l.b16 %v380
    %v426 = vunpack.c.h.b16 %v380
    %v427 = vunpack.c.l.b16 %v381
    %v428 = vunpack.c.h.b16 %v381
    %v429 = vunpack.c.l.b16 %v382
    %v430 = vunpack.c.h.b16 %v382
    %v431 = vpack.c.b16 %v399, %v399
    %v432 = vpack.c.b16 %v400, %v400
    %v433 = vpack.c.b16 %v401, %v401
    %v434 = vpack.c.b16 %v402, %v402
    %v435 = vpack.c.b16 %v403, %v403
    %v436 = vpack.c.b16 %v404, %v404
    %v437 = vpack.c.b16 %v405, %v405
    %v438 = vpack.c.b16 %v406, %v406
    %v439 = vpack.c.b16 %v407, %v407
    %v440 = vpack.c.b16 %v408, %v408
    %v441 = vpack.c.b16 %v409, %v409
    %v442 = vpack.c.b16 %v410, %v410
    %v443 = vpack.c.b16 %v411, %v411
    %v444 = vpack.c.b16 %v412, %v412
    %v445 = vpack.c.b16 %v413, %v413
    %v446 = vpack.c.b16 %v414, %v414
    %v447 = vpack.c.b16 %v415, %v415
    %v448 = vpack.c.b16 %v416, %v416
    %v449 = vpack.c.b16 %v417, %v417
    %v450 = vpack.c.b16 %v418, %v418
    %v451 = vpack.c.b16 %v419, %v419
    %v452 = vpack.c.b16 %v420, %v420
    %v453 = vpack.c.b16 %v421, %v421
    %v454 = vpack.c.b16 %v422, %v422
    %v455 = vpack.c.b16 %v423, %v423
    %v456 = vpack.c.b16 %v424, %v424
    %v457 = vpack.c.b16 %v425, %v425
    %v458 = vpack.c.b16 %v426, %v426
    %v459 = vpack.c.b16 %v427, %v427
    %v460 = vpack.c.b16 %v428, %v428
    %v461 = vpack.c.b16 %v429, %v429
    %v462 = vpack.c.b16 %v430, %v430
    %495 = vst [vmem:[#allocation2] sm:$0xf] %v431
    %496 = vst [vmem:[#allocation2 + $0x4] sm:$0xf] %v432
    %497 = vst [vmem:[#allocation2 + $0x8] sm:$0xf] %v433
    %498 = vst [vmem:[#allocation2 + $0xc] sm:$0xf] %v434
    %499 = vst [vmem:[#allocation2 + $0x10] sm:$0xf] %v435
    %500 = vst [vmem:[#allocation2 + $0x14] sm:$0xf] %v436
    %501 = vst [vmem:[#allocation2 + $0x18] sm:$0xf] %v437
    %502 = vst [vmem:[#allocation2 + $0x1c] sm:$0xf] %v438
    %503 = vst [vmem:[#allocation2 + $0x20] sm:$0xf] %v439
    %504 = vst [vmem:[#allocation2 + $0x24] sm:$0xf] %v440
    %505 = vst [vmem:[#allocation2 + $0x28] sm:$0xf] %v441
    %506 = vst [vmem:[#allocation2 + $0x2c] sm:$0xf] %v442
    %507 = vst [vmem:[#allocation2 + $0x30] sm:$0xf] %v443
    %508 = vst [vmem:[#allocation2 + $0x34] sm:$0xf] %v444
    %509 = vst [vmem:[#allocation2 + $0x38] sm:$0xf] %v445
    %510 = vst [vmem:[#allocation2 + $0x3c] sm:$0xf] %v446
    %511 = vst [vmem:[#allocation2 + $0x40] sm:$0xf] %v447
    %512 = vst [vmem:[#allocation2 + $0x44] sm:$0xf] %v448
    %513 = vst [vmem:[#allocation2 + $0x48] sm:$0xf] %v449
    %514 = vst [vmem:[#allocation2 + $0x4c] sm:$0xf] %v450
    %515 = vst [vmem:[#allocation2 + $0x50] sm:$0xf] %v451
    %516 = vst [vmem:[#allocation2 + $0x54] sm:$0xf] %v452
    %517 = vst [vmem:[#allocation2 + $0x58] sm:$0xf] %v453
    %518 = vst [vmem:[#allocation2 + $0x5c] sm:$0xf] %v454
    %519 = vst [vmem:[#allocation2 + $0x60] sm:$0xf] %v455
    %520 = vst [vmem:[#allocation2 + $0x64] sm:$0xf] %v456
    %521 = vst [vmem:[#allocation2 + $0x68] sm:$0xf] %v457
    %522 = vst [vmem:[#allocation2 + $0x6c] sm:$0xf] %v458
    %523 = vst [vmem:[#allocation2 + $0x70] sm:$0xf] %v459
    %524 = vst [vmem:[#allocation2 + $0x74] sm:$0xf] %v460
    %525 = vst [vmem:[#allocation2 + $0x78] sm:$0xf] %v461
    %526 = vst [vmem:[#allocation2 + $0x7c] sm:$0xf] %v462
    %v527 = vld [vmem:[#allocation9] sm:$0xf]
    %v528 = vld [vmem:[#allocation9 + $0x4] sm:$0xf]
    %v529 = vld [vmem:[#allocation9 + $0x8] sm:$0xf]
    %v530 = vld [vmem:[#allocation9 + $0xc] sm:$0xf]
    %v531 = vld [vmem:[#allocation2] sm:$0xf]
    %v532 = vld [vmem:[#allocation2 + $0x4] sm:$0xf]
    %v533 = vld [vmem:[#allocation2 + $0x8] sm:$0xf]
    %v534 = vld [vmem:[#allocation2 + $0xc] sm:$0xf]
    %v535 = vunpack.c.l.bf16 %v531
    %v536 = vunpack.c.l.bf16 %v532
    %v537 = vunpack.c.l.bf16 %v533
    %v538 = vunpack.c.l.bf16 %v534
    %v543 = vunpack.c.l.b16 %v527
    %v544 = vunpack.c.l.b16 %v528
    %v545 = vunpack.c.l.b16 %v529
    %v546 = vunpack.c.l.b16 %v530
    %v547 = vpack.c.b16 %v544, %v543
    %v548 = vpack.c.b16 %v546, %v545
    %v552 = vsel %vm157, 0, 0
    %554 = vmatprep.subr.bf16.mxu0 0
    %555 = vmatpush1.bf16.msra.mxu0 0
    %556 = vmatprep.subr.bf16.mxu0 0
    %557 = vmatpush1.bf16.msra.mxu0 0
    %558 = vmatprep.subr.bf16.mxu0 0
    %559 = vmatpush1.bf16.msra.mxu0 0
    %560 = vmatprep.subr.bf16.mxu0 0
    %561 = vmatpush1.bf16.msra.mxu0 0
    %562 = vmatprep.subr.bf16.mxu0 0
    %563 = vmatpush1.bf16.msra.mxu0 0
    %564 = vmatprep.subr.bf16.mxu0 0
    %565 = vmatpush1.bf16.msra.mxu0 0
    %566 = vmatprep.subr.bf16.mxu0 0
    %567 = vmatpush1.bf16.msra.mxu0 %v548
    %568 = vmatprep.subr.bf16.mxu0 0
    %569 = vmatpush1.bf16.msra.mxu0 %v547
    %570 = vmatprep.subr.bf16.mxu0 0
    %571 = vmatpush2.bf16.msra.mxu0 0
    %572 = vmatprep.subr.bf16.mxu0 0
    %573 = vmatpush2.bf16.msra.mxu0 0
    %574 = vmatprep.subr.bf16.mxu0 0
    %575 = vmatpush2.bf16.msra.mxu0 0
    %576 = vmatprep.subr.bf16.mxu0 0
    %577 = vmatpush2.bf16.msra.mxu0 0
    %578 = vmatprep.subr.bf16.mxu0 0
    %579 = vmatpush2.bf16.msra.mxu0 0
    %580 = vmatprep.subr.bf16.mxu0 0
    %581 = vmatpush2.bf16.msra.mxu0 0
    %582 = vmatprep.subr.bf16.mxu0 0
    %583 = vmatpush2.bf16.msra.mxu0 0
    %584 = vmatprep.subr.bf16.mxu0 0
    %585 = vmatpush2.bf16.msra.mxu0 0
    %586 = vmatprep.mubr.bf16.mxu0 0
    %587 = vmatmul.mubr.bf16.gmra.mxu0 %v552
    %v588 = vpop.f32.mrf.mxu0
    %v589 = vadd.f32 0.0, %v588
    %v590 = vpop.f32.mrf.mxu0
    %v591 = vpop.f32.mrf.mxu0
    %v592 = vadd.f32 0.0, %v591
    %v593 = vpop.f32.mrf.mxu0
    %594 = vmatprep.mubr.bf16.mxu0 0
    %595 = vmatmul.mubr.bf16.gmra.mxu0 %v552
    %v596 = vpop.f32.mrf.mxu0
    %v597 = vadd.f32 0.0, %v596
    %v598 = vpop.f32.mrf.mxu0
    %v599 = vpop.f32.mrf.mxu0
    %v600 = vadd.f32 0.0, %v599
    %v601 = vpop.f32.mrf.mxu0
    %602 = vdwg.mxu0
    %v603 = vadd.f32 %v535, %v589
    %v604 = vadd.f32 %v536, %v592
    %v605 = vadd.f32 %v537, %v597
    %v606 = vadd.f32 %v538, %v600
    %v607 = vxor.u32 %v603, 2147483648
    %v608 = vxor.u32 %v604, 2147483648
    %v609 = vxor.u32 %v605, 2147483648
    %v610 = vxor.u32 %v606, 2147483648
    %v611 = vmul.f32 %v607, 1.442695
    %v612 = vpow.pop %v611
    %v613 = vmul.f32 %v608, 1.442695
    %v614 = vpow.pop %v613
    %v615 = vmul.f32 %v609, 1.442695
    %v616 = vpow.pop %v615
    %v617 = vmul.f32 %v610, 1.442695
    %v618 = vpow.pop %v617
    %v619 = vadd.f32 %v612, 1.0
    %v620 = vadd.f32 %v614, 1.0
    %v621 = vadd.f32 %v616, 1.0
    %v622 = vadd.f32 %v618, 1.0
    %v623 = vrcp.pop %v619
    %v624 = vmul.f32 1.0, %v623
    %v625 = vrcp.pop %v620
    %v626 = vmul.f32 1.0, %v625
    %v627 = vrcp.pop %v621
    %v628 = vmul.f32 1.0, %v627
    %v629 = vrcp.pop %v622
    %v630 = vmul.f32 1.0, %v629
    %v631 = vtanh.pop %v603
    %v632 = vtanh.pop %v604
    %v633 = vtanh.pop %v605
    %v634 = vtanh.pop %v606
    %v635 = vmul.f32 %v624, 0.0
    %v636 = vmul.f32 %v626, 0.0
    %v637 = vmul.f32 %v628, 0.0
    %v638 = vmul.f32 %v630, 0.0
    %643 = vrot.lane.b32.xlu0 %v631, 32
    %v644 = vpop.permute.xlu0 %643
    %645 = vrot.lane.b32.xlu0 %v632, 32
    %v646 = vpop.permute.xlu0 %645
    %647 = vrot.lane.b32.xlu0 %v633, 32
    %v648 = vpop.permute.xlu0 %647
    %649 = vrot.lane.b32.xlu0 %v634, 32
    %v650 = vpop.permute.xlu0 %649
    %v655 = vmul.f32 %v624, %v644
    %v656 = vmul.f32 %v626, %v646
    %v657 = vmul.f32 %v628, %v648
    %v658 = vmul.f32 %v630, %v650
    %663 = vrot.lane.b32.xlu0 %v655, 32
    %v664 = vpop.permute.xlu0 %663
    %665 = vrot.lane.b32.xlu0 %v656, 32
    %v666 = vpop.permute.xlu0 %665
    %667 = vrot.lane.b32.xlu0 %v657, 32
    %v668 = vpop.permute.xlu0 %667
    %669 = vrot.lane.b32.xlu0 %v658, 32
    %v670 = vpop.permute.xlu0 %669
    %v675 = vadd.f32 %v635, %v664
    %v676 = vadd.f32 %v636, %v666
    %v677 = vadd.f32 %v637, %v668
    %v678 = vadd.f32 %v638, %v670
    %v679 = vtanh.pop %v675
    %v680 = vtanh.pop %v676
    %v681 = vtanh.pop %v677
    %v682 = vtanh.pop %v678
    %687 = vrot.lane.b32.xlu0 %v679, 32
    %v688 = vpop.permute.xlu0 %687
    %689 = vrot.lane.b32.xlu0 %v680, 32
    %v690 = vpop.permute.xlu0 %689
    %691 = vrot.lane.b32.xlu0 %v681, 32
    %v692 = vpop.permute.xlu0 %691
    %693 = vrot.lane.b32.xlu0 %v682, 32
    %v694 = vpop.permute.xlu0 %693
    %v699 = vmul.f32 %v624, %v688
    %v700 = vmul.f32 %v626, %v690
    %v701 = vmul.f32 %v628, %v692
    %v702 = vmul.f32 %v630, %v694
    %v703 = vpack.c.bf16 %v700, %v699
    %v704 = vpack.c.bf16 %v702, %v701
    %v707 = vunpack.c.l.b16 %v703
    %v708 = vunpack.c.h.b16 %v703
    %v709 = vunpack.c.l.b16 %v704
    %v710 = vunpack.c.h.b16 %v704
    %v711 = vpack.c.b16 %v707, %v707
    %v712 = vpack.c.b16 %v708, %v708
    %v713 = vpack.c.b16 %v709, %v709
    %v714 = vpack.c.b16 %v710, %v710
    %715 = vrot.lane.b32.xlu0 %v711, 64
    %v716 = vpop.permute.xlu0 %715
    %717 = vrot.lane.b32.xlu0 %v712, 64
    %v718 = vpop.permute.xlu0 %717
    %719 = vrot.lane.b32.xlu0 %v713, 64
    %v720 = vpop.permute.xlu0 %719
    %721 = vrot.lane.b32.xlu0 %v714, 64
    %v722 = vpop.permute.xlu0 %721
    %vm727 = vcmask 257024
    %728 = vst.msk [vmem:[#allocation3] sm:$0xf] %vm727, %v716
    %729 = vst.msk [vmem:[#allocation3 + $0x4] sm:$0xf] %vm727, %v718
    %730 = vst.msk [vmem:[#allocation3 + $0x8] sm:$0xf] %vm727, %v720
    %731 = vst.msk [vmem:[#allocation3 + $0xc] sm:$0xf] %vm727, %v722
    %s732 = scalar_lea.vmem [#allocation2], 16
    %v733 = vld [vmem:[%s732] sm:$0xf]
    %v734 = vld [vmem:[%s732 + $0x4] sm:$0xf]
    %v735 = vld [vmem:[%s732 + $0x8] sm:$0xf]
    %v736 = vld [vmem:[%s732 + $0xc] sm:$0xf]
    %v737 = vunpack.c.l.bf16 %v733
    %v738 = vunpack.c.l.bf16 %v734
    %v739 = vunpack.c.l.bf16 %v735
    %v740 = vunpack.c.l.bf16 %v736
    %741 = vrot.lane.b32.xlu0 %v703, 64
    %v742 = vpop.permute.xlu0 %741
    %743 = vrot.lane.b32.xlu0 %v704, 64
    %v744 = vpop.permute.xlu0 %743
    %v746 = vsel %vm157, %v742, 0
    %v749 = vsel %vm157, %v744, 0
    %751 = vmatprep.subr.bf16.mxu0 0
    %752 = vmatpush1.bf16.msra.mxu0 0
    %753 = vmatprep.subr.bf16.mxu0 0
    %754 = vmatpush1.bf16.msra.mxu0 0
    %755 = vmatprep.subr.bf16.mxu0 0
    %756 = vmatpush1.bf16.msra.mxu0 0
    %757 = vmatprep.subr.bf16.mxu0 0
    %758 = vmatpush1.bf16.msra.mxu0 0
    %759 = vmatprep.subr.bf16.mxu0 0
    %760 = vmatpush1.bf16.msra.mxu0 0
    %761 = vmatprep.subr.bf16.mxu0 0
    %762 = vmatpush1.bf16.msra.mxu0 0
    %763 = vmatprep.subr.bf16.mxu0 0
    %764 = vmatpush1.bf16.msra.mxu0 %v548
    %765 = vmatprep.subr.bf16.mxu0 0
    %766 = vmatpush1.bf16.msra.mxu0 %v547
    %767 = vmatprep.subr.bf16.mxu0 0
    %768 = vmatpush2.bf16.msra.mxu0 0
    %769 = vmatprep.subr.bf16.mxu0 0
    %770 = vmatpush2.bf16.msra.mxu0 0
    %771 = vmatprep.subr.bf16.mxu0 0
    %772 = vmatpush2.bf16.msra.mxu0 0
    %773 = vmatprep.subr.bf16.mxu0 0
    %774 = vmatpush2.bf16.msra.mxu0 0
    %775 = vmatprep.subr.bf16.mxu0 0
    %776 = vmatpush2.bf16.msra.mxu0 0
    %777 = vmatprep.subr.bf16.mxu0 0
    %778 = vmatpush2.bf16.msra.mxu0 0
    %779 = vmatprep.subr.bf16.mxu0 0
    %780 = vmatpush2.bf16.msra.mxu0 0
    %781 = vmatprep.subr.bf16.mxu0 0
    %782 = vmatpush2.bf16.msra.mxu0 0
    %783 = vmatprep.mubr.bf16.mxu0 0
    %784 = vmatmul.mubr.bf16.gmra.mxu0 %v746
    %v785 = vpop.f32.mrf.mxu0
    %v786 = vadd.f32 0.0, %v785
    %v787 = vpop.f32.mrf.mxu0
    %v788 = vpop.f32.mrf.mxu0
    %v789 = vadd.f32 0.0, %v788
    %v790 = vpop.f32.mrf.mxu0
    %791 = vmatprep.mubr.bf16.mxu0 0
    %792 = vmatmul.mubr.bf16.gmra.mxu0 %v749
    %v793 = vpop.f32.mrf.mxu0
    %v794 = vadd.f32 0.0, %v793
    %v795 = vpop.f32.mrf.mxu0
    %v796 = vpop.f32.mrf.mxu0
    %v797 = vadd.f32 0.0, %v796
    %v798 = vpop.f32.mrf.mxu0
    %799 = vdwg.mxu0
    %v800 = vadd.f32 %v737, %v786
    %v801 = vadd.f32 %v738, %v789
    %v802 = vadd.f32 %v739, %v794
    %v803 = vadd.f32 %v740, %v797
    %v804 = vxor.u32 %v800, 2147483648
    %v805 = vxor.u32 %v801, 2147483648
    %v806 = vxor.u32 %v802, 2147483648
    %v807 = vxor.u32 %v803, 2147483648
    %v808 = vmul.f32 %v804, 1.442695
    %v809 = vpow.pop %v808
    %v810 = vmul.f32 %v805, 1.442695
    %v811 = vpow.pop %v810
    %v812 = vmul.f32 %v806, 1.442695
    %v813 = vpow.pop %v812
    %v814 = vmul.f32 %v807, 1.442695
    %v815 = vpow.pop %v814
    %v816 = vadd.f32 %v809, 1.0
    %v817 = vadd.f32 %v811, 1.0
    %v818 = vadd.f32 %v813, 1.0
    %v819 = vadd.f32 %v815, 1.0
    %v820 = vrcp.pop %v816
    %v821 = vmul.f32 1.0, %v820
    %v822 = vrcp.pop %v817
    %v823 = vmul.f32 1.0, %v822
    %v824 = vrcp.pop %v818
    %v825 = vmul.f32 1.0, %v824
    %v826 = vrcp.pop %v819
    %v827 = vmul.f32 1.0, %v826
    %v828 = vtanh.pop %v800
    %v829 = vtanh.pop %v801
    %v830 = vtanh.pop %v802
    %v831 = vtanh.pop %v803
    %v832 = vmul.f32 %v821, %v675
    %v833 = vmul.f32 %v823, %v676
    %v834 = vmul.f32 %v825, %v677
    %v835 = vmul.f32 %v827, %v678
    %840 = vrot.lane.b32.xlu0 %v828, 32
    %v841 = vpop.permute.xlu0 %840
    %842 = vrot.lane.b32.xlu0 %v829, 32
    %v843 = vpop.permute.xlu0 %842
    %844 = vrot.lane.b32.xlu0 %v830, 32
    %v845 = vpop.permute.xlu0 %844
    %846 = vrot.lane.b32.xlu0 %v831, 32
    %v847 = vpop.permute.xlu0 %846
    %v852 = vmul.f32 %v821, %v841
    %v853 = vmul.f32 %v823, %v843
    %v854 = vmul.f32 %v825, %v845
    %v855 = vmul.f32 %v827, %v847
    %860 = vrot.lane.b32.xlu0 %v852, 32
    %v861 = vpop.permute.xlu0 %860
    %862 = vrot.lane.b32.xlu0 %v853, 32
    %v863 = vpop.permute.xlu0 %862
    %864 = vrot.lane.b32.xlu0 %v854, 32
    %v865 = vpop.permute.xlu0 %864
    %866 = vrot.lane.b32.xlu0 %v855, 32
    %v867 = vpop.permute.xlu0 %866
    %v872 = vadd.f32 %v832, %v861
    %v873 = vadd.f32 %v833, %v863
    %v874 = vadd.f32 %v834, %v865
    %v875 = vadd.f32 %v835, %v867
    %v876 = vtanh.pop %v872
    %v877 = vtanh.pop %v873
    %v878 = vtanh.pop %v874
    %v879 = vtanh.pop %v875
    %884 = vrot.lane.b32.xlu0 %v876, 32
    %v885 = vpop.permute.xlu0 %884
    %886 = vrot.lane.b32.xlu0 %v877, 32
    %v887 = vpop.permute.xlu0 %886
    %888 = vrot.lane.b32.xlu0 %v878, 32
    %v889 = vpop.permute.xlu0 %888
    %890 = vrot.lane.b32.xlu0 %v879, 32
    %v891 = vpop.permute.xlu0 %890
    %v896 = vmul.f32 %v821, %v885
    %v897 = vmul.f32 %v823, %v887
    %v898 = vmul.f32 %v825, %v889
    %v899 = vmul.f32 %v827, %v891
    %v900 = vpack.c.bf16 %v897, %v896
    %v901 = vpack.c.bf16 %v899, %v898
    %v904 = vunpack.c.l.b16 %v900
    %v905 = vunpack.c.h.b16 %v900
    %v906 = vunpack.c.l.b16 %v901
    %v907 = vunpack.c.h.b16 %v901
    %v908 = vpack.c.b16 %v904, %v904
    %v909 = vpack.c.b16 %v905, %v905
    %v910 = vpack.c.b16 %v906, %v906
    %v911 = vpack.c.b16 %v907, %v907
    %912 = vrot.lane.b32.xlu0 %v908, 64
    %v913 = vpop.permute.xlu0 %912
    %914 = vrot.lane.b32.xlu0 %v909, 64
    %v915 = vpop.permute.xlu0 %914
    %916 = vrot.lane.b32.xlu0 %v910, 64
    %v917 = vpop.permute.xlu0 %916
    %918 = vrot.lane.b32.xlu0 %v911, 64
    %v919 = vpop.permute.xlu0 %918
    %s924 = scalar_lea.vmem [#allocation3], 16
    %925 = vst.msk [vmem:[%s924] sm:$0xf] %vm727, %v913
    %926 = vst.msk [vmem:[%s924 + $0x4] sm:$0xf] %vm727, %v915
    %927 = vst.msk [vmem:[%s924 + $0x8] sm:$0xf] %vm727, %v917
    %928 = vst.msk [vmem:[%s924 + $0xc] sm:$0xf] %vm727, %v919
    %s929 = scalar_lea.vmem [#allocation2], 32
    %v930 = vld [vmem:[%s929] sm:$0xf]
    %v931 = vld [vmem:[%s929 + $0x4] sm:$0xf]
    %v932 = vld [vmem:[%s929 + $0x8] sm:$0xf]
    %v933 = vld [vmem:[%s929 + $0xc] sm:$0xf]
    %v934 = vunpack.c.l.bf16 %v930
    %v935 = vunpack.c.l.bf16 %v931
    %v936 = vunpack.c.l.bf16 %v932
    %v937 = vunpack.c.l.bf16 %v933
    %938 = vrot.lane.b32.xlu0 %v900, 64
    %v939 = vpop.permute.xlu0 %938
    %940 = vrot.lane.b32.xlu0 %v901, 64
    %v941 = vpop.permute.xlu0 %940
    %v943 = vsel %vm157, %v939, 0
    %v946 = vsel %vm157, %v941, 0
    %948 = vmatprep.subr.bf16.mxu0 0
    %949 = vmatpush1.bf16.msra.mxu0 0
    %950 = vmatprep.subr.bf16.mxu0 0
    %951 = vmatpush1.bf16.msra.mxu0 0
    %952 = vmatprep.subr.bf16.mxu0 0
    %953 = vmatpush1.bf16.msra.mxu0 0
    %954 = vmatprep.subr.bf16.mxu0 0
    %955 = vmatpush1.bf16.msra.mxu0 0
    %956 = vmatprep.subr.bf16.mxu0 0
    %957 = vmatpush1.bf16.msra.mxu0 0
    %958 = vmatprep.subr.bf16.mxu0 0
    %959 = vmatpush1.bf16.msra.mxu0 0
    %960 = vmatprep.subr.bf16.mxu0 0
    %961 = vmatpush1.bf16.msra.mxu0 %v548
    %962 = vmatprep.subr.bf16.mxu0 0
    %963 = vmatpush1.bf16.msra.mxu0 %v547
    %964 = vmatprep.subr.bf16.mxu0 0
    %965 = vmatpush2.bf16.msra.mxu0 0
    %966 = vmatprep.subr.bf16.mxu0 0
    %967 = vmatpush2.bf16.msra.mxu0 0
    %968 = vmatprep.subr.bf16.mxu0 0
    %969 = vmatpush2.bf16.msra.mxu0 0
    %970 = vmatprep.subr.bf16.mxu0 0
    %971 = vmatpush2.bf16.msra.mxu0 0
    %972 = vmatprep.subr.bf16.mxu0 0
    %973 = vmatpush2.bf16.msra.mxu0 0
    %974 = vmatprep.subr.bf16.mxu0 0
    %975 = vmatpush2.bf16.msra.mxu0 0
    %976 = vmatprep.subr.bf16.mxu0 0
    %977 = vmatpush2.bf16.msra.mxu0 0
    %978 = vmatprep.subr.bf16.mxu0 0
    %979 = vmatpush2.bf16.msra.mxu0 0
    %980 = vmatprep.mubr.bf16.mxu0 0
    %981 = vmatmul.mubr.bf16.gmra.mxu0 %v943
    %v982 = vpop.f32.mrf.mxu0
    %v983 = vadd.f32 0.0, %v982
    %v984 = vpop.f32.mrf.mxu0
    %v985 = vpop.f32.mrf.mxu0
    %v986 = vadd.f32 0.0, %v985
    %v987 = vpop.f32.mrf.mxu0
    %988 = vmatprep.mubr.bf16.mxu0 0
    %989 = vmatmul.mubr.bf16.gmra.mxu0 %v946
    %v990 = vpop.f32.mrf.mxu0
    %v991 = vadd.f32 0.0, %v990
    %v992 = vpop.f32.mrf.mxu0
    %v993 = vpop.f32.mrf.mxu0
    %v994 = vadd.f32 0.0, %v993
    %v995 = vpop.f32.mrf.mxu0
    %996 = vdwg.mxu0
    %v997 = vadd.f32 %v934, %v983
    %v998 = vadd.f32 %v935, %v986
    %v999 = vadd.f32 %v936, %v991
    %v1000 = vadd.f32 %v937, %v994
    %v1001 = vxor.u32 %v997, 2147483648
    %v1002 = vxor.u32 %v998, 2147483648
    %v1003 = vxor.u32 %v999, 2147483648
    %v1004 = vxor.u32 %v1000, 2147483648
    %v1005 = vmul.f32 %v1001, 1.442695
    %v1006 = vpow.pop %v1005
    %v1007 = vmul.f32 %v1002, 1.442695
    %v1008 = vpow.pop %v1007
    %v1009 = vmul.f32 %v1003, 1.442695
    %v1010 = vpow.pop %v1009
    %v1011 = vmul.f32 %v1004, 1.442695
    %v1012 = vpow.pop %v1011
    %v1013 = vadd.f32 %v1006, 1.0
    %v1014 = vadd.f32 %v1008, 1.0
    %v1015 = vadd.f32 %v1010, 1.0
    %v1016 = vadd.f32 %v1012, 1.0
    %v1017 = vrcp.pop %v1013
    %v1018 = vmul.f32 1.0, %v1017
    %v1019 = vrcp.pop %v1014
    %v1020 = vmul.f32 1.0, %v1019
    %v1021 = vrcp.pop %v1015
    %v1022 = vmul.f32 1.0, %v1021
    %v1023 = vrcp.pop %v1016
    %v1024 = vmul.f32 1.0, %v1023
    %v1025 = vtanh.pop %v997
    %v1026 = vtanh.pop %v998
    %v1027 = vtanh.pop %v999
    %v1028 = vtanh.pop %v1000
    %v1029 = vmul.f32 %v1018, %v872
    %v1030 = vmul.f32 %v1020, %v873
    %v1031 = vmul.f32 %v1022, %v874
    %v1032 = vmul.f32 %v1024, %v875
    %1037 = vrot.lane.b32.xlu0 %v1025, 32
    %v1038 = vpop.permute.xlu0 %1037
    %1039 = vrot.lane.b32.xlu0 %v1026, 32
    %v1040 = vpop.permute.xlu0 %1039
    %1041 = vrot.lane.b32.xlu0 %v1027, 32
    %v1042 = vpop.permute.xlu0 %1041
    %1043 = vrot.lane.b32.xlu0 %v1028, 32
    %v1044 = vpop.permute.xlu0 %1043
    %v1049 = vmul.f32 %v1018, %v1038
    %v1050 = vmul.f32 %v1020, %v1040
    %v1051 = vmul.f32 %v1022, %v1042
    %v1052 = vmul.f32 %v1024, %v1044
    %1057 = vrot.lane.b32.xlu0 %v1049, 32
    %v1058 = vpop.permute.xlu0 %1057
    %1059 = vrot.lane.b32.xlu0 %v1050, 32
    %v1060 = vpop.permute.xlu0 %1059
    %1061 = vrot.lane.b32.xlu0 %v1051, 32
    %v1062 = vpop.permute.xlu0 %1061
    %1063 = vrot.lane.b32.xlu0 %v1052, 32
    %v1064 = vpop.permute.xlu0 %1063
    %v1069 = vadd.f32 %v1029, %v1058
    %v1070 = vadd.f32 %v1030, %v1060
    %v1071 = vadd.f32 %v1031, %v1062
    %v1072 = vadd.f32 %v1032, %v1064
    %v1073 = vtanh.pop %v1069
    %v1074 = vtanh.pop %v1070
    %v1075 = vtanh.pop %v1071
    %v1076 = vtanh.pop %v1072
    %1081 = vrot.lane.b32.xlu0 %v1073, 32
    %v1082 = vpop.permute.xlu0 %1081
    %1083 = vrot.lane.b32.xlu0 %v1074, 32
    %v1084 = vpop.permute.xlu0 %1083
    %1085 = vrot.lane.b32.xlu0 %v1075, 32
    %v1086 = vpop.permute.xlu0 %1085
    %1087 = vrot.lane.b32.xlu0 %v1076, 32
    %v1088 = vpop.permute.xlu0 %1087
    %v1093 = vmul.f32 %v1018, %v1082
    %v1094 = vmul.f32 %v1020, %v1084
    %v1095 = vmul.f32 %v1022, %v1086
    %v1096 = vmul.f32 %v1024, %v1088
    %v1097 = vpack.c.bf16 %v1094, %v1093
    %v1098 = vpack.c.bf16 %v1096, %v1095
    %v1101 = vunpack.c.l.b16 %v1097
    %v1102 = vunpack.c.h.b16 %v1097
    %v1103 = vunpack.c.l.b16 %v1098
    %v1104 = vunpack.c.h.b16 %v1098
    %v1105 = vpack.c.b16 %v1101, %v1101
    %v1106 = vpack.c.b16 %v1102, %v1102
    %v1107 = vpack.c.b16 %v1103, %v1103
    %v1108 = vpack.c.b16 %v1104, %v1104
    %1109 = vrot.lane.b32.xlu0 %v1105, 64
    %v1110 = vpop.permute.xlu0 %1109
    %1111 = vrot.lane.b32.xlu0 %v1106, 64
    %v1112 = vpop.permute.xlu0 %1111
    %1113 = vrot.lane.b32.xlu0 %v1107, 64
    %v1114 = vpop.permute.xlu0 %1113
    %1115 = vrot.lane.b32.xlu0 %v1108, 64
    %v1116 = vpop.permute.xlu0 %1115
    %s1121 = scalar_lea.vmem [#allocation3], 32
    %1122 = vst.msk [vmem:[%s1121] sm:$0xf] %vm727, %v1110
    %1123 = vst.msk [vmem:[%s1121 + $0x4] sm:$0xf] %vm727, %v1112
    %1124 = vst.msk [vmem:[%s1121 + $0x8] sm:$0xf] %vm727, %v1114
    %1125 = vst.msk [vmem:[%s1121 + $0xc] sm:$0xf] %vm727, %v1116
    %s1126 = scalar_lea.vmem [#allocation2], 48
    %v1127 = vld [vmem:[%s1126] sm:$0xf]
    %v1128 = vld [vmem:[%s1126 + $0x4] sm:$0xf]
    %v1129 = vld [vmem:[%s1126 + $0x8] sm:$0xf]
    %v1130 = vld [vmem:[%s1126 + $0xc] sm:$0xf]
    %v1131 = vunpack.c.l.bf16 %v1127
    %v1132 = vunpack.c.l.bf16 %v1128
    %v1133 = vunpack.c.l.bf16 %v1129
    %v1134 = vunpack.c.l.bf16 %v1130
    %1135 = vrot.lane.b32.xlu0 %v1097, 64
    %v1136 = vpop.permute.xlu0 %1135
    %1137 = vrot.lane.b32.xlu0 %v1098, 64
    %v1138 = vpop.permute.xlu0 %1137
    %v1140 = vsel %vm157, %v1136, 0
    %v1143 = vsel %vm157, %v1138, 0
    %1145 = vmatprep.subr.bf16.mxu0 0
    %1146 = vmatpush1.bf16.msra.mxu0 0
    %1147 = vmatprep.subr.bf16.mxu0 0
    %1148 = vmatpush1.bf16.msra.mxu0 0
    %1149 = vmatprep.subr.bf16.mxu0 0
    %1150 = vmatpush1.bf16.msra.mxu0 0
    %1151 = vmatprep.subr.bf16.mxu0 0
    %1152 = vmatpush1.bf16.msra.mxu0 0
    %1153 = vmatprep.subr.bf16.mxu0 0
    %1154 = vmatpush1.bf16.msra.mxu0 0
    %1155 = vmatprep.subr.bf16.mxu0 0
    %1156 = vmatpush1.bf16.msra.mxu0 0
    %1157 = vmatprep.subr.bf16.mxu0 0
    %1158 = vmatpush1.bf16.msra.mxu0 %v548
    %1159 = vmatprep.subr.bf16.mxu0 0
    %1160 = vmatpush1.bf16.msra.mxu0 %v547
    %1161 = vmatprep.subr.bf16.mxu0 0
    %1162 = vmatpush2.bf16.msra.mxu0 0
    %1163 = vmatprep.subr.bf16.mxu0 0
    %1164 = vmatpush2.bf16.msra.mxu0 0
    %1165 = vmatprep.subr.bf16.mxu0 0
    %1166 = vmatpush2.bf16.msra.mxu0 0
    %1167 = vmatprep.subr.bf16.mxu0 0
    %1168 = vmatpush2.bf16.msra.mxu0 0
    %1169 = vmatprep.subr.bf16.mxu0 0
    %1170 = vmatpush2.bf16.msra.mxu0 0
    %1171 = vmatprep.subr.bf16.mxu0 0
    %1172 = vmatpush2.bf16.msra.mxu0 0
    %1173 = vmatprep.subr.bf16.mxu0 0
    %1174 = vmatpush2.bf16.msra.mxu0 0
    %1175 = vmatprep.subr.bf16.mxu0 0
    %1176 = vmatpush2.bf16.msra.mxu0 0
    %1177 = vmatprep.mubr.bf16.mxu0 0
    %1178 = vmatmul.mubr.bf16.gmra.mxu0 %v1140
    %v1179 = vpop.f32.mrf.mxu0
    %v1180 = vadd.f32 0.0, %v1179
    %v1181 = vpop.f32.mrf.mxu0
    %v1182 = vpop.f32.mrf.mxu0
    %v1183 = vadd.f32 0.0, %v1182
    %v1184 = vpop.f32.mrf.mxu0
    %1185 = vmatprep.mubr.bf16.mxu0 0
    %1186 = vmatmul.mubr.bf16.gmra.mxu0 %v1143
    %v1187 = vpop.f32.mrf.mxu0
    %v1188 = vadd.f32 0.0, %v1187
    %v1189 = vpop.f32.mrf.mxu0
    %v1190 = vpop.f32.mrf.mxu0
    %v1191 = vadd.f32 0.0, %v1190
    %v1192 = vpop.f32.mrf.mxu0
    %1193 = vdwg.mxu0
    %v1194 = vadd.f32 %v1131, %v1180
    %v1195 = vadd.f32 %v1132, %v1183
    %v1196 = vadd.f32 %v1133, %v1188
    %v1197 = vadd.f32 %v1134, %v1191
    %v1198 = vxor.u32 %v1194, 2147483648
    %v1199 = vxor.u32 %v1195, 2147483648
    %v1200 = vxor.u32 %v1196, 2147483648
    %v1201 = vxor.u32 %v1197, 2147483648
    %v1202 = vmul.f32 %v1198, 1.442695
    %v1203 = vpow.pop %v1202
    %v1204 = vmul.f32 %v1199, 1.442695
    %v1205 = vpow.pop %v1204
    %v1206 = vmul.f32 %v1200, 1.442695
    %v1207 = vpow.pop %v1206
    %v1208 = vmul.f32 %v1201, 1.442695
    %v1209 = vpow.pop %v1208
    %v1210 = vadd.f32 %v1203, 1.0
    %v1211 = vadd.f32 %v1205, 1.0
    %v1212 = vadd.f32 %v1207, 1.0
    %v1213 = vadd.f32 %v1209, 1.0
    %v1214 = vrcp.pop %v1210
    %v1215 = vmul.f32 1.0, %v1214
    %v1216 = vrcp.pop %v1211
    %v1217 = vmul.f32 1.0, %v1216
    %v1218 = vrcp.pop %v1212
    %v1219 = vmul.f32 1.0, %v1218
    %v1220 = vrcp.pop %v1213
    %v1221 = vmul.f32 1.0, %v1220
    %v1222 = vtanh.pop %v1194
    %v1223 = vtanh.pop %v1195
    %v1224 = vtanh.pop %v1196
    %v1225 = vtanh.pop %v1197
    %v1226 = vmul.f32 %v1215, %v1069
    %v1227 = vmul.f32 %v1217, %v1070
    %v1228 = vmul.f32 %v1219, %v1071
    %v1229 = vmul.f32 %v1221, %v1072
    %1234 = vrot.lane.b32.xlu0 %v1222, 32
    %v1235 = vpop.permute.xlu0 %1234
    %1236 = vrot.lane.b32.xlu0 %v1223, 32
    %v1237 = vpop.permute.xlu0 %1236
    %1238 = vrot.lane.b32.xlu0 %v1224, 32
    %v1239 = vpop.permute.xlu0 %1238
    %1240 = vrot.lane.b32.xlu0 %v1225, 32
    %v1241 = vpop.permute.xlu0 %1240
    %v1246 = vmul.f32 %v1215, %v1235
    %v1247 = vmul.f32 %v1217, %v1237
    %v1248 = vmul.f32 %v1219, %v1239
    %v1249 = vmul.f32 %v1221, %v1241
    %1254 = vrot.lane.b32.xlu0 %v1246, 32
    %v1255 = vpop.permute.xlu0 %1254
    %1256 = vrot.lane.b32.xlu0 %v1247, 32
    %v1257 = vpop.permute.xlu0 %1256
    %1258 = vrot.lane.b32.xlu0 %v1248, 32
    %v1259 = vpop.permute.xlu0 %1258
    %1260 = vrot.lane.b32.xlu0 %v1249, 32
    %v1261 = vpop.permute.xlu0 %1260
    %v1266 = vadd.f32 %v1226, %v1255
    %v1267 = vadd.f32 %v1227, %v1257
    %v1268 = vadd.f32 %v1228, %v1259
    %v1269 = vadd.f32 %v1229, %v1261
    %v1270 = vtanh.pop %v1266
    %v1271 = vtanh.pop %v1267
    %v1272 = vtanh.pop %v1268
    %v1273 = vtanh.pop %v1269
    %1278 = vrot.lane.b32.xlu0 %v1270, 32
    %v1279 = vpop.permute.xlu0 %1278
    %1280 = vrot.lane.b32.xlu0 %v1271, 32
    %v1281 = vpop.permute.xlu0 %1280
    %1282 = vrot.lane.b32.xlu0 %v1272, 32
    %v1283 = vpop.permute.xlu0 %1282
    %1284 = vrot.lane.b32.xlu0 %v1273, 32
    %v1285 = vpop.permute.xlu0 %1284
    %v1290 = vmul.f32 %v1215, %v1279
    %v1291 = vmul.f32 %v1217, %v1281
    %v1292 = vmul.f32 %v1219, %v1283
    %v1293 = vmul.f32 %v1221, %v1285
    %v1294 = vpack.c.bf16 %v1291, %v1290
    %v1295 = vpack.c.bf16 %v1293, %v1292
    %v1298 = vunpack.c.l.b16 %v1294
    %v1299 = vunpack.c.h.b16 %v1294
    %v1300 = vunpack.c.l.b16 %v1295
    %v1301 = vunpack.c.h.b16 %v1295
    %v1302 = vpack.c.b16 %v1298, %v1298
    %v1303 = vpack.c.b16 %v1299, %v1299
    %v1304 = vpack.c.b16 %v1300, %v1300
    %v1305 = vpack.c.b16 %v1301, %v1301
    %1306 = vrot.lane.b32.xlu0 %v1302, 64
    %v1307 = vpop.permute.xlu0 %1306
    %1308 = vrot.lane.b32.xlu0 %v1303, 64
    %v1309 = vpop.permute.xlu0 %1308
    %1310 = vrot.lane.b32.xlu0 %v1304, 64
    %v1311 = vpop.permute.xlu0 %1310
    %1312 = vrot.lane.b32.xlu0 %v1305, 64
    %v1313 = vpop.permute.xlu0 %1312
    %s1318 = scalar_lea.vmem [#allocation3], 48
    %1319 = vst.msk [vmem:[%s1318] sm:$0xf] %vm727, %v1307
    %1320 = vst.msk [vmem:[%s1318 + $0x4] sm:$0xf] %vm727, %v1309
    %1321 = vst.msk [vmem:[%s1318 + $0x8] sm:$0xf] %vm727, %v1311
    %1322 = vst.msk [vmem:[%s1318 + $0xc] sm:$0xf] %vm727, %v1313
    %s1323 = scalar_lea.vmem [#allocation2], 64
    %v1324 = vld [vmem:[%s1323] sm:$0xf]
    %v1325 = vld [vmem:[%s1323 + $0x4] sm:$0xf]
    %v1326 = vld [vmem:[%s1323 + $0x8] sm:$0xf]
    %v1327 = vld [vmem:[%s1323 + $0xc] sm:$0xf]
    %v1328 = vunpack.c.l.bf16 %v1324
    %v1329 = vunpack.c.l.bf16 %v1325
    %v1330 = vunpack.c.l.bf16 %v1326
    %v1331 = vunpack.c.l.bf16 %v1327
    %1332 = vrot.lane.b32.xlu0 %v1294, 64
    %v1333 = vpop.permute.xlu0 %1332
    %1334 = vrot.lane.b32.xlu0 %v1295, 64
    %v1335 = vpop.permute.xlu0 %1334
    %v1337 = vsel %vm157, %v1333, 0
    %v1340 = vsel %vm157, %v1335, 0
    %1342 = vmatprep.subr.bf16.mxu0 0
    %1343 = vmatpush1.bf16.msra.mxu0 0
    %1344 = vmatprep.subr.bf16.mxu0 0
    %1345 = vmatpush1.bf16.msra.mxu0 0
    %1346 = vmatprep.subr.bf16.mxu0 0
    %1347 = vmatpush1.bf16.msra.mxu0 0
    %1348 = vmatprep.subr.bf16.mxu0 0
    %1349 = vmatpush1.bf16.msra.mxu0 0
    %1350 = vmatprep.subr.bf16.mxu0 0
    %1351 = vmatpush1.bf16.msra.mxu0 0
    %1352 = vmatprep.subr.bf16.mxu0 0
    %1353 = vmatpush1.bf16.msra.mxu0 0
    %1354 = vmatprep.subr.bf16.mxu0 0
    %1355 = vmatpush1.bf16.msra.mxu0 %v548
    %1356 = vmatprep.subr.bf16.mxu0 0
    %1357 = vmatpush1.bf16.msra.mxu0 %v547
    %1358 = vmatprep.subr.bf16.mxu0 0
    %1359 = vmatpush2.bf16.msra.mxu0 0
    %1360 = vmatprep.subr.bf16.mxu0 0
    %1361 = vmatpush2.bf16.msra.mxu0 0
    %1362 = vmatprep.subr.bf16.mxu0 0
    %1363 = vmatpush2.bf16.msra.mxu0 0
    %1364 = vmatprep.subr.bf16.mxu0 0
    %1365 = vmatpush2.bf16.msra.mxu0 0
    %1366 = vmatprep.subr.bf16.mxu0 0
    %1367 = vmatpush2.bf16.msra.mxu0 0
    %1368 = vmatprep.subr.bf16.mxu0 0
    %1369 = vmatpush2.bf16.msra.mxu0 0
    %1370 = vmatprep.subr.bf16.mxu0 0
    %1371 = vmatpush2.bf16.msra.mxu0 0
    %1372 = vmatprep.subr.bf16.mxu0 0
    %1373 = vmatpush2.bf16.msra.mxu0 0
    %1374 = vmatprep.mubr.bf16.mxu0 0
    %1375 = vmatmul.mubr.bf16.gmra.mxu0 %v1337
    %v1376 = vpop.f32.mrf.mxu0
    %v1377 = vadd.f32 0.0, %v1376
    %v1378 = vpop.f32.mrf.mxu0
    %v1379 = vpop.f32.mrf.mxu0
    %v1380 = vadd.f32 0.0, %v1379
    %v1381 = vpop.f32.mrf.mxu0
    %1382 = vmatprep.mubr.bf16.mxu0 0
    %1383 = vmatmul.mubr.bf16.gmra.mxu0 %v1340
    %v1384 = vpop.f32.mrf.mxu0
    %v1385 = vadd.f32 0.0, %v1384
    %v1386 = vpop.f32.mrf.mxu0
    %v1387 = vpop.f32.mrf.mxu0
    %v1388 = vadd.f32 0.0, %v1387
    %v1389 = vpop.f32.mrf.mxu0
    %1390 = vdwg.mxu0
    %v1391 = vadd.f32 %v1328, %v1377
    %v1392 = vadd.f32 %v1329, %v1380
    %v1393 = vadd.f32 %v1330, %v1385
    %v1394 = vadd.f32 %v1331, %v1388
    %v1395 = vxor.u32 %v1391, 2147483648
    %v1396 = vxor.u32 %v1392, 2147483648
    %v1397 = vxor.u32 %v1393, 2147483648
    %v1398 = vxor.u32 %v1394, 2147483648
    %v1399 = vmul.f32 %v1395, 1.442695
    %v1400 = vpow.pop %v1399
    %v1401 = vmul.f32 %v1396, 1.442695
    %v1402 = vpow.pop %v1401
    %v1403 = vmul.f32 %v1397, 1.442695
    %v1404 = vpow.pop %v1403
    %v1405 = vmul.f32 %v1398, 1.442695
    %v1406 = vpow.pop %v1405
    %v1407 = vadd.f32 %v1400, 1.0
    %v1408 = vadd.f32 %v1402, 1.0
    %v1409 = vadd.f32 %v1404, 1.0
    %v1410 = vadd.f32 %v1406, 1.0
    %v1411 = vrcp.pop %v1407
    %v1412 = vmul.f32 1.0, %v1411
    %v1413 = vrcp.pop %v1408
    %v1414 = vmul.f32 1.0, %v1413
    %v1415 = vrcp.pop %v1409
    %v1416 = vmul.f32 1.0, %v1415
    %v1417 = vrcp.pop %v1410
    %v1418 = vmul.f32 1.0, %v1417
    %v1419 = vtanh.pop %v1391
    %v1420 = vtanh.pop %v1392
    %v1421 = vtanh.pop %v1393
    %v1422 = vtanh.pop %v1394
    %v1423 = vmul.f32 %v1412, %v1266
    %v1424 = vmul.f32 %v1414, %v1267
    %v1425 = vmul.f32 %v1416, %v1268
    %v1426 = vmul.f32 %v1418, %v1269
    %1431 = vrot.lane.b32.xlu0 %v1419, 32
    %v1432 = vpop.permute.xlu0 %1431
    %1433 = vrot.lane.b32.xlu0 %v1420, 32
    %v1434 = vpop.permute.xlu0 %1433
    %1435 = vrot.lane.b32.xlu0 %v1421, 32
    %v1436 = vpop.permute.xlu0 %1435
    %1437 = vrot.lane.b32.xlu0 %v1422, 32
    %v1438 = vpop.permute.xlu0 %1437
    %v1443 = vmul.f32 %v1412, %v1432
    %v1444 = vmul.f32 %v1414, %v1434
    %v1445 = vmul.f32 %v1416, %v1436
    %v1446 = vmul.f32 %v1418, %v1438
    %1451 = vrot.lane.b32.xlu0 %v1443, 32
    %v1452 = vpop.permute.xlu0 %1451
    %1453 = vrot.lane.b32.xlu0 %v1444, 32
    %v1454 = vpop.permute.xlu0 %1453
    %1455 = vrot.lane.b32.xlu0 %v1445, 32
    %v1456 = vpop.permute.xlu0 %1455
    %1457 = vrot.lane.b32.xlu0 %v1446, 32
    %v1458 = vpop.permute.xlu0 %1457
    %v1463 = vadd.f32 %v1423, %v1452
    %v1464 = vadd.f32 %v1424, %v1454
    %v1465 = vadd.f32 %v1425, %v1456
    %v1466 = vadd.f32 %v1426, %v1458
    %v1467 = vtanh.pop %v1463
    %v1468 = vtanh.pop %v1464
    %v1469 = vtanh.pop %v1465
    %v1470 = vtanh.pop %v1466
    %1475 = vrot.lane.b32.xlu0 %v1467, 32
    %v1476 = vpop.permute.xlu0 %1475
    %1477 = vrot.lane.b32.xlu0 %v1468, 32
    %v1478 = vpop.permute.xlu0 %1477
    %1479 = vrot.lane.b32.xlu0 %v1469, 32
    %v1480 = vpop.permute.xlu0 %1479
    %1481 = vrot.lane.b32.xlu0 %v1470, 32
    %v1482 = vpop.permute.xlu0 %1481
    %v1487 = vmul.f32 %v1412, %v1476
    %v1488 = vmul.f32 %v1414, %v1478
    %v1489 = vmul.f32 %v1416, %v1480
    %v1490 = vmul.f32 %v1418, %v1482
    %v1491 = vpack.c.bf16 %v1488, %v1487
    %v1492 = vpack.c.bf16 %v1490, %v1489
    %v1495 = vunpack.c.l.b16 %v1491
    %v1496 = vunpack.c.h.b16 %v1491
    %v1497 = vunpack.c.l.b16 %v1492
    %v1498 = vunpack.c.h.b16 %v1492
    %v1499 = vpack.c.b16 %v1495, %v1495
    %v1500 = vpack.c.b16 %v1496, %v1496
    %v1501 = vpack.c.b16 %v1497, %v1497
    %v1502 = vpack.c.b16 %v1498, %v1498
    %1503 = vrot.lane.b32.xlu0 %v1499, 64
    %v1504 = vpop.permute.xlu0 %1503
    %1505 = vrot.lane.b32.xlu0 %v1500, 64
    %v1506 = vpop.permute.xlu0 %1505
    %1507 = vrot.lane.b32.xlu0 %v1501, 64
    %v1508 = vpop.permute.xlu0 %1507
    %1509 = vrot.lane.b32.xlu0 %v1502, 64
    %v1510 = vpop.permute.xlu0 %1509
    %s1515 = scalar_lea.vmem [#allocation3], 64
    %1516 = vst.msk [vmem:[%s1515] sm:$0xf] %vm727, %v1504
    %1517 = vst.msk [vmem:[%s1515 + $0x4] sm:$0xf] %vm727, %v1506
    %1518 = vst.msk [vmem:[%s1515 + $0x8] sm:$0xf] %vm727, %v1508
    %1519 = vst.msk [vmem:[%s1515 + $0xc] sm:$0xf] %vm727, %v1510
    %s1520 = scalar_lea.vmem [#allocation2], 80
    %v1521 = vld [vmem:[%s1520] sm:$0xf]
    %v1522 = vld [vmem:[%s1520 + $0x4] sm:$0xf]
    %v1523 = vld [vmem:[%s1520 + $0x8] sm:$0xf]
    %v1524 = vld [vmem:[%s1520 + $0xc] sm:$0xf]
    %v1525 = vunpack.c.l.bf16 %v1521
    %v1526 = vunpack.c.l.bf16 %v1522
    %v1527 = vunpack.c.l.bf16 %v1523
    %v1528 = vunpack.c.l.bf16 %v1524
    %1529 = vrot.lane.b32.xlu0 %v1491, 64
    %v1530 = vpop.permute.xlu0 %1529
    %1531 = vrot.lane.b32.xlu0 %v1492, 64
    %v1532 = vpop.permute.xlu0 %1531
    %v1534 = vsel %vm157, %v1530, 0
    %v1537 = vsel %vm157, %v1532, 0
    %1539 = vmatprep.subr.bf16.mxu0 0
    %1540 = vmatpush1.bf16.msra.mxu0 0
    %1541 = vmatprep.subr.bf16.mxu0 0
    %1542 = vmatpush1.bf16.msra.mxu0 0
    %1543 = vmatprep.subr.bf16.mxu0 0
    %1544 = vmatpush1.bf16.msra.mxu0 0
    %1545 = vmatprep.subr.bf16.mxu0 0
    %1546 = vmatpush1.bf16.msra.mxu0 0
    %1547 = vmatprep.subr.bf16.mxu0 0
    %1548 = vmatpush1.bf16.msra.mxu0 0
    %1549 = vmatprep.subr.bf16.mxu0 0
    %1550 = vmatpush1.bf16.msra.mxu0 0
    %1551 = vmatprep.subr.bf16.mxu0 0
    %1552 = vmatpush1.bf16.msra.mxu0 %v548
    %1553 = vmatprep.subr.bf16.mxu0 0
    %1554 = vmatpush1.bf16.msra.mxu0 %v547
    %1555 = vmatprep.subr.bf16.mxu0 0
    %1556 = vmatpush2.bf16.msra.mxu0 0
    %1557 = vmatprep.subr.bf16.mxu0 0
    %1558 = vmatpush2.bf16.msra.mxu0 0
    %1559 = vmatprep.subr.bf16.mxu0 0
    %1560 = vmatpush2.bf16.msra.mxu0 0
    %1561 = vmatprep.subr.bf16.mxu0 0
    %1562 = vmatpush2.bf16.msra.mxu0 0
    %1563 = vmatprep.subr.bf16.mxu0 0
    %1564 = vmatpush2.bf16.msra.mxu0 0
    %1565 = vmatprep.subr.bf16.mxu0 0
    %1566 = vmatpush2.bf16.msra.mxu0 0
    %1567 = vmatprep.subr.bf16.mxu0 0
    %1568 = vmatpush2.bf16.msra.mxu0 0
    %1569 = vmatprep.subr.bf16.mxu0 0
    %1570 = vmatpush2.bf16.msra.mxu0 0
    %1571 = vmatprep.mubr.bf16.mxu0 0
    %1572 = vmatmul.mubr.bf16.gmra.mxu0 %v1534
    %v1573 = vpop.f32.mrf.mxu0
    %v1574 = vadd.f32 0.0, %v1573
    %v1575 = vpop.f32.mrf.mxu0
    %v1576 = vpop.f32.mrf.mxu0
    %v1577 = vadd.f32 0.0, %v1576
    %v1578 = vpop.f32.mrf.mxu0
    %1579 = vmatprep.mubr.bf16.mxu0 0
    %1580 = vmatmul.mubr.bf16.gmra.mxu0 %v1537
    %v1581 = vpop.f32.mrf.mxu0
    %v1582 = vadd.f32 0.0, %v1581
    %v1583 = vpop.f32.mrf.mxu0
    %v1584 = vpop.f32.mrf.mxu0
    %v1585 = vadd.f32 0.0, %v1584
    %v1586 = vpop.f32.mrf.mxu0
    %1587 = vdwg.mxu0
    %v1588 = vadd.f32 %v1525, %v1574
    %v1589 = vadd.f32 %v1526, %v1577
    %v1590 = vadd.f32 %v1527, %v1582
    %v1591 = vadd.f32 %v1528, %v1585
    %v1592 = vxor.u32 %v1588, 2147483648
    %v1593 = vxor.u32 %v1589, 2147483648
    %v1594 = vxor.u32 %v1590, 2147483648
    %v1595 = vxor.u32 %v1591, 2147483648
    %v1596 = vmul.f32 %v1592, 1.442695
    %v1597 = vpow.pop %v1596
    %v1598 = vmul.f32 %v1593, 1.442695
    %v1599 = vpow.pop %v1598
    %v1600 = vmul.f32 %v1594, 1.442695
    %v1601 = vpow.pop %v1600
    %v1602 = vmul.f32 %v1595, 1.442695
    %v1603 = vpow.pop %v1602
    %v1604 = vadd.f32 %v1597, 1.0
    %v1605 = vadd.f32 %v1599, 1.0
    %v1606 = vadd.f32 %v1601, 1.0
    %v1607 = vadd.f32 %v1603, 1.0
    %v1608 = vrcp.pop %v1604
    %v1609 = vmul.f32 1.0, %v1608
    %v1610 = vrcp.pop %v1605
    %v1611 = vmul.f32 1.0, %v1610
    %v1612 = vrcp.pop %v1606
    %v1613 = vmul.f32 1.0, %v1612
    %v1614 = vrcp.pop %v1607
    %v1615 = vmul.f32 1.0, %v1614
    %v1616 = vtanh.pop %v1588
    %v1617 = vtanh.pop %v1589
    %v1618 = vtanh.pop %v1590
    %v1619 = vtanh.pop %v1591
    %v1620 = vmul.f32 %v1609, %v1463
    %v1621 = vmul.f32 %v1611, %v1464
    %v1622 = vmul.f32 %v1613, %v1465
    %v1623 = vmul.f32 %v1615, %v1466
    %1628 = vrot.lane.b32.xlu0 %v1616, 32
    %v1629 = vpop.permute.xlu0 %1628
    %1630 = vrot.lane.b32.xlu0 %v1617, 32
    %v1631 = vpop.permute.xlu0 %1630
    %1632 = vrot.lane.b32.xlu0 %v1618, 32
    %v1633 = vpop.permute.xlu0 %1632
    %1634 = vrot.lane.b32.xlu0 %v1619, 32
    %v1635 = vpop.permute.xlu0 %1634
    %v1640 = vmul.f32 %v1609, %v1629
    %v1641 = vmul.f32 %v1611, %v1631
    %v1642 = vmul.f32 %v1613, %v1633
    %v1643 = vmul.f32 %v1615, %v1635
    %1648 = vrot.lane.b32.xlu0 %v1640, 32
    %v1649 = vpop.permute.xlu0 %1648
    %1650 = vrot.lane.b32.xlu0 %v1641, 32
    %v1651 = vpop.permute.xlu0 %1650
    %1652 = vrot.lane.b32.xlu0 %v1642, 32
    %v1653 = vpop.permute.xlu0 %1652
    %1654 = vrot.lane.b32.xlu0 %v1643, 32
    %v1655 = vpop.permute.xlu0 %1654
    %v1660 = vadd.f32 %v1620, %v1649
    %v1661 = vadd.f32 %v1621, %v1651
    %v1662 = vadd.f32 %v1622, %v1653
    %v1663 = vadd.f32 %v1623, %v1655
    %v1664 = vtanh.pop %v1660
    %v1665 = vtanh.pop %v1661
    %v1666 = vtanh.pop %v1662
    %v1667 = vtanh.pop %v1663
    %1672 = vrot.lane.b32.xlu0 %v1664, 32
    %v1673 = vpop.permute.xlu0 %1672
    %1674 = vrot.lane.b32.xlu0 %v1665, 32
    %v1675 = vpop.permute.xlu0 %1674
    %1676 = vrot.lane.b32.xlu0 %v1666, 32
    %v1677 = vpop.permute.xlu0 %1676
    %1678 = vrot.lane.b32.xlu0 %v1667, 32
    %v1679 = vpop.permute.xlu0 %1678
    %v1684 = vmul.f32 %v1609, %v1673
    %v1685 = vmul.f32 %v1611, %v1675
    %v1686 = vmul.f32 %v1613, %v1677
    %v1687 = vmul.f32 %v1615, %v1679
    %v1688 = vpack.c.bf16 %v1685, %v1684
    %v1689 = vpack.c.bf16 %v1687, %v1686
    %v1692 = vunpack.c.l.b16 %v1688
    %v1693 = vunpack.c.h.b16 %v1688
    %v1694 = vunpack.c.l.b16 %v1689
    %v1695 = vunpack.c.h.b16 %v1689
    %v1696 = vpack.c.b16 %v1692, %v1692
    %v1697 = vpack.c.b16 %v1693, %v1693
    %v1698 = vpack.c.b16 %v1694, %v1694
    %v1699 = vpack.c.b16 %v1695, %v1695
    %1700 = vrot.lane.b32.xlu0 %v1696, 64
    %v1701 = vpop.permute.xlu0 %1700
    %1702 = vrot.lane.b32.xlu0 %v1697, 64
    %v1703 = vpop.permute.xlu0 %1702
    %1704 = vrot.lane.b32.xlu0 %v1698, 64
    %v1705 = vpop.permute.xlu0 %1704
    %1706 = vrot.lane.b32.xlu0 %v1699, 64
    %v1707 = vpop.permute.xlu0 %1706
    %s1712 = scalar_lea.vmem [#allocation3], 80
    %1713 = vst.msk [vmem:[%s1712] sm:$0xf] %vm727, %v1701
    %1714 = vst.msk [vmem:[%s1712 + $0x4] sm:$0xf] %vm727, %v1703
    %1715 = vst.msk [vmem:[%s1712 + $0x8] sm:$0xf] %vm727, %v1705
    %1716 = vst.msk [vmem:[%s1712 + $0xc] sm:$0xf] %vm727, %v1707
    %s1717 = scalar_lea.vmem [#allocation2], 96
    %v1718 = vld [vmem:[%s1717] sm:$0xf]
    %v1719 = vld [vmem:[%s1717 + $0x4] sm:$0xf]
    %v1720 = vld [vmem:[%s1717 + $0x8] sm:$0xf]
    %v1721 = vld [vmem:[%s1717 + $0xc] sm:$0xf]
    %v1722 = vunpack.c.l.bf16 %v1718
    %v1723 = vunpack.c.l.bf16 %v1719
    %v1724 = vunpack.c.l.bf16 %v1720
    %v1725 = vunpack.c.l.bf16 %v1721
    %1726 = vrot.lane.b32.xlu0 %v1688, 64
    %v1727 = vpop.permute.xlu0 %1726
    %1728 = vrot.lane.b32.xlu0 %v1689, 64
    %v1729 = vpop.permute.xlu0 %1728
    %v1731 = vsel %vm157, %v1727, 0
    %v1734 = vsel %vm157, %v1729, 0
    %1736 = vmatprep.subr.bf16.mxu0 0
    %1737 = vmatpush1.bf16.msra.mxu0 0
    %1738 = vmatprep.subr.bf16.mxu0 0
    %1739 = vmatpush1.bf16.msra.mxu0 0
    %1740 = vmatprep.subr.bf16.mxu0 0
    %1741 = vmatpush1.bf16.msra.mxu0 0
    %1742 = vmatprep.subr.bf16.mxu0 0
    %1743 = vmatpush1.bf16.msra.mxu0 0
    %1744 = vmatprep.subr.bf16.mxu0 0
    %1745 = vmatpush1.bf16.msra.mxu0 0
    %1746 = vmatprep.subr.bf16.mxu0 0
    %1747 = vmatpush1.bf16.msra.mxu0 0
    %1748 = vmatprep.subr.bf16.mxu0 0
    %1749 = vmatpush1.bf16.msra.mxu0 %v548
    %1750 = vmatprep.subr.bf16.mxu0 0
    %1751 = vmatpush1.bf16.msra.mxu0 %v547
    %1752 = vmatprep.subr.bf16.mxu0 0
    %1753 = vmatpush2.bf16.msra.mxu0 0
    %1754 = vmatprep.subr.bf16.mxu0 0
    %1755 = vmatpush2.bf16.msra.mxu0 0
    %1756 = vmatprep.subr.bf16.mxu0 0
    %1757 = vmatpush2.bf16.msra.mxu0 0
    %1758 = vmatprep.subr.bf16.mxu0 0
    %1759 = vmatpush2.bf16.msra.mxu0 0
    %1760 = vmatprep.subr.bf16.mxu0 0
    %1761 = vmatpush2.bf16.msra.mxu0 0
    %1762 = vmatprep.subr.bf16.mxu0 0
    %1763 = vmatpush2.bf16.msra.mxu0 0
    %1764 = vmatprep.subr.bf16.mxu0 0
    %1765 = vmatpush2.bf16.msra.mxu0 0
    %1766 = vmatprep.subr.bf16.mxu0 0
    %1767 = vmatpush2.bf16.msra.mxu0 0
    %1768 = vmatprep.mubr.bf16.mxu0 0
    %1769 = vmatmul.mubr.bf16.gmra.mxu0 %v1731
    %v1770 = vpop.f32.mrf.mxu0
    %v1771 = vadd.f32 0.0, %v1770
    %v1772 = vpop.f32.mrf.mxu0
    %v1773 = vpop.f32.mrf.mxu0
    %v1774 = vadd.f32 0.0, %v1773
    %v1775 = vpop.f32.mrf.mxu0
    %1776 = vmatprep.mubr.bf16.mxu0 0
    %1777 = vmatmul.mubr.bf16.gmra.mxu0 %v1734
    %v1778 = vpop.f32.mrf.mxu0
    %v1779 = vadd.f32 0.0, %v1778
    %v1780 = vpop.f32.mrf.mxu0
    %v1781 = vpop.f32.mrf.mxu0
    %v1782 = vadd.f32 0.0, %v1781
    %v1783 = vpop.f32.mrf.mxu0
    %1784 = vdwg.mxu0
    %v1785 = vadd.f32 %v1722, %v1771
    %v1786 = vadd.f32 %v1723, %v1774
    %v1787 = vadd.f32 %v1724, %v1779
    %v1788 = vadd.f32 %v1725, %v1782
    %v1789 = vxor.u32 %v1785, 2147483648
    %v1790 = vxor.u32 %v1786, 2147483648
    %v1791 = vxor.u32 %v1787, 2147483648
    %v1792 = vxor.u32 %v1788, 2147483648
    %v1793 = vmul.f32 %v1789, 1.442695
    %v1794 = vpow.pop %v1793
    %v1795 = vmul.f32 %v1790, 1.442695
    %v1796 = vpow.pop %v1795
    %v1797 = vmul.f32 %v1791, 1.442695
    %v1798 = vpow.pop %v1797
    %v1799 = vmul.f32 %v1792, 1.442695
    %v1800 = vpow.pop %v1799
    %v1801 = vadd.f32 %v1794, 1.0
    %v1802 = vadd.f32 %v1796, 1.0
    %v1803 = vadd.f32 %v1798, 1.0
    %v1804 = vadd.f32 %v1800, 1.0
    %v1805 = vrcp.pop %v1801
    %v1806 = vmul.f32 1.0, %v1805
    %v1807 = vrcp.pop %v1802
    %v1808 = vmul.f32 1.0, %v1807
    %v1809 = vrcp.pop %v1803
    %v1810 = vmul.f32 1.0, %v1809
    %v1811 = vrcp.pop %v1804
    %v1812 = vmul.f32 1.0, %v1811
    %v1813 = vtanh.pop %v1785
    %v1814 = vtanh.pop %v1786
    %v1815 = vtanh.pop %v1787
    %v1816 = vtanh.pop %v1788
    %v1817 = vmul.f32 %v1806, %v1660
    %v1818 = vmul.f32 %v1808, %v1661
    %v1819 = vmul.f32 %v1810, %v1662
    %v1820 = vmul.f32 %v1812, %v1663
    %1825 = vrot.lane.b32.xlu0 %v1813, 32
    %v1826 = vpop.permute.xlu0 %1825
    %1827 = vrot.lane.b32.xlu0 %v1814, 32
    %v1828 = vpop.permute.xlu0 %1827
    %1829 = vrot.lane.b32.xlu0 %v1815, 32
    %v1830 = vpop.permute.xlu0 %1829
    %1831 = vrot.lane.b32.xlu0 %v1816, 32
    %v1832 = vpop.permute.xlu0 %1831
    %v1837 = vmul.f32 %v1806, %v1826
    %v1838 = vmul.f32 %v1808, %v1828
    %v1839 = vmul.f32 %v1810, %v1830
    %v1840 = vmul.f32 %v1812, %v1832
    %1845 = vrot.lane.b32.xlu0 %v1837, 32
    %v1846 = vpop.permute.xlu0 %1845
    %1847 = vrot.lane.b32.xlu0 %v1838, 32
    %v1848 = vpop.permute.xlu0 %1847
    %1849 = vrot.lane.b32.xlu0 %v1839, 32
    %v1850 = vpop.permute.xlu0 %1849
    %1851 = vrot.lane.b32.xlu0 %v1840, 32
    %v1852 = vpop.permute.xlu0 %1851
    %v1857 = vadd.f32 %v1817, %v1846
    %v1858 = vadd.f32 %v1818, %v1848
    %v1859 = vadd.f32 %v1819, %v1850
    %v1860 = vadd.f32 %v1820, %v1852
    %v1861 = vtanh.pop %v1857
    %v1862 = vtanh.pop %v1858
    %v1863 = vtanh.pop %v1859
    %v1864 = vtanh.pop %v1860
    %1869 = vrot.lane.b32.xlu0 %v1861, 32
    %v1870 = vpop.permute.xlu0 %1869
    %1871 = vrot.lane.b32.xlu0 %v1862, 32
    %v1872 = vpop.permute.xlu0 %1871
    %1873 = vrot.lane.b32.xlu0 %v1863, 32
    %v1874 = vpop.permute.xlu0 %1873
    %1875 = vrot.lane.b32.xlu0 %v1864, 32
    %v1876 = vpop.permute.xlu0 %1875
    %v1881 = vmul.f32 %v1806, %v1870
    %v1882 = vmul.f32 %v1808, %v1872
    %v1883 = vmul.f32 %v1810, %v1874
    %v1884 = vmul.f32 %v1812, %v1876
    %v1885 = vpack.c.bf16 %v1882, %v1881
    %v1886 = vpack.c.bf16 %v1884, %v1883
    %v1889 = vunpack.c.l.b16 %v1885
    %v1890 = vunpack.c.h.b16 %v1885
    %v1891 = vunpack.c.l.b16 %v1886
    %v1892 = vunpack.c.h.b16 %v1886
    %v1893 = vpack.c.b16 %v1889, %v1889
    %v1894 = vpack.c.b16 %v1890, %v1890
    %v1895 = vpack.c.b16 %v1891, %v1891
    %v1896 = vpack.c.b16 %v1892, %v1892
    %1897 = vrot.lane.b32.xlu0 %v1893, 64
    %v1898 = vpop.permute.xlu0 %1897
    %1899 = vrot.lane.b32.xlu0 %v1894, 64
    %v1900 = vpop.permute.xlu0 %1899
    %1901 = vrot.lane.b32.xlu0 %v1895, 64
    %v1902 = vpop.permute.xlu0 %1901
    %1903 = vrot.lane.b32.xlu0 %v1896, 64
    %v1904 = vpop.permute.xlu0 %1903
    %s1909 = scalar_lea.vmem [#allocation3], 96
    %1910 = vst.msk [vmem:[%s1909] sm:$0xf] %vm727, %v1898
    %1911 = vst.msk [vmem:[%s1909 + $0x4] sm:$0xf] %vm727, %v1900
    %1912 = vst.msk [vmem:[%s1909 + $0x8] sm:$0xf] %vm727, %v1902
    %1913 = vst.msk [vmem:[%s1909 + $0xc] sm:$0xf] %vm727, %v1904
    %s1914 = scalar_lea.vmem [#allocation2], 112
    %v1915 = vld [vmem:[%s1914] sm:$0xf]
    %v1916 = vld [vmem:[%s1914 + $0x4] sm:$0xf]
    %v1917 = vld [vmem:[%s1914 + $0x8] sm:$0xf]
    %v1918 = vld [vmem:[%s1914 + $0xc] sm:$0xf]
    %v1919 = vunpack.c.l.bf16 %v1915
    %v1920 = vunpack.c.l.bf16 %v1916
    %v1921 = vunpack.c.l.bf16 %v1917
    %v1922 = vunpack.c.l.bf16 %v1918
    %1923 = vrot.lane.b32.xlu0 %v1885, 64
    %v1924 = vpop.permute.xlu0 %1923
    %1925 = vrot.lane.b32.xlu0 %v1886, 64
    %v1926 = vpop.permute.xlu0 %1925
    %v1928 = vsel %vm157, %v1924, 0
    %v1931 = vsel %vm157, %v1926, 0
    %1933 = vmatprep.subr.bf16.mxu0 0
    %1934 = vmatpush1.bf16.msra.mxu0 0
    %1935 = vmatprep.subr.bf16.mxu0 0
    %1936 = vmatpush1.bf16.msra.mxu0 0
    %1937 = vmatprep.subr.bf16.mxu0 0
    %1938 = vmatpush1.bf16.msra.mxu0 0
    %1939 = vmatprep.subr.bf16.mxu0 0
    %1940 = vmatpush1.bf16.msra.mxu0 0
    %1941 = vmatprep.subr.bf16.mxu0 0
    %1942 = vmatpush1.bf16.msra.mxu0 0
    %1943 = vmatprep.subr.bf16.mxu0 0
    %1944 = vmatpush1.bf16.msra.mxu0 0
    %1945 = vmatprep.subr.bf16.mxu0 0
    %1946 = vmatpush1.bf16.msra.mxu0 %v548
    %1947 = vmatprep.subr.bf16.mxu0 0
    %1948 = vmatpush1.bf16.msra.mxu0 %v547
    %1949 = vmatprep.subr.bf16.mxu0 0
    %1950 = vmatpush2.bf16.msra.mxu0 0
    %1951 = vmatprep.subr.bf16.mxu0 0
    %1952 = vmatpush2.bf16.msra.mxu0 0
    %1953 = vmatprep.subr.bf16.mxu0 0
    %1954 = vmatpush2.bf16.msra.mxu0 0
    %1955 = vmatprep.subr.bf16.mxu0 0
    %1956 = vmatpush2.bf16.msra.mxu0 0
    %1957 = vmatprep.subr.bf16.mxu0 0
    %1958 = vmatpush2.bf16.msra.mxu0 0
    %1959 = vmatprep.subr.bf16.mxu0 0
    %1960 = vmatpush2.bf16.msra.mxu0 0
    %1961 = vmatprep.subr.bf16.mxu0 0
    %1962 = vmatpush2.bf16.msra.mxu0 0
    %1963 = vmatprep.subr.bf16.mxu0 0
    %1964 = vmatpush2.bf16.msra.mxu0 0
    %1965 = vmatprep.mubr.bf16.mxu0 0
    %1966 = vmatmul.mubr.bf16.gmra.mxu0 %v1928
    %v1967 = vpop.f32.mrf.mxu0
    %v1968 = vadd.f32 0.0, %v1967
    %v1969 = vpop.f32.mrf.mxu0
    %v1970 = vpop.f32.mrf.mxu0
    %v1971 = vadd.f32 0.0, %v1970
    %v1972 = vpop.f32.mrf.mxu0
    %1973 = vmatprep.mubr.bf16.mxu0 0
    %1974 = vmatmul.mubr.bf16.gmra.mxu0 %v1931
    %v1975 = vpop.f32.mrf.mxu0
    %v1976 = vadd.f32 0.0, %v1975
    %v1977 = vpop.f32.mrf.mxu0
    %v1978 = vpop.f32.mrf.mxu0
    %v1979 = vadd.f32 0.0, %v1978
    %v1980 = vpop.f32.mrf.mxu0
    %1981 = vdwg.mxu0
    %v1982 = vadd.f32 %v1919, %v1968
    %v1983 = vadd.f32 %v1920, %v1971
    %v1984 = vadd.f32 %v1921, %v1976
    %v1985 = vadd.f32 %v1922, %v1979
    %v1986 = vxor.u32 %v1982, 2147483648
    %v1987 = vxor.u32 %v1983, 2147483648
    %v1988 = vxor.u32 %v1984, 2147483648
    %v1989 = vxor.u32 %v1985, 2147483648
    %v1990 = vmul.f32 %v1986, 1.442695
    %v1991 = vpow.pop %v1990
    %v1992 = vmul.f32 %v1987, 1.442695
    %v1993 = vpow.pop %v1992
    %v1994 = vmul.f32 %v1988, 1.442695
    %v1995 = vpow.pop %v1994
    %v1996 = vmul.f32 %v1989, 1.442695
    %v1997 = vpow.pop %v1996
    %v1998 = vadd.f32 %v1991, 1.0
    %v1999 = vadd.f32 %v1993, 1.0
    %v2000 = vadd.f32 %v1995, 1.0
    %v2001 = vadd.f32 %v1997, 1.0
    %v2002 = vrcp.pop %v1998
    %v2003 = vmul.f32 1.0, %v2002
    %v2004 = vrcp.pop %v1999
    %v2005 = vmul.f32 1.0, %v2004
    %v2006 = vrcp.pop %v2000
    %v2007 = vmul.f32 1.0, %v2006
    %v2008 = vrcp.pop %v2001
    %v2009 = vmul.f32 1.0, %v2008
    %v2010 = vtanh.pop %v1982
    %v2011 = vtanh.pop %v1983
    %v2012 = vtanh.pop %v1984
    %v2013 = vtanh.pop %v1985
    %v2014 = vmul.f32 %v2003, %v1857
    %v2015 = vmul.f32 %v2005, %v1858
    %v2016 = vmul.f32 %v2007, %v1859
    %v2017 = vmul.f32 %v2009, %v1860
    %2022 = vrot.lane.b32.xlu0 %v2010, 32
    %v2023 = vpop.permute.xlu0 %2022
    %2024 = vrot.lane.b32.xlu0 %v2011, 32
    %v2025 = vpop.permute.xlu0 %2024
    %2026 = vrot.lane.b32.xlu0 %v2012, 32
    %v2027 = vpop.permute.xlu0 %2026
    %2028 = vrot.lane.b32.xlu0 %v2013, 32
    %v2029 = vpop.permute.xlu0 %2028
    %v2034 = vmul.f32 %v2003, %v2023
    %v2035 = vmul.f32 %v2005, %v2025
    %v2036 = vmul.f32 %v2007, %v2027
    %v2037 = vmul.f32 %v2009, %v2029
    %2042 = vrot.lane.b32.xlu0 %v2034, 32
    %v2043 = vpop.permute.xlu0 %2042
    %2044 = vrot.lane.b32.xlu0 %v2035, 32
    %v2045 = vpop.permute.xlu0 %2044
    %2046 = vrot.lane.b32.xlu0 %v2036, 32
    %v2047 = vpop.permute.xlu0 %2046
    %2048 = vrot.lane.b32.xlu0 %v2037, 32
    %v2049 = vpop.permute.xlu0 %2048
    %v2054 = vadd.f32 %v2014, %v2043
    %v2055 = vadd.f32 %v2015, %v2045
    %v2056 = vadd.f32 %v2016, %v2047
    %v2057 = vadd.f32 %v2017, %v2049
    %v2058 = vtanh.pop %v2054
    %v2059 = vtanh.pop %v2055
    %v2060 = vtanh.pop %v2056
    %v2061 = vtanh.pop %v2057
    %2066 = vrot.lane.b32.xlu0 %v2058, 32
    %v2067 = vpop.permute.xlu0 %2066
    %2068 = vrot.lane.b32.xlu0 %v2059, 32
    %v2069 = vpop.permute.xlu0 %2068
    %2070 = vrot.lane.b32.xlu0 %v2060, 32
    %v2071 = vpop.permute.xlu0 %2070
    %2072 = vrot.lane.b32.xlu0 %v2061, 32
    %v2073 = vpop.permute.xlu0 %2072
    %v2078 = vmul.f32 %v2003, %v2067
    %v2079 = vmul.f32 %v2005, %v2069
    %v2080 = vmul.f32 %v2007, %v2071
    %v2081 = vmul.f32 %v2009, %v2073
    %v2082 = vpack.c.bf16 %v2079, %v2078
    %v2083 = vpack.c.bf16 %v2081, %v2080
    %v2086 = vunpack.c.l.b16 %v2082
    %v2087 = vunpack.c.h.b16 %v2082
    %v2088 = vunpack.c.l.b16 %v2083
    %v2089 = vunpack.c.h.b16 %v2083
    %v2090 = vpack.c.b16 %v2086, %v2086
    %v2091 = vpack.c.b16 %v2087, %v2087
    %v2092 = vpack.c.b16 %v2088, %v2088
    %v2093 = vpack.c.b16 %v2089, %v2089
    %2094 = vrot.lane.b32.xlu0 %v2090, 64
    %v2095 = vpop.permute.xlu0 %2094
    %2096 = vrot.lane.b32.xlu0 %v2091, 64
    %v2097 = vpop.permute.xlu0 %2096
    %2098 = vrot.lane.b32.xlu0 %v2092, 64
    %v2099 = vpop.permute.xlu0 %2098
    %2100 = vrot.lane.b32.xlu0 %v2093, 64
    %v2101 = vpop.permute.xlu0 %2100
    %s2106 = scalar_lea.vmem [#allocation3], 112
    %2107 = vst.msk [vmem:[%s2106] sm:$0xf] %vm727, %v2095
    %2108 = vst.msk [vmem:[%s2106 + $0x4] sm:$0xf] %vm727, %v2097
    %2109 = vst.msk [vmem:[%s2106 + $0x8] sm:$0xf] %vm727, %v2099
    %2110 = vst.msk [vmem:[%s2106 + $0xc] sm:$0xf] %vm727, %v2101
    %v2111 = vld [vmem:[#allocation3] sm:$0xf]
    %v2112 = vld [vmem:[#allocation3 + $0x4] sm:$0xf]
    %v2113 = vld [vmem:[#allocation3 + $0x8] sm:$0xf]
    %v2114 = vld [vmem:[#allocation3 + $0xc] sm:$0xf]
    %v2115 = vld [vmem:[#allocation3 + $0x10] sm:$0xf]
    %v2116 = vld [vmem:[#allocation3 + $0x14] sm:$0xf]
    %v2117 = vld [vmem:[#allocation3 + $0x18] sm:$0xf]
    %v2118 = vld [vmem:[#allocation3 + $0x1c] sm:$0xf]
    %v2119 = vld [vmem:[#allocation3 + $0x20] sm:$0xf]
    %v2120 = vld [vmem:[#allocation3 + $0x24] sm:$0xf]
    %v2121 = vld [vmem:[#allocation3 + $0x28] sm:$0xf]
    %v2122 = vld [vmem:[#allocation3 + $0x2c] sm:$0xf]
    %v2123 = vld [vmem:[#allocation3 + $0x30] sm:$0xf]
    %v2124 = vld [vmem:[#allocation3 + $0x34] sm:$0xf]
    %v2125 = vld [vmem:[#allocation3 + $0x38] sm:$0xf]
    %v2126 = vld [vmem:[#allocation3 + $0x3c] sm:$0xf]
    %v2127 = vld [vmem:[#allocation3 + $0x40] sm:$0xf]
    %v2128 = vld [vmem:[#allocation3 + $0x44] sm:$0xf]
    %v2129 = vld [vmem:[#allocation3 + $0x48] sm:$0xf]
    %v2130 = vld [vmem:[#allocation3 + $0x4c] sm:$0xf]
    %v2131 = vld [vmem:[#allocation3 + $0x50] sm:$0xf]
    %v2132 = vld [vmem:[#allocation3 + $0x54] sm:$0xf]
    %v2133 = vld [vmem:[#allocation3 + $0x58] sm:$0xf]
    %v2134 = vld [vmem:[#allocation3 + $0x5c] sm:$0xf]
    %v2135 = vld [vmem:[#allocation3 + $0x60] sm:$0xf]
    %v2136 = vld [vmem:[#allocation3 + $0x64] sm:$0xf]
    %v2137 = vld [vmem:[#allocation3 + $0x68] sm:$0xf]
    %v2138 = vld [vmem:[#allocation3 + $0x6c] sm:$0xf]
    %v2139 = vld [vmem:[#allocation3 + $0x70] sm:$0xf]
    %v2140 = vld [vmem:[#allocation3 + $0x74] sm:$0xf]
    %v2141 = vld [vmem:[#allocation3 + $0x78] sm:$0xf]
    %v2142 = vld [vmem:[#allocation3 + $0x7c] sm:$0xf]
    %v2143 = vld [vmem:[#allocation10] sm:$0xf]
    %v2144 = vld [vmem:[#allocation10 + $0x4] sm:$0xf]
    %v2145 = vld [vmem:[#allocation10 + $0x8] sm:$0xf]
    %v2146 = vld [vmem:[#allocation10 + $0xc] sm:$0xf]
    %v2147 = vld [vmem:[%s5] sm:$0x1]
    %v2149 = vlaneseq
    %v2150 = vshrl.u32 %v2149, 7
    %v2151 = vsub.s32 0, %v2150
    %v2152 = vrot.slane %v2147, %v2151
    %v2186 = vunpack.c.l.b16 %v2111
    %v2187 = vunpack.c.l.b16 %v2112
    %v2188 = vunpack.c.l.b16 %v2113
    %v2189 = vunpack.c.l.b16 %v2114
    %v2190 = vunpack.c.l.b16 %v2115
    %v2191 = vunpack.c.l.b16 %v2116
    %v2192 = vunpack.c.l.b16 %v2117
    %v2193 = vunpack.c.l.b16 %v2118
    %v2194 = vunpack.c.l.b16 %v2119
    %v2195 = vunpack.c.l.b16 %v2120
    %v2196 = vunpack.c.l.b16 %v2121
    %v2197 = vunpack.c.l.b16 %v2122
    %v2198 = vunpack.c.l.b16 %v2123
    %v2199 = vunpack.c.l.b16 %v2124
    %v2200 = vunpack.c.l.b16 %v2125
    %v2201 = vunpack.c.l.b16 %v2126
    %v2202 = vunpack.c.l.b16 %v2127
    %v2203 = vunpack.c.l.b16 %v2128
    %v2204 = vunpack.c.l.b16 %v2129
    %v2205 = vunpack.c.l.b16 %v2130
    %v2206 = vunpack.c.l.b16 %v2131
    %v2207 = vunpack.c.l.b16 %v2132
    %v2208 = vunpack.c.l.b16 %v2133
    %v2209 = vunpack.c.l.b16 %v2134
    %v2210 = vunpack.c.l.b16 %v2135
    %v2211 = vunpack.c.l.b16 %v2136
    %v2212 = vunpack.c.l.b16 %v2137
    %v2213 = vunpack.c.l.b16 %v2138
    %v2214 = vunpack.c.l.b16 %v2139
    %v2215 = vunpack.c.l.b16 %v2140
    %v2216 = vunpack.c.l.b16 %v2141
    %v2217 = vunpack.c.l.b16 %v2142
    %v2218 = vpack.c.b16 %v2187, %v2186
    %v2219 = vpack.c.b16 %v2189, %v2188
    %v2220 = vpack.c.b16 %v2191, %v2190
    %v2221 = vpack.c.b16 %v2193, %v2192
    %v2222 = vpack.c.b16 %v2195, %v2194
    %v2223 = vpack.c.b16 %v2197, %v2196
    %v2224 = vpack.c.b16 %v2199, %v2198
    %v2225 = vpack.c.b16 %v2201, %v2200
    %v2226 = vpack.c.b16 %v2203, %v2202
    %v2227 = vpack.c.b16 %v2205, %v2204
    %v2228 = vpack.c.b16 %v2207, %v2206
    %v2229 = vpack.c.b16 %v2209, %v2208
    %v2230 = vpack.c.b16 %v2211, %v2210
    %v2231 = vpack.c.b16 %v2213, %v2212
    %v2232 = vpack.c.b16 %v2215, %v2214
    %v2233 = vpack.c.b16 %v2217, %v2216
    %v2238 = vunpack.c.l.b16 %v2143
    %v2239 = vunpack.c.l.b16 %v2144
    %v2240 = vunpack.c.l.b16 %v2145
    %v2241 = vunpack.c.l.b16 %v2146
    %v2242 = vpack.c.b16 %v2239, %v2238
    %v2243 = vpack.c.b16 %v2241, %v2240
    %v2247 = vsel %vm157, %v2218, 0
    %v2250 = vsel %vm157, %v2219, 0
    %v2253 = vsel %vm157, %v2220, 0
    %v2256 = vsel %vm157, %v2221, 0
    %v2259 = vsel %vm157, %v2222, 0
    %v2262 = vsel %vm157, %v2223, 0
    %v2265 = vsel %vm157, %v2224, 0
    %v2268 = vsel %vm157, %v2225, 0
    %v2271 = vsel %vm157, %v2226, 0
    %v2274 = vsel %vm157, %v2227, 0
    %v2277 = vsel %vm157, %v2228, 0
    %v2280 = vsel %vm157, %v2229, 0
    %v2283 = vsel %vm157, %v2230, 0
    %v2286 = vsel %vm157, %v2231, 0
    %v2289 = vsel %vm157, %v2232, 0
    %v2292 = vsel %vm157, %v2233, 0
    %2294 = vmatprep.subr.bf16.mxu0 0
    %2295 = vmatpush1.bf16.msra.mxu0 0
    %2296 = vmatprep.subr.bf16.mxu0 0
    %2297 = vmatpush1.bf16.msra.mxu0 0
    %2298 = vmatprep.subr.bf16.mxu0 0
    %2299 = vmatpush1.bf16.msra.mxu0 0
    %2300 = vmatprep.subr.bf16.mxu0 0
    %2301 = vmatpush1.bf16.msra.mxu0 0
    %2302 = vmatprep.subr.bf16.mxu0 0
    %2303 = vmatpush1.bf16.msra.mxu0 0
    %2304 = vmatprep.subr.bf16.mxu0 0
    %2305 = vmatpush1.bf16.msra.mxu0 0
    %2306 = vmatprep.subr.bf16.mxu0 0
    %2307 = vmatpush1.bf16.msra.mxu0 %v2243
    %2308 = vmatprep.subr.bf16.mxu0 0
    %2309 = vmatpush1.bf16.msra.mxu0 %v2242
    %2310 = vmatprep.subr.bf16.mxu0 0
    %2311 = vmatpush2.bf16.msra.mxu0 0
    %2312 = vmatprep.subr.bf16.mxu0 0
    %2313 = vmatpush2.bf16.msra.mxu0 0
    %2314 = vmatprep.subr.bf16.mxu0 0
    %2315 = vmatpush2.bf16.msra.mxu0 0
    %2316 = vmatprep.subr.bf16.mxu0 0
    %2317 = vmatpush2.bf16.msra.mxu0 0
    %2318 = vmatprep.subr.bf16.mxu0 0
    %2319 = vmatpush2.bf16.msra.mxu0 0
    %2320 = vmatprep.subr.bf16.mxu0 0
    %2321 = vmatpush2.bf16.msra.mxu0 0
    %2322 = vmatprep.subr.bf16.mxu0 0
    %2323 = vmatpush2.bf16.msra.mxu0 0
    %2324 = vmatprep.subr.bf16.mxu0 0
    %2325 = vmatpush2.bf16.msra.mxu0 0
    %2326 = vmatprep.mubr.bf16.mxu0 0
    %2327 = vmatmul.mubr.bf16.gmra.mxu0 %v2247
    %v2328 = vpop.f32.mrf.mxu0
    %v2329 = vadd.f32 %v2152, %v2328
    %v2330 = vpop.f32.mrf.mxu0
    %v2331 = vpop.f32.mrf.mxu0
    %v2332 = vadd.f32 %v2152, %v2331
    %v2333 = vpop.f32.mrf.mxu0
    %2334 = vmatprep.mubr.bf16.mxu0 0
    %2335 = vmatmul.mubr.bf16.gmra.mxu0 %v2250
    %v2336 = vpop.f32.mrf.mxu0
    %v2337 = vadd.f32 %v2152, %v2336
    %v2338 = vpop.f32.mrf.mxu0
    %v2339 = vpop.f32.mrf.mxu0
    %v2340 = vadd.f32 %v2152, %v2339
    %v2341 = vpop.f32.mrf.mxu0
    %2342 = vmatprep.mubr.bf16.mxu0 0
    %2343 = vmatmul.mubr.bf16.gmra.mxu0 %v2253
    %v2344 = vpop.f32.mrf.mxu0
    %v2345 = vadd.f32 %v2152, %v2344
    %v2346 = vpop.f32.mrf.mxu0
    %v2347 = vpop.f32.mrf.mxu0
    %v2348 = vadd.f32 %v2152, %v2347
    %v2349 = vpop.f32.mrf.mxu0
    %2350 = vmatprep.mubr.bf16.mxu0 0
    %2351 = vmatmul.mubr.bf16.gmra.mxu0 %v2256
    %v2352 = vpop.f32.mrf.mxu0
    %v2353 = vadd.f32 %v2152, %v2352
    %v2354 = vpop.f32.mrf.mxu0
    %v2355 = vpop.f32.mrf.mxu0
    %v2356 = vadd.f32 %v2152, %v2355
    %v2357 = vpop.f32.mrf.mxu0
    %2358 = vmatprep.mubr.bf16.mxu0 0
    %2359 = vmatmul.mubr.bf16.gmra.mxu0 %v2259
    %v2360 = vpop.f32.mrf.mxu0
    %v2361 = vadd.f32 %v2152, %v2360
    %v2362 = vpop.f32.mrf.mxu0
    %v2363 = vpop.f32.mrf.mxu0
    %v2364 = vadd.f32 %v2152, %v2363
    %v2365 = vpop.f32.mrf.mxu0
    %2366 = vmatprep.mubr.bf16.mxu0 0
    %2367 = vmatmul.mubr.bf16.gmra.mxu0 %v2262
    %v2368 = vpop.f32.mrf.mxu0
    %v2369 = vadd.f32 %v2152, %v2368
    %v2370 = vpop.f32.mrf.mxu0
    %v2371 = vpop.f32.mrf.mxu0
    %v2372 = vadd.f32 %v2152, %v2371
    %v2373 = vpop.f32.mrf.mxu0
    %2374 = vmatprep.mubr.bf16.mxu0 0
    %2375 = vmatmul.mubr.bf16.gmra.mxu0 %v2265
    %v2376 = vpop.f32.mrf.mxu0
    %v2377 = vadd.f32 %v2152, %v2376
    %v2378 = vpop.f32.mrf.mxu0
    %v2379 = vpop.f32.mrf.mxu0
    %v2380 = vadd.f32 %v2152, %v2379
    %v2381 = vpop.f32.mrf.mxu0
    %2382 = vmatprep.mubr.bf16.mxu0 0
    %2383 = vmatmul.mubr.bf16.gmra.mxu0 %v2268
    %v2384 = vpop.f32.mrf.mxu0
    %v2385 = vadd.f32 %v2152, %v2384
    %v2386 = vpop.f32.mrf.mxu0
    %v2387 = vpop.f32.mrf.mxu0
    %v2388 = vadd.f32 %v2152, %v2387
    %v2389 = vpop.f32.mrf.mxu0
    %2390 = vmatprep.mubr.bf16.mxu0 0
    %2391 = vmatmul.mubr.bf16.gmra.mxu0 %v2271
    %v2392 = vpop.f32.mrf.mxu0
    %v2393 = vadd.f32 %v2152, %v2392
    %v2394 = vpop.f32.mrf.mxu0
    %v2395 = vpop.f32.mrf.mxu0
    %v2396 = vadd.f32 %v2152, %v2395
    %v2397 = vpop.f32.mrf.mxu0
    %2398 = vmatprep.mubr.bf16.mxu0 0
    %2399 = vmatmul.mubr.bf16.gmra.mxu0 %v2274
    %v2400 = vpop.f32.mrf.mxu0
    %v2401 = vadd.f32 %v2152, %v2400
    %v2402 = vpop.f32.mrf.mxu0
    %v2403 = vpop.f32.mrf.mxu0
    %v2404 = vadd.f32 %v2152, %v2403
    %v2405 = vpop.f32.mrf.mxu0
    %2406 = vmatprep.mubr.bf16.mxu0 0
    %2407 = vmatmul.mubr.bf16.gmra.mxu0 %v2277
    %v2408 = vpop.f32.mrf.mxu0
    %v2409 = vadd.f32 %v2152, %v2408
    %v2410 = vpop.f32.mrf.mxu0
    %v2411 = vpop.f32.mrf.mxu0
    %v2412 = vadd.f32 %v2152, %v2411
    %v2413 = vpop.f32.mrf.mxu0
    %2414 = vmatprep.mubr.bf16.mxu0 0
    %2415 = vmatmul.mubr.bf16.gmra.mxu0 %v2280
    %v2416 = vpop.f32.mrf.mxu0
    %v2417 = vadd.f32 %v2152, %v2416
    %v2418 = vpop.f32.mrf.mxu0
    %v2419 = vpop.f32.mrf.mxu0
    %v2420 = vadd.f32 %v2152, %v2419
    %v2421 = vpop.f32.mrf.mxu0
    %2422 = vmatprep.mubr.bf16.mxu0 0
    %2423 = vmatmul.mubr.bf16.gmra.mxu0 %v2283
    %v2424 = vpop.f32.mrf.mxu0
    %v2425 = vadd.f32 %v2152, %v2424
    %v2426 = vpop.f32.mrf.mxu0
    %v2427 = vpop.f32.mrf.mxu0
    %v2428 = vadd.f32 %v2152, %v2427
    %v2429 = vpop.f32.mrf.mxu0
    %2430 = vmatprep.mubr.bf16.mxu0 0
    %2431 = vmatmul.mubr.bf16.gmra.mxu0 %v2286
    %v2432 = vpop.f32.mrf.mxu0
    %v2433 = vadd.f32 %v2152, %v2432
    %v2434 = vpop.f32.mrf.mxu0
    %v2435 = vpop.f32.mrf.mxu0
    %v2436 = vadd.f32 %v2152, %v2435
    %v2437 = vpop.f32.mrf.mxu0
    %2438 = vmatprep.mubr.bf16.mxu0 0
    %2439 = vmatmul.mubr.bf16.gmra.mxu0 %v2289
    %v2440 = vpop.f32.mrf.mxu0
    %v2441 = vadd.f32 %v2152, %v2440
    %v2442 = vpop.f32.mrf.mxu0
    %v2443 = vpop.f32.mrf.mxu0
    %v2444 = vadd.f32 %v2152, %v2443
    %v2445 = vpop.f32.mrf.mxu0
    %2446 = vmatprep.mubr.bf16.mxu0 0
    %2447 = vmatmul.mubr.bf16.gmra.mxu0 %v2292
    %v2448 = vpop.f32.mrf.mxu0
    %v2449 = vadd.f32 %v2152, %v2448
    %v2450 = vpop.f32.mrf.mxu0
    %v2451 = vpop.f32.mrf.mxu0
    %v2452 = vadd.f32 %v2152, %v2451
    %v2453 = vpop.f32.mrf.mxu0
    %2454 = vdwg.mxu0
    %v2455 = vsel %vm157, %v2329, 0.0
    %2456 = vadd.xlane.f32.xlu0 %v2455
    %v2457 = vpop.xlane.xlu0 %2456
    %v2458 = vsel %vm157, %v2332, 0.0
    %2459 = vadd.xlane.f32.xlu0 %v2458
    %v2460 = vpop.xlane.xlu0 %2459
    %v2461 = vsel %vm157, %v2337, 0.0
    %2462 = vadd.xlane.f32.xlu0 %v2461
    %v2463 = vpop.xlane.xlu0 %2462
    %v2464 = vsel %vm157, %v2340, 0.0
    %2465 = vadd.xlane.f32.xlu0 %v2464
    %v2466 = vpop.xlane.xlu0 %2465
    %v2467 = vsel %vm157, %v2345, 0.0
    %2468 = vadd.xlane.f32.xlu0 %v2467
    %v2469 = vpop.xlane.xlu0 %2468
    %v2470 = vsel %vm157, %v2348, 0.0
    %2471 = vadd.xlane.f32.xlu0 %v2470
    %v2472 = vpop.xlane.xlu0 %2471
    %v2473 = vsel %vm157, %v2353, 0.0
    %2474 = vadd.xlane.f32.xlu0 %v2473
    %v2475 = vpop.xlane.xlu0 %2474
    %v2476 = vsel %vm157, %v2356, 0.0
    %2477 = vadd.xlane.f32.xlu0 %v2476
    %v2478 = vpop.xlane.xlu0 %2477
    %v2479 = vsel %vm157, %v2361, 0.0
    %2480 = vadd.xlane.f32.xlu0 %v2479
    %v2481 = vpop.xlane.xlu0 %2480
    %v2482 = vsel %vm157, %v2364, 0.0
    %2483 = vadd.xlane.f32.xlu0 %v2482
    %v2484 = vpop.xlane.xlu0 %2483
    %v2485 = vsel %vm157, %v2369, 0.0
    %2486 = vadd.xlane.f32.xlu0 %v2485
    %v2487 = vpop.xlane.xlu0 %2486
    %v2488 = vsel %vm157, %v2372, 0.0
    %2489 = vadd.xlane.f32.xlu0 %v2488
    %v2490 = vpop.xlane.xlu0 %2489
    %v2491 = vsel %vm157, %v2377, 0.0
    %2492 = vadd.xlane.f32.xlu0 %v2491
    %v2493 = vpop.xlane.xlu0 %2492
    %v2494 = vsel %vm157, %v2380, 0.0
    %2495 = vadd.xlane.f32.xlu0 %v2494
    %v2496 = vpop.xlane.xlu0 %2495
    %v2497 = vsel %vm157, %v2385, 0.0
    %2498 = vadd.xlane.f32.xlu0 %v2497
    %v2499 = vpop.xlane.xlu0 %2498
    %v2500 = vsel %vm157, %v2388, 0.0
    %2501 = vadd.xlane.f32.xlu0 %v2500
    %v2502 = vpop.xlane.xlu0 %2501
    %v2503 = vsel %vm157, %v2393, 0.0
    %2504 = vadd.xlane.f32.xlu0 %v2503
    %v2505 = vpop.xlane.xlu0 %2504
    %v2506 = vsel %vm157, %v2396, 0.0
    %2507 = vadd.xlane.f32.xlu0 %v2506
    %v2508 = vpop.xlane.xlu0 %2507
    %v2509 = vsel %vm157, %v2401, 0.0
    %2510 = vadd.xlane.f32.xlu0 %v2509
    %v2511 = vpop.xlane.xlu0 %2510
    %v2512 = vsel %vm157, %v2404, 0.0
    %2513 = vadd.xlane.f32.xlu0 %v2512
    %v2514 = vpop.xlane.xlu0 %2513
    %v2515 = vsel %vm157, %v2409, 0.0
    %2516 = vadd.xlane.f32.xlu0 %v2515
    %v2517 = vpop.xlane.xlu0 %2516
    %v2518 = vsel %vm157, %v2412, 0.0
    %2519 = vadd.xlane.f32.xlu0 %v2518
    %v2520 = vpop.xlane.xlu0 %2519
    %v2521 = vsel %vm157, %v2417, 0.0
    %2522 = vadd.xlane.f32.xlu0 %v2521
    %v2523 = vpop.xlane.xlu0 %2522
    %v2524 = vsel %vm157, %v2420, 0.0
    %2525 = vadd.xlane.f32.xlu0 %v2524
    %v2526 = vpop.xlane.xlu0 %2525
    %v2527 = vsel %vm157, %v2425, 0.0
    %2528 = vadd.xlane.f32.xlu0 %v2527
    %v2529 = vpop.xlane.xlu0 %2528
    %v2530 = vsel %vm157, %v2428, 0.0
    %2531 = vadd.xlane.f32.xlu0 %v2530
    %v2532 = vpop.xlane.xlu0 %2531
    %v2533 = vsel %vm157, %v2433, 0.0
    %2534 = vadd.xlane.f32.xlu0 %v2533
    %v2535 = vpop.xlane.xlu0 %2534
    %v2536 = vsel %vm157, %v2436, 0.0
    %2537 = vadd.xlane.f32.xlu0 %v2536
    %v2538 = vpop.xlane.xlu0 %2537
    %v2539 = vsel %vm157, %v2441, 0.0
    %2540 = vadd.xlane.f32.xlu0 %v2539
    %v2541 = vpop.xlane.xlu0 %2540
    %v2542 = vsel %vm157, %v2444, 0.0
    %2543 = vadd.xlane.f32.xlu0 %v2542
    %v2544 = vpop.xlane.xlu0 %2543
    %v2545 = vsel %vm157, %v2449, 0.0
    %2546 = vadd.xlane.f32.xlu0 %v2545
    %v2547 = vpop.xlane.xlu0 %2546
    %v2548 = vsel %vm157, %v2452, 0.0
    %2549 = vadd.xlane.f32.xlu0 %v2548
    %v2550 = vpop.xlane.xlu0 %2549
    %v2551 = vrcp.pop 32.0
    %v2552 = vmul.f32 %v2457, %v2551
    %v2553 = vmul.f32 %v2460, %v2551
    %v2554 = vmul.f32 %v2463, %v2551
    %v2555 = vmul.f32 %v2466, %v2551
    %v2556 = vmul.f32 %v2469, %v2551
    %v2557 = vmul.f32 %v2472, %v2551
    %v2558 = vmul.f32 %v2475, %v2551
    %v2559 = vmul.f32 %v2478, %v2551
    %v2560 = vmul.f32 %v2481, %v2551
    %v2561 = vmul.f32 %v2484, %v2551
    %v2562 = vmul.f32 %v2487, %v2551
    %v2563 = vmul.f32 %v2490, %v2551
    %v2564 = vmul.f32 %v2493, %v2551
    %v2565 = vmul.f32 %v2496, %v2551
    %v2566 = vmul.f32 %v2499, %v2551
    %v2567 = vmul.f32 %v2502, %v2551
    %v2568 = vmul.f32 %v2505, %v2551
    %v2569 = vmul.f32 %v2508, %v2551
    %v2570 = vmul.f32 %v2511, %v2551
    %v2571 = vmul.f32 %v2514, %v2551
    %v2572 = vmul.f32 %v2517, %v2551
    %v2573 = vmul.f32 %v2520, %v2551
    %v2574 = vmul.f32 %v2523, %v2551
    %v2575 = vmul.f32 %v2526, %v2551
    %v2576 = vmul.f32 %v2529, %v2551
    %v2577 = vmul.f32 %v2532, %v2551
    %v2578 = vmul.f32 %v2535, %v2551
    %v2579 = vmul.f32 %v2538, %v2551
    %v2580 = vmul.f32 %v2541, %v2551
    %v2581 = vmul.f32 %v2544, %v2551
    %v2582 = vmul.f32 %v2547, %v2551
    %v2583 = vmul.f32 %v2550, %v2551
    %v2584 = vmul.f32 %v2329, %v2329
    %v2585 = vmul.f32 %v2332, %v2332
    %v2586 = vmul.f32 %v2337, %v2337
    %v2587 = vmul.f32 %v2340, %v2340
    %v2588 = vmul.f32 %v2345, %v2345
    %v2589 = vmul.f32 %v2348, %v2348
    %v2590 = vmul.f32 %v2353, %v2353
    %v2591 = vmul.f32 %v2356, %v2356
    %v2592 = vmul.f32 %v2361, %v2361
    %v2593 = vmul.f32 %v2364, %v2364
    %v2594 = vmul.f32 %v2369, %v2369
    %v2595 = vmul.f32 %v2372, %v2372
    %v2596 = vmul.f32 %v2377, %v2377
    %v2597 = vmul.f32 %v2380, %v2380
    %v2598 = vmul.f32 %v2385, %v2385
    %v2599 = vmul.f32 %v2388, %v2388
    %v2600 = vmul.f32 %v2393, %v2393
    %v2601 = vmul.f32 %v2396, %v2396
    %v2602 = vmul.f32 %v2401, %v2401
    %v2603 = vmul.f32 %v2404, %v2404
    %v2604 = vmul.f32 %v2409, %v2409
    %v2605 = vmul.f32 %v2412, %v2412
    %v2606 = vmul.f32 %v2417, %v2417
    %v2607 = vmul.f32 %v2420, %v2420
    %v2608 = vmul.f32 %v2425, %v2425
    %v2609 = vmul.f32 %v2428, %v2428
    %v2610 = vmul.f32 %v2433, %v2433
    %v2611 = vmul.f32 %v2436, %v2436
    %v2612 = vmul.f32 %v2441, %v2441
    %v2613 = vmul.f32 %v2444, %v2444
    %v2614 = vmul.f32 %v2449, %v2449
    %v2615 = vmul.f32 %v2452, %v2452
    %v2616 = vsel %vm157, %v2584, 0.0
    %2617 = vadd.xlane.f32.xlu0 %v2616
    %v2618 = vpop.xlane.xlu0 %2617
    %v2619 = vsel %vm157, %v2585, 0.0
    %2620 = vadd.xlane.f32.xlu0 %v2619
    %v2621 = vpop.xlane.xlu0 %2620
    %v2622 = vsel %vm157, %v2586, 0.0
    %2623 = vadd.xlane.f32.xlu0 %v2622
    %v2624 = vpop.xlane.xlu0 %2623
    %v2625 = vsel %vm157, %v2587, 0.0
    %2626 = vadd.xlane.f32.xlu0 %v2625
    %v2627 = vpop.xlane.xlu0 %2626
    %v2628 = vsel %vm157, %v2588, 0.0
    %2629 = vadd.xlane.f32.xlu0 %v2628
    %v2630 = vpop.xlane.xlu0 %2629
    %v2631 = vsel %vm157, %v2589, 0.0
    %2632 = vadd.xlane.f32.xlu0 %v2631
    %v2633 = vpop.xlane.xlu0 %2632
    %v2634 = vsel %vm157, %v2590, 0.0
    %2635 = vadd.xlane.f32.xlu0 %v2634
    %v2636 = vpop.xlane.xlu0 %2635
    %v2637 = vsel %vm157, %v2591, 0.0
    %2638 = vadd.xlane.f32.xlu0 %v2637
    %v2639 = vpop.xlane.xlu0 %2638
    %v2640 = vsel %vm157, %v2592, 0.0
    %2641 = vadd.xlane.f32.xlu0 %v2640
    %v2642 = vpop.xlane.xlu0 %2641
    %v2643 = vsel %vm157, %v2593, 0.0
    %2644 = vadd.xlane.f32.xlu0 %v2643
    %v2645 = vpop.xlane.xlu0 %2644
    %v2646 = vsel %vm157, %v2594, 0.0
    %2647 = vadd.xlane.f32.xlu0 %v2646
    %v2648 = vpop.xlane.xlu0 %2647
    %v2649 = vsel %vm157, %v2595, 0.0
    %2650 = vadd.xlane.f32.xlu0 %v2649
    %v2651 = vpop.xlane.xlu0 %2650
    %v2652 = vsel %vm157, %v2596, 0.0
    %2653 = vadd.xlane.f32.xlu0 %v2652
    %v2654 = vpop.xlane.xlu0 %2653
    %v2655 = vsel %vm157, %v2597, 0.0
    %2656 = vadd.xlane.f32.xlu0 %v2655
    %v2657 = vpop.xlane.xlu0 %2656
    %v2658 = vsel %vm157, %v2598, 0.0
    %2659 = vadd.xlane.f32.xlu0 %v2658
    %v2660 = vpop.xlane.xlu0 %2659
    %v2661 = vsel %vm157, %v2599, 0.0
    %2662 = vadd.xlane.f32.xlu0 %v2661
    %v2663 = vpop.xlane.xlu0 %2662
    %v2664 = vsel %vm157, %v2600, 0.0
    %2665 = vadd.xlane.f32.xlu0 %v2664
    %v2666 = vpop.xlane.xlu0 %2665
    %v2667 = vsel %vm157, %v2601, 0.0
    %2668 = vadd.xlane.f32.xlu0 %v2667
    %v2669 = vpop.xlane.xlu0 %2668
    %v2670 = vsel %vm157, %v2602, 0.0
    %2671 = vadd.xlane.f32.xlu0 %v2670
    %v2672 = vpop.xlane.xlu0 %2671
    %v2673 = vsel %vm157, %v2603, 0.0
    %2674 = vadd.xlane.f32.xlu0 %v2673
    %v2675 = vpop.xlane.xlu0 %2674
    %v2676 = vsel %vm157, %v2604, 0.0
    %2677 = vadd.xlane.f32.xlu0 %v2676
    %v2678 = vpop.xlane.xlu0 %2677
    %v2679 = vsel %vm157, %v2605, 0.0
    %2680 = vadd.xlane.f32.xlu0 %v2679
    %v2681 = vpop.xlane.xlu0 %2680
    %v2682 = vsel %vm157, %v2606, 0.0
    %2683 = vadd.xlane.f32.xlu0 %v2682
    %v2684 = vpop.xlane.xlu0 %2683
    %v2685 = vsel %vm157, %v2607, 0.0
    %2686 = vadd.xlane.f32.xlu0 %v2685
    %v2687 = vpop.xlane.xlu0 %2686
    %v2688 = vsel %vm157, %v2608, 0.0
    %2689 = vadd.xlane.f32.xlu0 %v2688
    %v2690 = vpop.xlane.xlu0 %2689
    %v2691 = vsel %vm157, %v2609, 0.0
    %2692 = vadd.xlane.f32.xlu0 %v2691
    %v2693 = vpop.xlane.xlu0 %2692
    %v2694 = vsel %vm157, %v2610, 0.0
    %2695 = vadd.xlane.f32.xlu0 %v2694
    %v2696 = vpop.xlane.xlu0 %2695
    %v2697 = vsel %vm157, %v2611, 0.0
    %2698 = vadd.xlane.f32.xlu0 %v2697
    %v2699 = vpop.xlane.xlu0 %2698
    %v2700 = vsel %vm157, %v2612, 0.0
    %2701 = vadd.xlane.f32.xlu0 %v2700
    %v2702 = vpop.xlane.xlu0 %2701
    %v2703 = vsel %vm157, %v2613, 0.0
    %2704 = vadd.xlane.f32.xlu0 %v2703
    %v2705 = vpop.xlane.xlu0 %2704
    %v2706 = vsel %vm157, %v2614, 0.0
    %2707 = vadd.xlane.f32.xlu0 %v2706
    %v2708 = vpop.xlane.xlu0 %2707
    %v2709 = vsel %vm157, %v2615, 0.0
    %2710 = vadd.xlane.f32.xlu0 %v2709
    %v2711 = vpop.xlane.xlu0 %2710
    %v2712 = vmul.f32 %v2618, %v2551
    %v2713 = vmul.f32 %v2621, %v2551
    %v2714 = vmul.f32 %v2624, %v2551
    %v2715 = vmul.f32 %v2627, %v2551
    %v2716 = vmul.f32 %v2630, %v2551
    %v2717 = vmul.f32 %v2633, %v2551
    %v2718 = vmul.f32 %v2636, %v2551
    %v2719 = vmul.f32 %v2639, %v2551
    %v2720 = vmul.f32 %v2642, %v2551
    %v2721 = vmul.f32 %v2645, %v2551
    %v2722 = vmul.f32 %v2648, %v2551
    %v2723 = vmul.f32 %v2651, %v2551
    %v2724 = vmul.f32 %v2654, %v2551
    %v2725 = vmul.f32 %v2657, %v2551
    %v2726 = vmul.f32 %v2660, %v2551
    %v2727 = vmul.f32 %v2663, %v2551
    %v2728 = vmul.f32 %v2666, %v2551
    %v2729 = vmul.f32 %v2669, %v2551
    %v2730 = vmul.f32 %v2672, %v2551
    %v2731 = vmul.f32 %v2675, %v2551
    %v2732 = vmul.f32 %v2678, %v2551
    %v2733 = vmul.f32 %v2681, %v2551
    %v2734 = vmul.f32 %v2684, %v2551
    %v2735 = vmul.f32 %v2687, %v2551
    %v2736 = vmul.f32 %v2690, %v2551
    %v2737 = vmul.f32 %v2693, %v2551
    %v2738 = vmul.f32 %v2696, %v2551
    %v2739 = vmul.f32 %v2699, %v2551
    %v2740 = vmul.f32 %v2702, %v2551
    %v2741 = vmul.f32 %v2705, %v2551
    %v2742 = vmul.f32 %v2708, %v2551
    %v2743 = vmul.f32 %v2711, %v2551
    %v2744 = vmul.f32 %v2552, %v2552
    %v2745 = vmul.f32 %v2553, %v2553
    %v2746 = vmul.f32 %v2554, %v2554
    %v2747 = vmul.f32 %v2555, %v2555
    %v2748 = vmul.f32 %v2556, %v2556
    %v2749 = vmul.f32 %v2557, %v2557
    %v2750 = vmul.f32 %v2558, %v2558
    %v2751 = vmul.f32 %v2559, %v2559
    %v2752 = vmul.f32 %v2560, %v2560
    %v2753 = vmul.f32 %v2561, %v2561
    %v2754 = vmul.f32 %v2562, %v2562
    %v2755 = vmul.f32 %v2563, %v2563
    %v2756 = vmul.f32 %v2564, %v2564
    %v2757 = vmul.f32 %v2565, %v2565
    %v2758 = vmul.f32 %v2566, %v2566
    %v2759 = vmul.f32 %v2567, %v2567
    %v2760 = vmul.f32 %v2568, %v2568
    %v2761 = vmul.f32 %v2569, %v2569
    %v2762 = vmul.f32 %v2570, %v2570
    %v2763 = vmul.f32 %v2571, %v2571
    %v2764 = vmul.f32 %v2572, %v2572
    %v2765 = vmul.f32 %v2573, %v2573
    %v2766 = vmul.f32 %v2574, %v2574
    %v2767 = vmul.f32 %v2575, %v2575
    %v2768 = vmul.f32 %v2576, %v2576
    %v2769 = vmul.f32 %v2577, %v2577
    %v2770 = vmul.f32 %v2578, %v2578
    %v2771 = vmul.f32 %v2579, %v2579
    %v2772 = vmul.f32 %v2580, %v2580
    %v2773 = vmul.f32 %v2581, %v2581
    %v2774 = vmul.f32 %v2582, %v2582
    %v2775 = vmul.f32 %v2583, %v2583
    %v2776 = vsub.f32 %v2712, %v2744
    %v2777 = vsub.f32 %v2713, %v2745
    %v2778 = vsub.f32 %v2714, %v2746
    %v2779 = vsub.f32 %v2715, %v2747
    %v2780 = vsub.f32 %v2716, %v2748
    %v2781 = vsub.f32 %v2717, %v2749
    %v2782 = vsub.f32 %v2718, %v2750
    %v2783 = vsub.f32 %v2719, %v2751
    %v2784 = vsub.f32 %v2720, %v2752
    %v2785 = vsub.f32 %v2721, %v2753
    %v2786 = vsub.f32 %v2722, %v2754
    %v2787 = vsub.f32 %v2723, %v2755
    %v2788 = vsub.f32 %v2724, %v2756
    %v2789 = vsub.f32 %v2725, %v2757
    %v2790 = vsub.f32 %v2726, %v2758
    %v2791 = vsub.f32 %v2727, %v2759
    %v2792 = vsub.f32 %v2728, %v2760
    %v2793 = vsub.f32 %v2729, %v2761
    %v2794 = vsub.f32 %v2730, %v2762
    %v2795 = vsub.f32 %v2731, %v2763
    %v2796 = vsub.f32 %v2732, %v2764
    %v2797 = vsub.f32 %v2733, %v2765
    %v2798 = vsub.f32 %v2734, %v2766
    %v2799 = vsub.f32 %v2735, %v2767
    %v2800 = vsub.f32 %v2736, %v2768
    %v2801 = vsub.f32 %v2737, %v2769
    %v2802 = vsub.f32 %v2738, %v2770
    %v2803 = vsub.f32 %v2739, %v2771
    %v2804 = vsub.f32 %v2740, %v2772
    %v2805 = vsub.f32 %v2741, %v2773
    %v2806 = vsub.f32 %v2742, %v2774
    %v2807 = vsub.f32 %v2743, %v2775
    %v2808 = vsub.f32 %v2329, %v2552
    %v2809 = vsub.f32 %v2332, %v2553
    %v2810 = vsub.f32 %v2337, %v2554
    %v2811 = vsub.f32 %v2340, %v2555
    %v2812 = vsub.f32 %v2345, %v2556
    %v2813 = vsub.f32 %v2348, %v2557
    %v2814 = vsub.f32 %v2353, %v2558
    %v2815 = vsub.f32 %v2356, %v2559
    %v2816 = vsub.f32 %v2361, %v2560
    %v2817 = vsub.f32 %v2364, %v2561
    %v2818 = vsub.f32 %v2369, %v2562
    %v2819 = vsub.f32 %v2372, %v2563
    %v2820 = vsub.f32 %v2377, %v2564
    %v2821 = vsub.f32 %v2380, %v2565
    %v2822 = vsub.f32 %v2385, %v2566
    %v2823 = vsub.f32 %v2388, %v2567
    %v2824 = vsub.f32 %v2393, %v2568
    %v2825 = vsub.f32 %v2396, %v2569
    %v2826 = vsub.f32 %v2401, %v2570
    %v2827 = vsub.f32 %v2404, %v2571
    %v2828 = vsub.f32 %v2409, %v2572
    %v2829 = vsub.f32 %v2412, %v2573
    %v2830 = vsub.f32 %v2417, %v2574
    %v2831 = vsub.f32 %v2420, %v2575
    %v2832 = vsub.f32 %v2425, %v2576
    %v2833 = vsub.f32 %v2428, %v2577
    %v2834 = vsub.f32 %v2433, %v2578
    %v2835 = vsub.f32 %v2436, %v2579
    %v2836 = vsub.f32 %v2441, %v2580
    %v2837 = vsub.f32 %v2444, %v2581
    %v2838 = vsub.f32 %v2449, %v2582
    %v2839 = vsub.f32 %v2452, %v2583
    %v2840 = vadd.f32 %v2776, 1e-05
    %v2841 = vadd.f32 %v2777, 1e-05
    %v2842 = vadd.f32 %v2778, 1e-05
    %v2843 = vadd.f32 %v2779, 1e-05
    %v2844 = vadd.f32 %v2780, 1e-05
    %v2845 = vadd.f32 %v2781, 1e-05
    %v2846 = vadd.f32 %v2782, 1e-05
    %v2847 = vadd.f32 %v2783, 1e-05
    %v2848 = vadd.f32 %v2784, 1e-05
    %v2849 = vadd.f32 %v2785, 1e-05
    %v2850 = vadd.f32 %v2786, 1e-05
    %v2851 = vadd.f32 %v2787, 1e-05
    %v2852 = vadd.f32 %v2788, 1e-05
    %v2853 = vadd.f32 %v2789, 1e-05
    %v2854 = vadd.f32 %v2790, 1e-05
    %v2855 = vadd.f32 %v2791, 1e-05
    %v2856 = vadd.f32 %v2792, 1e-05
    %v2857 = vadd.f32 %v2793, 1e-05
    %v2858 = vadd.f32 %v2794, 1e-05
    %v2859 = vadd.f32 %v2795, 1e-05
    %v2860 = vadd.f32 %v2796, 1e-05
    %v2861 = vadd.f32 %v2797, 1e-05
    %v2862 = vadd.f32 %v2798, 1e-05
    %v2863 = vadd.f32 %v2799, 1e-05
    %v2864 = vadd.f32 %v2800, 1e-05
    %v2865 = vadd.f32 %v2801, 1e-05
    %v2866 = vadd.f32 %v2802, 1e-05
    %v2867 = vadd.f32 %v2803, 1e-05
    %v2868 = vadd.f32 %v2804, 1e-05
    %v2869 = vadd.f32 %v2805, 1e-05
    %v2870 = vadd.f32 %v2806, 1e-05
    %v2871 = vadd.f32 %v2807, 1e-05
    %v2872 = vrsqrt.pop %v2840
    %v2873 = vrsqrt.pop %v2841
    %v2874 = vrsqrt.pop %v2842
    %v2875 = vrsqrt.pop %v2843
    %v2876 = vrsqrt.pop %v2844
    %v2877 = vrsqrt.pop %v2845
    %v2878 = vrsqrt.pop %v2846
    %v2879 = vrsqrt.pop %v2847
    %v2880 = vrsqrt.pop %v2848
    %v2881 = vrsqrt.pop %v2849
    %v2882 = vrsqrt.pop %v2850
    %v2883 = vrsqrt.pop %v2851
    %v2884 = vrsqrt.pop %v2852
    %v2885 = vrsqrt.pop %v2853
    %v2886 = vrsqrt.pop %v2854
    %v2887 = vrsqrt.pop %v2855
    %v2888 = vrsqrt.pop %v2856
    %v2889 = vrsqrt.pop %v2857
    %v2890 = vrsqrt.pop %v2858
    %v2891 = vrsqrt.pop %v2859
    %v2892 = vrsqrt.pop %v2860
    %v2893 = vrsqrt.pop %v2861
    %v2894 = vrsqrt.pop %v2862
    %v2895 = vrsqrt.pop %v2863
    %v2896 = vrsqrt.pop %v2864
    %v2897 = vrsqrt.pop %v2865
    %v2898 = vrsqrt.pop %v2866
    %v2899 = vrsqrt.pop %v2867
    %v2900 = vrsqrt.pop %v2868
    %v2901 = vrsqrt.pop %v2869
    %v2902 = vrsqrt.pop %v2870
    %v2903 = vrsqrt.pop %v2871
    %v2904 = vmul.f32 %v2808, %v2872
    %v2905 = vmul.f32 %v2809, %v2873
    %v2906 = vmul.f32 %v2810, %v2874
    %v2907 = vmul.f32 %v2811, %v2875
    %v2908 = vmul.f32 %v2812, %v2876
    %v2909 = vmul.f32 %v2813, %v2877
    %v2910 = vmul.f32 %v2814, %v2878
    %v2911 = vmul.f32 %v2815, %v2879
    %v2912 = vmul.f32 %v2816, %v2880
    %v2913 = vmul.f32 %v2817, %v2881
    %v2914 = vmul.f32 %v2818, %v2882
    %v2915 = vmul.f32 %v2819, %v2883
    %v2916 = vmul.f32 %v2820, %v2884
    %v2917 = vmul.f32 %v2821, %v2885
    %v2918 = vmul.f32 %v2822, %v2886
    %v2919 = vmul.f32 %v2823, %v2887
    %v2920 = vmul.f32 %v2824, %v2888
    %v2921 = vmul.f32 %v2825, %v2889
    %v2922 = vmul.f32 %v2826, %v2890
    %v2923 = vmul.f32 %v2827, %v2891
    %v2924 = vmul.f32 %v2828, %v2892
    %v2925 = vmul.f32 %v2829, %v2893
    %v2926 = vmul.f32 %v2830, %v2894
    %v2927 = vmul.f32 %v2831, %v2895
    %v2928 = vmul.f32 %v2832, %v2896
    %v2929 = vmul.f32 %v2833, %v2897
    %v2930 = vmul.f32 %v2834, %v2898
    %v2931 = vmul.f32 %v2835, %v2899
    %v2932 = vmul.f32 %v2836, %v2900
    %v2933 = vmul.f32 %v2837, %v2901
    %v2934 = vmul.f32 %v2838, %v2902
    %v2935 = vmul.f32 %v2839, %v2903
    %v2936 = vld [vmem:[%s6] sm:$0x1]
    %v2938 = vlaneseq
    %v2939 = vshrl.u32 %v2938, 7
    %v2940 = vsub.s32 0, %v2939
    %v2941 = vrot.slane %v2936, %v2940
    %v2943 = vmul.f32 %v2904, %v2941
    %v2944 = vmul.f32 %v2905, %v2941
    %v2945 = vmul.f32 %v2906, %v2941
    %v2946 = vmul.f32 %v2907, %v2941
    %v2947 = vmul.f32 %v2908, %v2941
    %v2948 = vmul.f32 %v2909, %v2941
    %v2949 = vmul.f32 %v2910, %v2941
    %v2950 = vmul.f32 %v2911, %v2941
    %v2951 = vmul.f32 %v2912, %v2941
    %v2952 = vmul.f32 %v2913, %v2941
    %v2953 = vmul.f32 %v2914, %v2941
    %v2954 = vmul.f32 %v2915, %v2941
    %v2955 = vmul.f32 %v2916, %v2941
    %v2956 = vmul.f32 %v2917, %v2941
    %v2957 = vmul.f32 %v2918, %v2941
    %v2958 = vmul.f32 %v2919, %v2941
    %v2959 = vmul.f32 %v2920, %v2941
    %v2960 = vmul.f32 %v2921, %v2941
    %v2961 = vmul.f32 %v2922, %v2941
    %v2962 = vmul.f32 %v2923, %v2941
    %v2963 = vmul.f32 %v2924, %v2941
    %v2964 = vmul.f32 %v2925, %v2941
    %v2965 = vmul.f32 %v2926, %v2941
    %v2966 = vmul.f32 %v2927, %v2941
    %v2967 = vmul.f32 %v2928, %v2941
    %v2968 = vmul.f32 %v2929, %v2941
    %v2969 = vmul.f32 %v2930, %v2941
    %v2970 = vmul.f32 %v2931, %v2941
    %v2971 = vmul.f32 %v2932, %v2941
    %v2972 = vmul.f32 %v2933, %v2941
    %v2973 = vmul.f32 %v2934, %v2941
    %v2974 = vmul.f32 %v2935, %v2941
    %v2975 = vld [vmem:[%s7] sm:$0x1]
    %v2977 = vlaneseq
    %v2978 = vshrl.u32 %v2977, 7
    %v2979 = vsub.s32 0, %v2978
    %v2980 = vrot.slane %v2975, %v2979
    %v2982 = vadd.f32 %v2943, %v2980
    %v2983 = vadd.f32 %v2944, %v2980
    %v2984 = vadd.f32 %v2945, %v2980
    %v2985 = vadd.f32 %v2946, %v2980
    %v2986 = vadd.f32 %v2947, %v2980
    %v2987 = vadd.f32 %v2948, %v2980
    %v2988 = vadd.f32 %v2949, %v2980
    %v2989 = vadd.f32 %v2950, %v2980
    %v2990 = vadd.f32 %v2951, %v2980
    %v2991 = vadd.f32 %v2952, %v2980
    %v2992 = vadd.f32 %v2953, %v2980
    %v2993 = vadd.f32 %v2954, %v2980
    %v2994 = vadd.f32 %v2955, %v2980
    %v2995 = vadd.f32 %v2956, %v2980
    %v2996 = vadd.f32 %v2957, %v2980
    %v2997 = vadd.f32 %v2958, %v2980
    %v2998 = vadd.f32 %v2959, %v2980
    %v2999 = vadd.f32 %v2960, %v2980
    %v3000 = vadd.f32 %v2961, %v2980
    %v3001 = vadd.f32 %v2962, %v2980
    %v3002 = vadd.f32 %v2963, %v2980
    %v3003 = vadd.f32 %v2964, %v2980
    %v3004 = vadd.f32 %v2965, %v2980
    %v3005 = vadd.f32 %v2966, %v2980
    %v3006 = vadd.f32 %v2967, %v2980
    %v3007 = vadd.f32 %v2968, %v2980
    %v3008 = vadd.f32 %v2969, %v2980
    %v3009 = vadd.f32 %v2970, %v2980
    %v3010 = vadd.f32 %v2971, %v2980
    %v3011 = vadd.f32 %v2972, %v2980
    %v3012 = vadd.f32 %v2973, %v2980
    %v3013 = vadd.f32 %v2974, %v2980
    %v3014 = vld [vmem:[#allocation4] sm:$0xff]
    %v3015 = vld [vmem:[#allocation4 + $0x8] sm:$0xff]
    %v3016 = vld [vmem:[#allocation4 + $0x10] sm:$0xff]
    %v3017 = vld [vmem:[#allocation4 + $0x18] sm:$0xff]
    %v3018 = vld [vmem:[#allocation4 + $0x20] sm:$0xff]
    %v3019 = vld [vmem:[#allocation4 + $0x28] sm:$0xff]
    %v3020 = vld [vmem:[#allocation4 + $0x30] sm:$0xff]
    %v3021 = vld [vmem:[#allocation4 + $0x38] sm:$0xff]
    %v3022 = vld [vmem:[#allocation4 + $0x40] sm:$0xff]
    %v3023 = vld [vmem:[#allocation4 + $0x48] sm:$0xff]
    %v3024 = vld [vmem:[#allocation4 + $0x50] sm:$0xff]
    %v3025 = vld [vmem:[#allocation4 + $0x58] sm:$0xff]
    %v3026 = vld [vmem:[#allocation4 + $0x60] sm:$0xff]
    %v3027 = vld [vmem:[#allocation4 + $0x68] sm:$0xff]
    %v3028 = vld [vmem:[#allocation4 + $0x70] sm:$0xff]
    %v3029 = vld [vmem:[#allocation4 + $0x78] sm:$0xff]
    %v3030 = vld [vmem:[#allocation4 + $0x80] sm:$0xff]
    %v3031 = vld [vmem:[#allocation4 + $0x88] sm:$0xff]
    %v3032 = vld [vmem:[#allocation4 + $0x90] sm:$0xff]
    %v3033 = vld [vmem:[#allocation4 + $0x98] sm:$0xff]
    %v3034 = vld [vmem:[#allocation4 + $0xa0] sm:$0xff]
    %v3035 = vld [vmem:[#allocation4 + $0xa8] sm:$0xff]
    %v3036 = vld [vmem:[#allocation4 + $0xb0] sm:$0xff]
    %v3037 = vld [vmem:[#allocation4 + $0xb8] sm:$0xff]
    %v3038 = vld [vmem:[#allocation4 + $0xc0] sm:$0xff]
    %v3039 = vld [vmem:[#allocation4 + $0xc8] sm:$0xff]
    %v3040 = vld [vmem:[#allocation4 + $0xd0] sm:$0xff]
    %v3041 = vld [vmem:[#allocation4 + $0xd8] sm:$0xff]
    %v3042 = vld [vmem:[#allocation4 + $0xe0] sm:$0xff]
    %v3043 = vld [vmem:[#allocation4 + $0xe8] sm:$0xff]
    %v3044 = vld [vmem:[#allocation4 + $0xf0] sm:$0xff]
    %v3045 = vld [vmem:[#allocation4 + $0xf8] sm:$0xff]
    %v3046 = vadd.f32 %v3014, %v2982
    %v3047 = vadd.f32 %v3015, %v2983
    %v3048 = vadd.f32 %v3016, %v2984
    %v3049 = vadd.f32 %v3017, %v2985
    %v3050 = vadd.f32 %v3018, %v2986
    %v3051 = vadd.f32 %v3019, %v2987
    %v3052 = vadd.f32 %v3020, %v2988
    %v3053 = vadd.f32 %v3021, %v2989
    %v3054 = vadd.f32 %v3022, %v2990
    %v3055 = vadd.f32 %v3023, %v2991
    %v3056 = vadd.f32 %v3024, %v2992
    %v3057 = vadd.f32 %v3025, %v2993
    %v3058 = vadd.f32 %v3026, %v2994
    %v3059 = vadd.f32 %v3027, %v2995
    %v3060 = vadd.f32 %v3028, %v2996
    %v3061 = vadd.f32 %v3029, %v2997
    %v3062 = vadd.f32 %v3030, %v2998
    %v3063 = vadd.f32 %v3031, %v2999
    %v3064 = vadd.f32 %v3032, %v3000
    %v3065 = vadd.f32 %v3033, %v3001
    %v3066 = vadd.f32 %v3034, %v3002
    %v3067 = vadd.f32 %v3035, %v3003
    %v3068 = vadd.f32 %v3036, %v3004
    %v3069 = vadd.f32 %v3037, %v3005
    %v3070 = vadd.f32 %v3038, %v3006
    %v3071 = vadd.f32 %v3039, %v3007
    %v3072 = vadd.f32 %v3040, %v3008
    %v3073 = vadd.f32 %v3041, %v3009
    %v3074 = vadd.f32 %v3042, %v3010
    %v3075 = vadd.f32 %v3043, %v3011
    %v3076 = vadd.f32 %v3044, %v3012
    %v3077 = vadd.f32 %v3045, %v3013
    %v3078 = vmul.f32 %v3046, 0.70710677
    %v3079 = vmul.f32 %v3047, 0.70710677
    %v3080 = vmul.f32 %v3048, 0.70710677
    %v3081 = vmul.f32 %v3049, 0.70710677
    %v3082 = vmul.f32 %v3050, 0.70710677
    %v3083 = vmul.f32 %v3051, 0.70710677
    %v3084 = vmul.f32 %v3052, 0.70710677
    %v3085 = vmul.f32 %v3053, 0.70710677
    %v3086 = vmul.f32 %v3054, 0.70710677
    %v3087 = vmul.f32 %v3055, 0.70710677
    %v3088 = vmul.f32 %v3056, 0.70710677
    %v3089 = vmul.f32 %v3057, 0.70710677
    %v3090 = vmul.f32 %v3058, 0.70710677
    %v3091 = vmul.f32 %v3059, 0.70710677
    %v3092 = vmul.f32 %v3060, 0.70710677
    %v3093 = vmul.f32 %v3061, 0.70710677
    %v3094 = vmul.f32 %v3062, 0.70710677
    %v3095 = vmul.f32 %v3063, 0.70710677
    %v3096 = vmul.f32 %v3064, 0.70710677
    %v3097 = vmul.f32 %v3065, 0.70710677
    %v3098 = vmul.f32 %v3066, 0.70710677
    %v3099 = vmul.f32 %v3067, 0.70710677
    %v3100 = vmul.f32 %v3068, 0.70710677
    %v3101 = vmul.f32 %v3069, 0.70710677
    %v3102 = vmul.f32 %v3070, 0.70710677
    %v3103 = vmul.f32 %v3071, 0.70710677
    %v3104 = vmul.f32 %v3072, 0.70710677
    %v3105 = vmul.f32 %v3073, 0.70710677
    %v3106 = vmul.f32 %v3074, 0.70710677
    %v3107 = vmul.f32 %v3075, 0.70710677
    %v3108 = vmul.f32 %v3076, 0.70710677
    %v3109 = vmul.f32 %v3077, 0.70710677
    %3110 = vst.msk [vmem:[#allocation12] sm:$0xff] %vm157, %v3078
    %3111 = vst.msk [vmem:[#allocation12 + $0x8] sm:$0xff] %vm157, %v3079
    %3112 = vst.msk [vmem:[#allocation12 + $0x10] sm:$0xff] %vm157, %v3080
    %3113 = vst.msk [vmem:[#allocation12 + $0x18] sm:$0xff] %vm157, %v3081
    %3114 = vst.msk [vmem:[#allocation12 + $0x20] sm:$0xff] %vm157, %v3082
    %3115 = vst.msk [vmem:[#allocation12 + $0x28] sm:$0xff] %vm157, %v3083
    %3116 = vst.msk [vmem:[#allocation12 + $0x30] sm:$0xff] %vm157, %v3084
    %3117 = vst.msk [vmem:[#allocation12 + $0x38] sm:$0xff] %vm157, %v3085
    %3118 = vst.msk [vmem:[#allocation12 + $0x40] sm:$0xff] %vm157, %v3086
    %3119 = vst.msk [vmem:[#allocation12 + $0x48] sm:$0xff] %vm157, %v3087
    %3120 = vst.msk [vmem:[#allocation12 + $0x50] sm:$0xff] %vm157, %v3088
    %3121 = vst.msk [vmem:[#allocation12 + $0x58] sm:$0xff] %vm157, %v3089
    %3122 = vst.msk [vmem:[#allocation12 + $0x60] sm:$0xff] %vm157, %v3090
    %3123 = vst.msk [vmem:[#allocation12 + $0x68] sm:$0xff] %vm157, %v3091
    %3124 = vst.msk [vmem:[#allocation12 + $0x70] sm:$0xff] %vm157, %v3092
    %3125 = vst.msk [vmem:[#allocation12 + $0x78] sm:$0xff] %vm157, %v3093
    %3126 = vst.msk [vmem:[#allocation12 + $0x80] sm:$0xff] %vm157, %v3094
    %3127 = vst.msk [vmem:[#allocation12 + $0x88] sm:$0xff] %vm157, %v3095
    %3128 = vst.msk [vmem:[#allocation12 + $0x90] sm:$0xff] %vm157, %v3096
    %3129 = vst.msk [vmem:[#allocation12 + $0x98] sm:$0xff] %vm157, %v3097
    %3130 = vst.msk [vmem:[#allocation12 + $0xa0] sm:$0xff] %vm157, %v3098
    %3131 = vst.msk [vmem:[#allocation12 + $0xa8] sm:$0xff] %vm157, %v3099
    %3132 = vst.msk [vmem:[#allocation12 + $0xb0] sm:$0xff] %vm157, %v3100
    %3133 = vst.msk [vmem:[#allocation12 + $0xb8] sm:$0xff] %vm157, %v3101
    %3134 = vst.msk [vmem:[#allocation12 + $0xc0] sm:$0xff] %vm157, %v3102
    %3135 = vst.msk [vmem:[#allocation12 + $0xc8] sm:$0xff] %vm157, %v3103
    %3136 = vst.msk [vmem:[#allocation12 + $0xd0] sm:$0xff] %vm157, %v3104
    %3137 = vst.msk [vmem:[#allocation12 + $0xd8] sm:$0xff] %vm157, %v3105
    %3138 = vst.msk [vmem:[#allocation12 + $0xe0] sm:$0xff] %vm157, %v3106
    %3139 = vst.msk [vmem:[#allocation12 + $0xe8] sm:$0xff] %vm157, %v3107
    %3140 = vst.msk [vmem:[#allocation12 + $0xf0] sm:$0xff] %vm157, %v3108
    %3141 = vst.msk [vmem:[#allocation12 + $0xf8] sm:$0xff] %vm157, %v3109
    // Predicated region
    $region50: #{tpu_custom_call.1} parent=1 // pred_check
      _
    $region51: #{tpu_custom_call.1} parent=1 // pred_check_branch
      %3143 = sbr.rel (0) target = $region53
    $region52: #{tpu_custom_call.1} parent=1 // pred_region
      %s3145 = ssub.s32 4096, 4096
      %3146 = vsyncadd [#allocation6], %s3145
      %s3147 = sshll.u32 [#allocation12], 4
      %s3148 = int_to_ptr.vmem [resolvable:$true] %s3147
      %3153 = dma.vmem_to_hbm [thread:$0]  %s3148, 4096, %s8, [#allocation6], 128, 128, 8
    $region53: #{tpu_custom_call.1} parent=1 // pred_fallthru
      _
    // Predicated region
    $region54: #{tpu_custom_call.1} parent=1 // pred_check
      _
    $region55: #{tpu_custom_call.1} parent=1 // pred_check_branch
      %3155 = sbr.rel (0) target = $region57
    $region56: #{tpu_custom_call.1} parent=1 // pred_region
      %3156 = dma.done [#allocation6], 4096
    $region57: #{tpu_custom_call.1} parent=1 // pred_fallthru
      _
    %3157 = vsyncpa [#allocation5], 1
    %3158 = vsyncpa [#allocation8], 1
    %3159 = vsyncpa [#allocation11], 1
    %3160 = vsyncpa [#allocation6], 1

</llo_original>
